<compile_context>
chip_gen: v7x
topology: tpu7x:2x2x1
jax: 0.10.0
libtpu: 0.0.40
codegen_flags: <defaults>
</compile_context>

<pallas_src>
import functools

import jax
import jax.numpy as jnp
from jax.experimental import pallas as pl
from jax.experimental.pallas import tpu as pltpu

# ----- small synthetic BERT dimensions -----
VOCAB = 64
MAX_POS = 32
TYPE_VOCAB = 2
HIDDEN = 128
INTER = 256
N_LAYERS = 2
N_HEADS = 2
HEAD_DIM = HIDDEN // N_HEADS
N_LABELS = 3
HEAD_PAD = 128          # lane-dense padded width for the classifier head output
N_MODELS = 2            # [unbiased BERT, biased stand-in]
LN_EPS = 1e-12
_GELU_C = 0.7978845608028654  # sqrt(2/pi)


# ---------------- in-kernel helpers (elementwise math in f32) ----------------

def _layernorm(x, g, b):
    x = x.astype(jnp.float32)
    mu = jnp.mean(x, axis=-1, keepdims=True)
    var = jnp.mean((x - mu) ** 2, axis=-1, keepdims=True)
    return (x - mu) * jax.lax.rsqrt(var + LN_EPS) * g + b


def _gelu(x):
    # TODO(synk): HF BERT uses exact (erf) GELU; tanh approximation used here.
    return 0.5 * x * (1.0 + jnp.tanh(_GELU_C * (x + 0.044715 * x * x * x)))


def _matmul_bias(x, w_bf16, b_f32):
    # bf16 MXU operands, f32 accumulation, f32 bias add.
    return jnp.dot(x.astype(jnp.bfloat16), w_bf16,
                   preferred_element_type=jnp.float32) + b_f32


# ------------- fused encoder kernel (all layers + pooler + head) -------------

def _encoder_kernel(attn_bias_ref, emb_ref, eg_ref, eb_ref,
                    qkv_w_ref, qkv_b_ref, ao_w_ref, ao_b_ref,
                    aln_g_ref, aln_b_ref, fi_w_ref, fi_b_ref,
                    fo_w_ref, fo_b_ref, oln_g_ref, oln_b_ref,
                    pool_w_ref, pool_b_ref, out_w_ref, out_b_ref,
                    pooled_ref, logits_ref, h_ref, *, batch, seq):
    scale = 1.0 / (HEAD_DIM ** 0.5)
    bias = attn_bias_ref[...]                               # (B*S, B*S) f32

    # ---- embedding LayerNorm ----
    h = _layernorm(emb_ref[...], eg_ref[...], eb_ref[...])  # (B*S, H) f32

    # ---- all transformer layers, fully unrolled, weights VMEM-resident ----
    for l in range(N_LAYERS):
        # fused Q|K|V projection: (B*S, H) x (H, 3H)
        qkv = _matmul_bias(h, qkv_w_ref[l], qkv_b_ref[l])   # (B*S, 3H) f32

        # multi-head self-attention over flattened (B*S) rows
        ctx_parts = []
        for hd in range(N_HEADS):
            lo = hd * HEAD_DIM
            hi = lo + HEAD_DIM
            q = qkv[:, lo:hi].astype(jnp.bfloat16)
            k = qkv[:, HIDDEN + lo:HIDDEN + hi].astype(jnp.bfloat16)
            v = qkv[:, 2 * HIDDEN + lo:2 * HIDDEN + hi].astype(jnp.bfloat16)
            s = jax.lax.dot_general(q, k, (((1,), (1,)), ((), ())),
                                    preferred_element_type=jnp.float32)
            s = s * scale + bias                            # (B*S, B*S)
            m = jnp.max(s, axis=-1, keepdims=True)
            p = jnp.exp(s - m)
            # TODO(synk): approx reciprocal -> small deviation vs exact softmax.
            p = p * pl.reciprocal(jnp.sum(p, axis=-1, keepdims=True), approx=True)
            ctx_parts.append(jnp.dot(p.astype(jnp.bfloat16), v,
                                     preferred_element_type=jnp.float32))
        ctx = jnp.concatenate(ctx_parts, axis=1)            # (B*S, H) lane-dense

        # attention output projection + residual LayerNorm
        attn_out = _matmul_bias(ctx, ao_w_ref[l], ao_b_ref[l])
        h1 = _layernorm(attn_out + h, aln_g_ref[l], aln_b_ref[l])

        # feed-forward: GELU(h1 Wi + bi) Wo + bo, residual LayerNorm
        inter = _gelu(_matmul_bias(h1, fi_w_ref[l], fi_b_ref[l]))
        ffn_out = _matmul_bias(inter, fo_w_ref[l], fo_b_ref[l])
        h = _layernorm(ffn_out + h1, oln_g_ref[l], oln_b_ref[l])

    # ---- pooler: tanh(W * h[:, 0, :]) with a single strided CLS-row gather ----
    h_ref[...] = h
    cls = h_ref[pl.ds(0, batch, stride=seq), :]             # rows 0, seq, ... -> (B, H)
    pooled = jnp.tanh(_matmul_bias(cls, pool_w_ref[...], pool_b_ref[...]))
    pooled_ref[...] = pooled

    # ---- fused classifier head (dropout = eval identity), lane-padded to 128 ----
    logits_ref[...] = _matmul_bias(pooled, out_w_ref[...], out_b_ref[...])


def run_encoders(attn_bias, emb, p, *, batch, seq):
    """Run both stacked encoders + pooler + head in a single fused pallas_call.

    attn_bias: (B*S, B*S) f32 additive mask (padding + block-diagonal batch).
    emb:       (N_MODELS, B*S, H) f32 embedding sums (pre-LayerNorm).
    p:         dict of stacked parameters (see prepare_params).
    Returns (pooled (N_MODELS, B, H) f32, logits (N_MODELS, B, HEAD_PAD) f32).
    """
    rows = batch * seq
    H, H3, I = HIDDEN, 3 * HIDDEN, INTER

    def per_model(dims):
        n = len(dims)

        def imap(m):
            return (m,) + (0,) * n

        return pl.BlockSpec((None,) + dims, imap)

    def shared(dims):
        n = len(dims)

        def imap(m):
            return (0,) * n

        return pl.BlockSpec(dims, imap)

    kernel = functools.partial(_encoder_kernel, batch=batch, seq=seq)
    pooled, logits = pl.pallas_call(
        kernel,
        out_shape=(jax.ShapeDtypeStruct((N_MODELS, batch, H), jnp.float32),
                   jax.ShapeDtypeStruct((N_MODELS, batch, HEAD_PAD), jnp.float32)),
        grid=(N_MODELS,),
        in_specs=[
            shared((rows, rows)),                  # attn_bias
            per_model((rows, H)),                  # emb
            per_model((1, H)),                     # emb_ln_g
            per_model((1, H)),                     # emb_ln_b
            per_model((N_LAYERS, H, H3)),          # qkv_w (bf16)
            per_model((N_LAYERS, 1, H3)),          # qkv_b
            per_model((N_LAYERS, H, H)),           # ao_w  (bf16)
            per_model((N_LAYERS, 1, H)),           # ao_b
            per_model((N_LAYERS, 1, H)),           # attn_ln_g
            per_model((N_LAYERS, 1, H)),           # attn_ln_b
            per_model((N_LAYERS, H, I)),           # fi_w  (bf16)
            per_model((N_LAYERS, 1, I)),           # fi_b
            per_model((N_LAYERS, I, H)),           # fo_w  (bf16)
            per_model((N_LAYERS, 1, H)),           # fo_b
            per_model((N_LAYERS, 1, H)),           # out_ln_g
            per_model((N_LAYERS, 1, H)),           # out_ln_b
            per_model((H, H)),                     # pool_w (bf16)
            per_model((1, H)),                     # pool_b
            shared((H, HEAD_PAD)),                 # out_w (bf16, lane-padded)
            shared((1, HEAD_PAD)),                 # out_b (f32, lane-padded)
        ],
        out_specs=(pl.BlockSpec((None, batch, H), lambda m: (m, 0, 0)),
                   pl.BlockSpec((None, batch, HEAD_PAD), lambda m: (m, 0, 0))),
        scratch_shapes=[pltpu.VMEM((rows, H), jnp.float32)],
        # One grid step per model; on v7x this shards the two encoders across
        # the two TensorCores, on v5e/v6e it is two cheap serial steps.
        compiler_params=pltpu.CompilerParams(
            dimension_semantics=("parallel",)),
    )(attn_bias, emb,
      p['emb_ln_g'], p['emb_ln_b'],
      p['qkv_w'], p['qkv_b'], p['ao_w'], p['ao_b'],
      p['attn_ln_g'], p['attn_ln_b'],
      p['fi_w'], p['fi_b'], p['fo_w'], p['fo_b'],
      p['out_ln_g'], p['out_ln_b'],
      p['pool_w'], p['pool_b'], p['out_w'], p['out_b'])
    return pooled, logits


# ---------------- JAX glue: embeddings, mask ----------------

def _embeddings(p, input_ids, token_type_ids):
    B, S = input_ids.shape
    word = jnp.take(p['word_emb'], input_ids, axis=1)          # (M, B, S, H)
    pos = p['pos_emb'][:, :S][:, None, :, :]                   # (M, 1, S, H)
    typ = jnp.take(p['type_emb'], token_type_ids, axis=1)      # (M, B, S, H)
    return (word + pos + typ).astype(jnp.float32).reshape(
        N_MODELS, B * S, HIDDEN)


def _attention_bias(attention_mask):
    # BERT extended mask: (1 - mask) * -10000 per key, plus -10000 across
    # batches so both batches share one (B*S, B*S) score matrix per head.
    B, S = attention_mask.shape
    key_bias = ((1.0 - attention_mask.astype(jnp.float32)) * -10000.0).reshape(B * S)
    batch_id = jnp.arange(B * S, dtype=jnp.int32) // S
    same_batch = batch_id[:, None] == batch_id[None, :]
    return jnp.where(same_batch, key_bias[None, :], -10000.0)  # (B*S, B*S)


# -------- one-time parameter stacking (hoisted out of the hot path) ----------

def prepare_params(model_params, head_params):
    """Stack per-model BERT params along (model[, layer]) and cast matmul
    weights to bf16.  Call ONCE; the returned pytree is reused every forward."""

    def layer_stack(fn, dtype=jnp.float32):
        return jnp.stack(
            [jnp.stack([fn(lp) for lp in mp['layers']], axis=0)
             for mp in model_params], axis=0).astype(dtype)

    def model_stack(fn, dtype=jnp.float32):
        return jnp.stack([fn(mp) for mp in model_params], axis=0).astype(dtype)

    out_w = jnp.pad(head_params['out_w'], ((0, 0), (0, HEAD_PAD - N_LABELS)))
    out_b = jnp.pad(head_params['out_b'], (0, HEAD_PAD - N_LABELS))

    return {
        'word_emb': model_stack(lambda mp: mp['word_emb']),
        'pos_emb': model_stack(lambda mp: mp['pos_emb']),
        'type_emb': model_stack(lambda mp: mp['type_emb']),
        'emb_ln_g': model_stack(lambda mp: mp['emb_ln_g'].reshape(1, HIDDEN)),
        'emb_ln_b': model_stack(lambda mp: mp['emb_ln_b'].reshape(1, HIDDEN)),
        'qkv_w': layer_stack(
            lambda lp: jnp.concatenate([lp['q_w'], lp['k_w'], lp['v_w']], axis=1),
            jnp.bfloat16),
        'qkv_b': layer_stack(
            lambda lp: jnp.concatenate([lp['q_b'], lp['k_b'], lp['v_b']],
                                       axis=0).reshape(1, 3 * HIDDEN)),
        'ao_w': layer_stack(lambda lp: lp['ao_w'], jnp.bfloat16),
        'ao_b': layer_stack(lambda lp: lp['ao_b'].reshape(1, HIDDEN)),
        'attn_ln_g': layer_stack(lambda lp: lp['attn_ln_g'].reshape(1, HIDDEN)),
        'attn_ln_b': layer_stack(lambda lp: lp['attn_ln_b'].reshape(1, HIDDEN)),
        'fi_w': layer_stack(lambda lp: lp['fi_w'], jnp.bfloat16),
        'fi_b': layer_stack(lambda lp: lp['fi_b'].reshape(1, INTER)),
        'fo_w': layer_stack(lambda lp: lp['fo_w'], jnp.bfloat16),
        'fo_b': layer_stack(lambda lp: lp['fo_b'].reshape(1, HIDDEN)),
        'out_ln_g': layer_stack(lambda lp: lp['out_ln_g'].reshape(1, HIDDEN)),
        'out_ln_b': layer_stack(lambda lp: lp['out_ln_b'].reshape(1, HIDDEN)),
        'pool_w': model_stack(lambda mp: mp['pool_w'], jnp.bfloat16),
        'pool_b': model_stack(lambda mp: mp['pool_b'].reshape(1, HIDDEN)),
        'out_w': out_w.astype(jnp.bfloat16),
        'out_b': out_b.reshape(1, HEAD_PAD).astype(jnp.float32),
    }


@jax.jit
def unbiased_forward(params, input_ids, attention_mask, token_type_ids):
    B, S = input_ids.shape
    emb = _embeddings(params, input_ids, token_type_ids)       # (M, B*S, H)
    attn_bias = _attention_bias(attention_mask)                # (B*S, B*S)

    pooled_all, logits_all = run_encoders(attn_bias, emb, params, batch=B, seq=S)
    pooled, pooled_biased = pooled_all[0], pooled_all[1]
    # Reference forward prints (pooledOut, pooledOut_biased); we return them.
    # bert_drop = nn.Dropout in eval mode -> identity.  Head uses model 0 only.
    logits = logits_all[0, :, :N_LABELS]
    return logits, pooled, pooled_biased


# ---------------- deterministic parameter init ----------------

def _normal(key, shape, scale=0.02):
    return scale * jax.random.normal(key, shape, dtype=jnp.float32)


def init_bert_params(key):
    # TODO(synk): stands in for HF `bert-base-uncased` pretrained weights.
    keys = jax.random.split(key, 4 + N_LAYERS)
    params = {
        'word_emb': _normal(keys[0], (VOCAB, HIDDEN)),
        'pos_emb': _normal(keys[1], (MAX_POS, HIDDEN)),
        'type_emb': _normal(keys[2], (TYPE_VOCAB, HIDDEN)),
        'emb_ln_g': jnp.ones((HIDDEN,), jnp.float32),
        'emb_ln_b': jnp.zeros((HIDDEN,), jnp.float32),
        'pool_w': _normal(keys[3], (HIDDEN, HIDDEN)),
        'pool_b': jnp.zeros((HIDDEN,), jnp.float32),
        'layers': [],
    }
    for i in range(N_LAYERS):
        lk = jax.random.split(keys[4 + i], 6)
        params['layers'].append({
            'q_w': _normal(lk[0], (HIDDEN, HIDDEN)),
            'q_b': jnp.zeros((HIDDEN,), jnp.float32),
            'k_w': _normal(lk[1], (HIDDEN, HIDDEN)),
            'k_b': jnp.zeros((HIDDEN,), jnp.float32),
            'v_w': _normal(lk[2], (HIDDEN, HIDDEN)),
            'v_b': jnp.zeros((HIDDEN,), jnp.float32),
            'ao_w': _normal(lk[3], (HIDDEN, HIDDEN)),
            'ao_b': jnp.zeros((HIDDEN,), jnp.float32),
            'attn_ln_g': jnp.ones((HIDDEN,), jnp.float32),
            'attn_ln_b': jnp.zeros((HIDDEN,), jnp.float32),
            'fi_w': _normal(lk[4], (HIDDEN, INTER)),
            'fi_b': jnp.zeros((INTER,), jnp.float32),
            'fo_w': _normal(lk[5], (INTER, HIDDEN)),
            'fo_b': jnp.zeros((HIDDEN,), jnp.float32),
            'out_ln_g': jnp.ones((HIDDEN,), jnp.float32),
            'out_ln_b': jnp.zeros((HIDDEN,), jnp.float32),
        })
    return params


if __name__ == "__main__":
    key = jax.random.PRNGKey(0)
    k_bert, k_biased, k_head, k_ids = jax.random.split(key, 4)

    bert_params = init_bert_params(k_bert)
    biased_params = init_bert_params(k_biased)   # stand-in for `biased_model`
    head_params = {
        'out_w': _normal(k_head, (HIDDEN, N_LABELS)),
        'out_b': jnp.zeros((N_LABELS,), jnp.float32),
    }

    # One-time stacking / bf16 casting (outside the per-call hot path).
    stacked = prepare_params([bert_params, biased_params], head_params)
    stacked = jax.block_until_ready(stacked)

    B, S = 2, 16
    input_ids = jax.random.randint(k_ids, (B, S), 0, VOCAB, dtype=jnp.int32)
    attention_mask = jnp.ones((B, S), jnp.int32).at[1, S - 4:].set(0)
    token_type_ids = jnp.zeros((B, S), jnp.int32)

    logits, pooled, pooled_biased = unbiased_forward(
        stacked, input_ids, attention_mask, token_type_ids)
    jax.block_until_ready((logits, pooled, pooled_biased))

    assert logits.shape == (B, N_LABELS)
    assert pooled.shape == (B, HIDDEN) and pooled_biased.shape == (B, HIDDEN)
    assert bool(jnp.all(jnp.isfinite(logits)))
    assert bool(jnp.all(jnp.isfinite(pooled)))
    assert bool(jnp.all(jnp.isfinite(pooled_biased)))
    print("KERNEL_OK")
</pallas_src>

<mosaic_0001>
module attributes {stable_mosaic.version = 11 : i64} {
  func.func @_encoder_kernel(%arg0: i32, %arg1: memref<32x32xf32, #tpu.memory_space<vmem>>, %arg2: memref<1x32x128xf32, #tpu.memory_space<vmem>>, %arg3: memref<1x1x128xf32, #tpu.memory_space<vmem>>, %arg4: memref<1x1x128xf32, #tpu.memory_space<vmem>>, %arg5: memref<1x2x128x384xbf16, #tpu.memory_space<vmem>>, %arg6: memref<1x2x1x384xf32, #tpu.memory_space<vmem>>, %arg7: memref<1x2x128x128xbf16, #tpu.memory_space<vmem>>, %arg8: memref<1x2x1x128xf32, #tpu.memory_space<vmem>>, %arg9: memref<1x2x1x128xf32, #tpu.memory_space<vmem>>, %arg10: memref<1x2x1x128xf32, #tpu.memory_space<vmem>>, %arg11: memref<1x2x128x256xbf16, #tpu.memory_space<vmem>>, %arg12: memref<1x2x1x256xf32, #tpu.memory_space<vmem>>, %arg13: memref<1x2x256x128xbf16, #tpu.memory_space<vmem>>, %arg14: memref<1x2x1x128xf32, #tpu.memory_space<vmem>>, %arg15: memref<1x2x1x128xf32, #tpu.memory_space<vmem>>, %arg16: memref<1x2x1x128xf32, #tpu.memory_space<vmem>>, %arg17: memref<1x128x128xbf16, #tpu.memory_space<vmem>>, %arg18: memref<1x1x128xf32, #tpu.memory_space<vmem>>, %arg19: memref<128x128xbf16, #tpu.memory_space<vmem>>, %arg20: memref<1x128xf32, #tpu.memory_space<vmem>>, %arg21: memref<1x2x128xf32, #tpu.memory_space<vmem>>, %arg22: memref<1x2x128xf32, #tpu.memory_space<vmem>>, %arg23: memref<32x128xf32, #tpu.memory_space<vmem>>) attributes {dimension_semantics = [#tpu.dimension_semantics<parallel>], iteration_bounds = array<i64: 2>, scalar_prefetch = 0 : i64, scratch_operands = 1 : i64, tpu.core_type = #tpu.core_type<tc>, window_params = [{pipeline_mode = #tpu.pipeline_mode<synchronous>, transform_indices = @transform_0, window_bounds = array<i64: 32, 32>}, {transform_indices = @transform_1, window_bounds = array<i64: 1, 32, 128>}, {transform_indices = @transform_2, window_bounds = array<i64: 1, 1, 128>}, {transform_indices = @transform_3, window_bounds = array<i64: 1, 1, 128>}, {transform_indices = @transform_4, window_bounds = array<i64: 1, 2, 128, 384>}, {transform_indices = @transform_5, window_bounds = array<i64: 1, 2, 1, 384>}, {transform_indices = @transform_6, window_bounds = array<i64: 1, 2, 128, 128>}, {transform_indices = @transform_7, window_bounds = array<i64: 1, 2, 1, 128>}, {transform_indices = @transform_8, window_bounds = array<i64: 1, 2, 1, 128>}, {transform_indices = @transform_9, window_bounds = array<i64: 1, 2, 1, 128>}, {transform_indices = @transform_10, window_bounds = array<i64: 1, 2, 128, 256>}, {transform_indices = @transform_11, window_bounds = array<i64: 1, 2, 1, 256>}, {transform_indices = @transform_12, window_bounds = array<i64: 1, 2, 256, 128>}, {transform_indices = @transform_13, window_bounds = array<i64: 1, 2, 1, 128>}, {transform_indices = @transform_14, window_bounds = array<i64: 1, 2, 1, 128>}, {transform_indices = @transform_15, window_bounds = array<i64: 1, 2, 1, 128>}, {transform_indices = @transform_16, window_bounds = array<i64: 1, 128, 128>}, {transform_indices = @transform_17, window_bounds = array<i64: 1, 1, 128>}, {pipeline_mode = #tpu.pipeline_mode<synchronous>, transform_indices = @transform_18, window_bounds = array<i64: 128, 128>}, {pipeline_mode = #tpu.pipeline_mode<synchronous>, transform_indices = @transform_19, window_bounds = array<i64: 1, 128>}, {transform_indices = @transform_20, window_bounds = array<i64: 1, 2, 128>}, {transform_indices = @transform_21, window_bounds = array<i64: 1, 2, 128>}]} {
    %c0 = arith.constant 0 : index
    %c0_0 = arith.constant 0 : index
    %0 = vector.load %arg1[%c0, %c0_0] : memref<32x32xf32, #tpu.memory_space<vmem>>, vector<32x32xf32>
    %c0_1 = arith.constant 0 : index
    %c0_2 = arith.constant 0 : index
    %c0_3 = arith.constant 0 : index
    %1 = vector.load %arg2[%c0_1, %c0_2, %c0_3] : memref<1x32x128xf32, #tpu.memory_space<vmem>>, vector<1x32x128xf32>
    %2 = vector.shape_cast %1 : vector<1x32x128xf32> to vector<32x128xf32>
    %c0_4 = arith.constant 0 : index
    %c0_5 = arith.constant 0 : index
    %c0_6 = arith.constant 0 : index
    %3 = vector.load %arg3[%c0_4, %c0_5, %c0_6] : memref<1x1x128xf32, #tpu.memory_space<vmem>>, vector<1x1x128xf32>
    %4 = vector.shape_cast %3 : vector<1x1x128xf32> to vector<1x128xf32>
    %c0_7 = arith.constant 0 : index
    %c0_8 = arith.constant 0 : index
    %c0_9 = arith.constant 0 : index
    %5 = vector.load %arg4[%c0_7, %c0_8, %c0_9] : memref<1x1x128xf32, #tpu.memory_space<vmem>>, vector<1x1x128xf32>
    %6 = vector.shape_cast %5 : vector<1x1x128xf32> to vector<1x128xf32>
    %cst = arith.constant dense<0.000000e+00> : vector<32xf32>
    %7 = vector.multi_reduction <add>, %2, %cst [1] : vector<32x128xf32> to vector<32xf32>
    %8 = vector.shape_cast %7 : vector<32xf32> to vector<32x1xf32>
    %cst_10 = arith.constant 1.280000e+02 : f32
    %9 = vector.broadcast %cst_10 : f32 to vector<32x1xf32>
    %10 = arith.divf %8, %9 : vector<32x1xf32>
    %11 = vector.broadcast %10 : vector<32x1xf32> to vector<32x128xf32>
    %12 = arith.subf %2, %11 : vector<32x128xf32>
    %13 = arith.mulf %12, %12 : vector<32x128xf32>
    %cst_11 = arith.constant dense<0.000000e+00> : vector<32xf32>
    %14 = vector.multi_reduction <add>, %13, %cst_11 [1] : vector<32x128xf32> to vector<32xf32>
    %15 = vector.shape_cast %14 : vector<32xf32> to vector<32x1xf32>
    %cst_12 = arith.constant 1.280000e+02 : f32
    %16 = vector.broadcast %cst_12 : f32 to vector<32x1xf32>
    %17 = arith.divf %15, %16 : vector<32x1xf32>
    %18 = vector.broadcast %10 : vector<32x1xf32> to vector<32x128xf32>
    %19 = arith.subf %2, %18 : vector<32x128xf32>
    %cst_13 = arith.constant 9.99999996E-13 : f32
    %20 = vector.broadcast %cst_13 : f32 to vector<32x1xf32>
    %21 = arith.addf %17, %20 : vector<32x1xf32>
    %22 = math.rsqrt %21 : vector<32x1xf32>
    %23 = vector.broadcast %22 : vector<32x1xf32> to vector<32x128xf32>
    %24 = arith.mulf %19, %23 : vector<32x128xf32>
    %25 = vector.broadcast %4 : vector<1x128xf32> to vector<32x128xf32>
    %26 = arith.mulf %24, %25 : vector<32x128xf32>
    %27 = vector.broadcast %6 : vector<1x128xf32> to vector<32x128xf32>
    %28 = arith.addf %26, %27 : vector<32x128xf32>
    %c0_14 = arith.constant 0 : index
    %c0_15 = arith.constant 0 : index
    %c0_16 = arith.constant 0 : index
    %c0_17 = arith.constant 0 : index
    %29 = vector.load %arg5[%c0_14, %c0_15, %c0_16, %c0_17] : memref<1x2x128x384xbf16, #tpu.memory_space<vmem>>, vector<1x1x128x384xbf16>
    %30 = vector.shape_cast %29 : vector<1x1x128x384xbf16> to vector<128x384xbf16>
    %c0_18 = arith.constant 0 : index
    %c0_19 = arith.constant 0 : index
    %c0_20 = arith.constant 0 : index
    %c0_21 = arith.constant 0 : index
    %31 = vector.load %arg6[%c0_18, %c0_19, %c0_20, %c0_21] : memref<1x2x1x384xf32, #tpu.memory_space<vmem>>, vector<1x1x1x384xf32>
    %32 = vector.shape_cast %31 : vector<1x1x1x384xf32> to vector<1x384xf32>
    %33 = arith.truncf %28 : vector<32x128xf32> to vector<32x128xbf16>
    %cst_22 = arith.constant dense<0.000000e+00> : vector<32x384xf32>
    %34 = tpu.matmul %33, %30, %cst_22 {dimension_numbers = #tpu.dot_dimension_numbers<[1], [0], [0], [1], [0, 0, 1, 1], [], []>} : vector<32x128xbf16>, vector<128x384xbf16>, vector<32x384xf32> -> vector<32x384xf32>
    %35 = vector.broadcast %32 : vector<1x384xf32> to vector<32x384xf32>
    %36 = arith.addf %34, %35 : vector<32x384xf32>
    %37 = vector.extract_strided_slice %36 {offsets = [0, 0], sizes = [32, 64], strides = [1, 1]} : vector<32x384xf32> to vector<32x64xf32>
    %38 = arith.truncf %37 : vector<32x64xf32> to vector<32x64xbf16>
    %39 = vector.extract_strided_slice %36 {offsets = [0, 128], sizes = [32, 64], strides = [1, 1]} : vector<32x384xf32> to vector<32x64xf32>
    %40 = arith.truncf %39 : vector<32x64xf32> to vector<32x64xbf16>
    %41 = vector.extract_strided_slice %36 {offsets = [0, 256], sizes = [32, 64], strides = [1, 1]} : vector<32x384xf32> to vector<32x64xf32>
    %42 = arith.truncf %41 : vector<32x64xf32> to vector<32x64xbf16>
    %cst_23 = arith.constant dense<0.000000e+00> : vector<32x32xf32>
    %43 = tpu.matmul %38, %40, %cst_23 {dimension_numbers = #tpu.dot_dimension_numbers<[1], [1], [0], [0], [0, 0, 1, 0], [], []>} : vector<32x64xbf16>, vector<32x64xbf16>, vector<32x32xf32> -> vector<32x32xf32>
    %cst_24 = arith.constant 1.250000e-01 : f32
    %44 = vector.broadcast %cst_24 : f32 to vector<32x32xf32>
    %45 = arith.mulf %43, %44 : vector<32x32xf32>
    %46 = arith.addf %45, %0 : vector<32x32xf32>
    %cst_25 = arith.constant dense<0xFF800000> : vector<32xf32>
    %47 = vector.multi_reduction <maximumf>, %46, %cst_25 [1] : vector<32x32xf32> to vector<32xf32>
    %48 = vector.shape_cast %47 : vector<32xf32> to vector<32x1xf32>
    %49 = vector.broadcast %48 : vector<32x1xf32> to vector<32x32xf32>
    %50 = arith.subf %46, %49 : vector<32x32xf32>
    %51 = math.exp %50 : vector<32x32xf32>
    %cst_26 = arith.constant dense<0.000000e+00> : vector<32xf32>
    %52 = vector.multi_reduction <add>, %51, %cst_26 [1] : vector<32x32xf32> to vector<32xf32>
    %53 = vector.shape_cast %52 : vector<32xf32> to vector<32x1xf32>
    %54 = tpu.reciprocal %53 {approx = true} : vector<32x1xf32> -> vector<32x1xf32>
    %55 = vector.broadcast %54 : vector<32x1xf32> to vector<32x32xf32>
    %56 = arith.mulf %51, %55 : vector<32x32xf32>
    %57 = arith.truncf %56 : vector<32x32xf32> to vector<32x32xbf16>
    %cst_27 = arith.constant dense<0.000000e+00> : vector<32x64xf32>
    %58 = tpu.matmul %57, %42, %cst_27 {dimension_numbers = #tpu.dot_dimension_numbers<[1], [0], [0], [1], [0, 0, 1, 1], [], []>} : vector<32x32xbf16>, vector<32x64xbf16>, vector<32x64xf32> -> vector<32x64xf32>
    %59 = vector.extract_strided_slice %36 {offsets = [0, 64], sizes = [32, 64], strides = [1, 1]} : vector<32x384xf32> to vector<32x64xf32>
    %60 = arith.truncf %59 : vector<32x64xf32> to vector<32x64xbf16>
    %61 = vector.extract_strided_slice %36 {offsets = [0, 192], sizes = [32, 64], strides = [1, 1]} : vector<32x384xf32> to vector<32x64xf32>
    %62 = arith.truncf %61 : vector<32x64xf32> to vector<32x64xbf16>
    %63 = vector.extract_strided_slice %36 {offsets = [0, 320], sizes = [32, 64], strides = [1, 1]} : vector<32x384xf32> to vector<32x64xf32>
    %64 = arith.truncf %63 : vector<32x64xf32> to vector<32x64xbf16>
    %cst_28 = arith.constant dense<0.000000e+00> : vector<32x32xf32>
    %65 = tpu.matmul %60, %62, %cst_28 {dimension_numbers = #tpu.dot_dimension_numbers<[1], [1], [0], [0], [0, 0, 1, 0], [], []>} : vector<32x64xbf16>, vector<32x64xbf16>, vector<32x32xf32> -> vector<32x32xf32>
    %cst_29 = arith.constant 1.250000e-01 : f32
    %66 = vector.broadcast %cst_29 : f32 to vector<32x32xf32>
    %67 = arith.mulf %65, %66 : vector<32x32xf32>
    %68 = arith.addf %67, %0 : vector<32x32xf32>
    %cst_30 = arith.constant dense<0xFF800000> : vector<32xf32>
    %69 = vector.multi_reduction <maximumf>, %68, %cst_30 [1] : vector<32x32xf32> to vector<32xf32>
    %70 = vector.shape_cast %69 : vector<32xf32> to vector<32x1xf32>
    %71 = vector.broadcast %70 : vector<32x1xf32> to vector<32x32xf32>
    %72 = arith.subf %68, %71 : vector<32x32xf32>
    %73 = math.exp %72 : vector<32x32xf32>
    %cst_31 = arith.constant dense<0.000000e+00> : vector<32xf32>
    %74 = vector.multi_reduction <add>, %73, %cst_31 [1] : vector<32x32xf32> to vector<32xf32>
    %75 = vector.shape_cast %74 : vector<32xf32> to vector<32x1xf32>
    %76 = tpu.reciprocal %75 {approx = true} : vector<32x1xf32> -> vector<32x1xf32>
    %77 = vector.broadcast %76 : vector<32x1xf32> to vector<32x32xf32>
    %78 = arith.mulf %73, %77 : vector<32x32xf32>
    %79 = arith.truncf %78 : vector<32x32xf32> to vector<32x32xbf16>
    %cst_32 = arith.constant dense<0.000000e+00> : vector<32x64xf32>
    %80 = tpu.matmul %79, %64, %cst_32 {dimension_numbers = #tpu.dot_dimension_numbers<[1], [0], [0], [1], [0, 0, 1, 1], [], []>} : vector<32x32xbf16>, vector<32x64xbf16>, vector<32x64xf32> -> vector<32x64xf32>
    %81 = tpu.concatenate %58, %80 in 1 : vector<32x64xf32>, vector<32x64xf32> -> vector<32x128xf32>
    %c0_33 = arith.constant 0 : index
    %c0_34 = arith.constant 0 : index
    %c0_35 = arith.constant 0 : index
    %c0_36 = arith.constant 0 : index
    %82 = vector.load %arg7[%c0_33, %c0_34, %c0_35, %c0_36] : memref<1x2x128x128xbf16, #tpu.memory_space<vmem>>, vector<1x1x128x128xbf16>
    %83 = vector.shape_cast %82 : vector<1x1x128x128xbf16> to vector<128x128xbf16>
    %c0_37 = arith.constant 0 : index
    %c0_38 = arith.constant 0 : index
    %c0_39 = arith.constant 0 : index
    %c0_40 = arith.constant 0 : index
    %84 = vector.load %arg8[%c0_37, %c0_38, %c0_39, %c0_40] : memref<1x2x1x128xf32, #tpu.memory_space<vmem>>, vector<1x1x1x128xf32>
    %85 = vector.shape_cast %84 : vector<1x1x1x128xf32> to vector<1x128xf32>
    %86 = arith.truncf %81 : vector<32x128xf32> to vector<32x128xbf16>
    %cst_41 = arith.constant dense<0.000000e+00> : vector<32x128xf32>
    %87 = tpu.matmul %86, %83, %cst_41 {dimension_numbers = #tpu.dot_dimension_numbers<[1], [0], [0], [1], [0, 0, 1, 1], [], []>} : vector<32x128xbf16>, vector<128x128xbf16>, vector<32x128xf32> -> vector<32x128xf32>
    %88 = vector.broadcast %85 : vector<1x128xf32> to vector<32x128xf32>
    %89 = arith.addf %87, %88 : vector<32x128xf32>
    %90 = arith.addf %89, %28 : vector<32x128xf32>
    %c0_42 = arith.constant 0 : index
    %c0_43 = arith.constant 0 : index
    %c0_44 = arith.constant 0 : index
    %c0_45 = arith.constant 0 : index
    %91 = vector.load %arg9[%c0_42, %c0_43, %c0_44, %c0_45] : memref<1x2x1x128xf32, #tpu.memory_space<vmem>>, vector<1x1x1x128xf32>
    %92 = vector.shape_cast %91 : vector<1x1x1x128xf32> to vector<1x128xf32>
    %c0_46 = arith.constant 0 : index
    %c0_47 = arith.constant 0 : index
    %c0_48 = arith.constant 0 : index
    %c0_49 = arith.constant 0 : index
    %93 = vector.load %arg10[%c0_46, %c0_47, %c0_48, %c0_49] : memref<1x2x1x128xf32, #tpu.memory_space<vmem>>, vector<1x1x1x128xf32>
    %94 = vector.shape_cast %93 : vector<1x1x1x128xf32> to vector<1x128xf32>
    %cst_50 = arith.constant dense<0.000000e+00> : vector<32xf32>
    %95 = vector.multi_reduction <add>, %90, %cst_50 [1] : vector<32x128xf32> to vector<32xf32>
    %96 = vector.shape_cast %95 : vector<32xf32> to vector<32x1xf32>
    %cst_51 = arith.constant 1.280000e+02 : f32
    %97 = vector.broadcast %cst_51 : f32 to vector<32x1xf32>
    %98 = arith.divf %96, %97 : vector<32x1xf32>
    %99 = vector.broadcast %98 : vector<32x1xf32> to vector<32x128xf32>
    %100 = arith.subf %90, %99 : vector<32x128xf32>
    %101 = arith.mulf %100, %100 : vector<32x128xf32>
    %cst_52 = arith.constant dense<0.000000e+00> : vector<32xf32>
    %102 = vector.multi_reduction <add>, %101, %cst_52 [1] : vector<32x128xf32> to vector<32xf32>
    %103 = vector.shape_cast %102 : vector<32xf32> to vector<32x1xf32>
    %cst_53 = arith.constant 1.280000e+02 : f32
    %104 = vector.broadcast %cst_53 : f32 to vector<32x1xf32>
    %105 = arith.divf %103, %104 : vector<32x1xf32>
    %106 = vector.broadcast %98 : vector<32x1xf32> to vector<32x128xf32>
    %107 = arith.subf %90, %106 : vector<32x128xf32>
    %cst_54 = arith.constant 9.99999996E-13 : f32
    %108 = vector.broadcast %cst_54 : f32 to vector<32x1xf32>
    %109 = arith.addf %105, %108 : vector<32x1xf32>
    %110 = math.rsqrt %109 : vector<32x1xf32>
    %111 = vector.broadcast %110 : vector<32x1xf32> to vector<32x128xf32>
    %112 = arith.mulf %107, %111 : vector<32x128xf32>
    %113 = vector.broadcast %92 : vector<1x128xf32> to vector<32x128xf32>
    %114 = arith.mulf %112, %113 : vector<32x128xf32>
    %115 = vector.broadcast %94 : vector<1x128xf32> to vector<32x128xf32>
    %116 = arith.addf %114, %115 : vector<32x128xf32>
    %c0_55 = arith.constant 0 : index
    %c0_56 = arith.constant 0 : index
    %c0_57 = arith.constant 0 : index
    %c0_58 = arith.constant 0 : index
    %117 = vector.load %arg11[%c0_55, %c0_56, %c0_57, %c0_58] : memref<1x2x128x256xbf16, #tpu.memory_space<vmem>>, vector<1x1x128x256xbf16>
    %118 = vector.shape_cast %117 : vector<1x1x128x256xbf16> to vector<128x256xbf16>
    %c0_59 = arith.constant 0 : index
    %c0_60 = arith.constant 0 : index
    %c0_61 = arith.constant 0 : index
    %c0_62 = arith.constant 0 : index
    %119 = vector.load %arg12[%c0_59, %c0_60, %c0_61, %c0_62] : memref<1x2x1x256xf32, #tpu.memory_space<vmem>>, vector<1x1x1x256xf32>
    %120 = vector.shape_cast %119 : vector<1x1x1x256xf32> to vector<1x256xf32>
    %121 = arith.truncf %116 : vector<32x128xf32> to vector<32x128xbf16>
    %cst_63 = arith.constant dense<0.000000e+00> : vector<32x256xf32>
    %122 = tpu.matmul %121, %118, %cst_63 {dimension_numbers = #tpu.dot_dimension_numbers<[1], [0], [0], [1], [0, 0, 1, 1], [], []>} : vector<32x128xbf16>, vector<128x256xbf16>, vector<32x256xf32> -> vector<32x256xf32>
    %123 = vector.broadcast %120 : vector<1x256xf32> to vector<32x256xf32>
    %124 = arith.addf %122, %123 : vector<32x256xf32>
    %cst_64 = arith.constant 5.000000e-01 : f32
    %125 = vector.broadcast %cst_64 : f32 to vector<32x256xf32>
    %126 = arith.mulf %125, %124 : vector<32x256xf32>
    %cst_65 = arith.constant 4.471500e-02 : f32
    %127 = vector.broadcast %cst_65 : f32 to vector<32x256xf32>
    %128 = arith.mulf %127, %124 : vector<32x256xf32>
    %129 = arith.mulf %128, %124 : vector<32x256xf32>
    %130 = arith.mulf %129, %124 : vector<32x256xf32>
    %131 = arith.addf %124, %130 : vector<32x256xf32>
    %cst_66 = arith.constant 0.797884583 : f32
    %132 = vector.broadcast %cst_66 : f32 to vector<32x256xf32>
    %133 = arith.mulf %132, %131 : vector<32x256xf32>
    %134 = math.tanh %133 : vector<32x256xf32>
    %cst_67 = arith.constant 1.000000e+00 : f32
    %135 = vector.broadcast %cst_67 : f32 to vector<32x256xf32>
    %136 = arith.addf %135, %134 : vector<32x256xf32>
    %137 = arith.mulf %126, %136 : vector<32x256xf32>
    %c0_68 = arith.constant 0 : index
    %c0_69 = arith.constant 0 : index
    %c0_70 = arith.constant 0 : index
    %c0_71 = arith.constant 0 : index
    %138 = vector.load %arg13[%c0_68, %c0_69, %c0_70, %c0_71] : memref<1x2x256x128xbf16, #tpu.memory_space<vmem>>, vector<1x1x256x128xbf16>
    %139 = vector.shape_cast %138 : vector<1x1x256x128xbf16> to vector<256x128xbf16>
    %c0_72 = arith.constant 0 : index
    %c0_73 = arith.constant 0 : index
    %c0_74 = arith.constant 0 : index
    %c0_75 = arith.constant 0 : index
    %140 = vector.load %arg14[%c0_72, %c0_73, %c0_74, %c0_75] : memref<1x2x1x128xf32, #tpu.memory_space<vmem>>, vector<1x1x1x128xf32>
    %141 = vector.shape_cast %140 : vector<1x1x1x128xf32> to vector<1x128xf32>
    %142 = arith.truncf %137 : vector<32x256xf32> to vector<32x256xbf16>
    %cst_76 = arith.constant dense<0.000000e+00> : vector<32x128xf32>
    %143 = tpu.matmul %142, %139, %cst_76 {dimension_numbers = #tpu.dot_dimension_numbers<[1], [0], [0], [1], [0, 0, 1, 1], [], []>} : vector<32x256xbf16>, vector<256x128xbf16>, vector<32x128xf32> -> vector<32x128xf32>
    %144 = vector.broadcast %141 : vector<1x128xf32> to vector<32x128xf32>
    %145 = arith.addf %143, %144 : vector<32x128xf32>
    %146 = arith.addf %145, %116 : vector<32x128xf32>
    %c0_77 = arith.constant 0 : index
    %c0_78 = arith.constant 0 : index
    %c0_79 = arith.constant 0 : index
    %c0_80 = arith.constant 0 : index
    %147 = vector.load %arg15[%c0_77, %c0_78, %c0_79, %c0_80] : memref<1x2x1x128xf32, #tpu.memory_space<vmem>>, vector<1x1x1x128xf32>
    %148 = vector.shape_cast %147 : vector<1x1x1x128xf32> to vector<1x128xf32>
    %c0_81 = arith.constant 0 : index
    %c0_82 = arith.constant 0 : index
    %c0_83 = arith.constant 0 : index
    %c0_84 = arith.constant 0 : index
    %149 = vector.load %arg16[%c0_81, %c0_82, %c0_83, %c0_84] : memref<1x2x1x128xf32, #tpu.memory_space<vmem>>, vector<1x1x1x128xf32>
    %150 = vector.shape_cast %149 : vector<1x1x1x128xf32> to vector<1x128xf32>
    %cst_85 = arith.constant dense<0.000000e+00> : vector<32xf32>
    %151 = vector.multi_reduction <add>, %146, %cst_85 [1] : vector<32x128xf32> to vector<32xf32>
    %152 = vector.shape_cast %151 : vector<32xf32> to vector<32x1xf32>
    %cst_86 = arith.constant 1.280000e+02 : f32
    %153 = vector.broadcast %cst_86 : f32 to vector<32x1xf32>
    %154 = arith.divf %152, %153 : vector<32x1xf32>
    %155 = vector.broadcast %154 : vector<32x1xf32> to vector<32x128xf32>
    %156 = arith.subf %146, %155 : vector<32x128xf32>
    %157 = arith.mulf %156, %156 : vector<32x128xf32>
    %cst_87 = arith.constant dense<0.000000e+00> : vector<32xf32>
    %158 = vector.multi_reduction <add>, %157, %cst_87 [1] : vector<32x128xf32> to vector<32xf32>
    %159 = vector.shape_cast %158 : vector<32xf32> to vector<32x1xf32>
    %cst_88 = arith.constant 1.280000e+02 : f32
    %160 = vector.broadcast %cst_88 : f32 to vector<32x1xf32>
    %161 = arith.divf %159, %160 : vector<32x1xf32>
    %162 = vector.broadcast %154 : vector<32x1xf32> to vector<32x128xf32>
    %163 = arith.subf %146, %162 : vector<32x128xf32>
    %cst_89 = arith.constant 9.99999996E-13 : f32
    %164 = vector.broadcast %cst_89 : f32 to vector<32x1xf32>
    %165 = arith.addf %161, %164 : vector<32x1xf32>
    %166 = math.rsqrt %165 : vector<32x1xf32>
    %167 = vector.broadcast %166 : vector<32x1xf32> to vector<32x128xf32>
    %168 = arith.mulf %163, %167 : vector<32x128xf32>
    %169 = vector.broadcast %148 : vector<1x128xf32> to vector<32x128xf32>
    %170 = arith.mulf %168, %169 : vector<32x128xf32>
    %171 = vector.broadcast %150 : vector<1x128xf32> to vector<32x128xf32>
    %172 = arith.addf %170, %171 : vector<32x128xf32>
    %c0_90 = arith.constant 0 : index
    %c1 = arith.constant 1 : index
    %c0_91 = arith.constant 0 : index
    %c0_92 = arith.constant 0 : index
    %173 = vector.load %arg5[%c0_90, %c1, %c0_91, %c0_92] : memref<1x2x128x384xbf16, #tpu.memory_space<vmem>>, vector<1x1x128x384xbf16>
    %174 = vector.shape_cast %173 : vector<1x1x128x384xbf16> to vector<128x384xbf16>
    %c0_93 = arith.constant 0 : index
    %c1_94 = arith.constant 1 : index
    %c0_95 = arith.constant 0 : index
    %c0_96 = arith.constant 0 : index
    %175 = vector.load %arg6[%c0_93, %c1_94, %c0_95, %c0_96] : memref<1x2x1x384xf32, #tpu.memory_space<vmem>>, vector<1x1x1x384xf32>
    %176 = vector.shape_cast %175 : vector<1x1x1x384xf32> to vector<1x384xf32>
    %177 = arith.truncf %172 : vector<32x128xf32> to vector<32x128xbf16>
    %cst_97 = arith.constant dense<0.000000e+00> : vector<32x384xf32>
    %178 = tpu.matmul %177, %174, %cst_97 {dimension_numbers = #tpu.dot_dimension_numbers<[1], [0], [0], [1], [0, 0, 1, 1], [], []>} : vector<32x128xbf16>, vector<128x384xbf16>, vector<32x384xf32> -> vector<32x384xf32>
    %179 = vector.broadcast %176 : vector<1x384xf32> to vector<32x384xf32>
    %180 = arith.addf %178, %179 : vector<32x384xf32>
    %181 = vector.extract_strided_slice %180 {offsets = [0, 0], sizes = [32, 64], strides = [1, 1]} : vector<32x384xf32> to vector<32x64xf32>
    %182 = arith.truncf %181 : vector<32x64xf32> to vector<32x64xbf16>
    %183 = vector.extract_strided_slice %180 {offsets = [0, 128], sizes = [32, 64], strides = [1, 1]} : vector<32x384xf32> to vector<32x64xf32>
    %184 = arith.truncf %183 : vector<32x64xf32> to vector<32x64xbf16>
    %185 = vector.extract_strided_slice %180 {offsets = [0, 256], sizes = [32, 64], strides = [1, 1]} : vector<32x384xf32> to vector<32x64xf32>
    %186 = arith.truncf %185 : vector<32x64xf32> to vector<32x64xbf16>
    %cst_98 = arith.constant dense<0.000000e+00> : vector<32x32xf32>
    %187 = tpu.matmul %182, %184, %cst_98 {dimension_numbers = #tpu.dot_dimension_numbers<[1], [1], [0], [0], [0, 0, 1, 0], [], []>} : vector<32x64xbf16>, vector<32x64xbf16>, vector<32x32xf32> -> vector<32x32xf32>
    %cst_99 = arith.constant 1.250000e-01 : f32
    %188 = vector.broadcast %cst_99 : f32 to vector<32x32xf32>
    %189 = arith.mulf %187, %188 : vector<32x32xf32>
    %190 = arith.addf %189, %0 : vector<32x32xf32>
    %cst_100 = arith.constant dense<0xFF800000> : vector<32xf32>
    %191 = vector.multi_reduction <maximumf>, %190, %cst_100 [1] : vector<32x32xf32> to vector<32xf32>
    %192 = vector.shape_cast %191 : vector<32xf32> to vector<32x1xf32>
    %193 = vector.broadcast %192 : vector<32x1xf32> to vector<32x32xf32>
    %194 = arith.subf %190, %193 : vector<32x32xf32>
    %195 = math.exp %194 : vector<32x32xf32>
    %cst_101 = arith.constant dense<0.000000e+00> : vector<32xf32>
    %196 = vector.multi_reduction <add>, %195, %cst_101 [1] : vector<32x32xf32> to vector<32xf32>
    %197 = vector.shape_cast %196 : vector<32xf32> to vector<32x1xf32>
    %198 = tpu.reciprocal %197 {approx = true} : vector<32x1xf32> -> vector<32x1xf32>
    %199 = vector.broadcast %198 : vector<32x1xf32> to vector<32x32xf32>
    %200 = arith.mulf %195, %199 : vector<32x32xf32>
    %201 = arith.truncf %200 : vector<32x32xf32> to vector<32x32xbf16>
    %cst_102 = arith.constant dense<0.000000e+00> : vector<32x64xf32>
    %202 = tpu.matmul %201, %186, %cst_102 {dimension_numbers = #tpu.dot_dimension_numbers<[1], [0], [0], [1], [0, 0, 1, 1], [], []>} : vector<32x32xbf16>, vector<32x64xbf16>, vector<32x64xf32> -> vector<32x64xf32>
    %203 = vector.extract_strided_slice %180 {offsets = [0, 64], sizes = [32, 64], strides = [1, 1]} : vector<32x384xf32> to vector<32x64xf32>
    %204 = arith.truncf %203 : vector<32x64xf32> to vector<32x64xbf16>
    %205 = vector.extract_strided_slice %180 {offsets = [0, 192], sizes = [32, 64], strides = [1, 1]} : vector<32x384xf32> to vector<32x64xf32>
    %206 = arith.truncf %205 : vector<32x64xf32> to vector<32x64xbf16>
    %207 = vector.extract_strided_slice %180 {offsets = [0, 320], sizes = [32, 64], strides = [1, 1]} : vector<32x384xf32> to vector<32x64xf32>
    %208 = arith.truncf %207 : vector<32x64xf32> to vector<32x64xbf16>
    %cst_103 = arith.constant dense<0.000000e+00> : vector<32x32xf32>
    %209 = tpu.matmul %204, %206, %cst_103 {dimension_numbers = #tpu.dot_dimension_numbers<[1], [1], [0], [0], [0, 0, 1, 0], [], []>} : vector<32x64xbf16>, vector<32x64xbf16>, vector<32x32xf32> -> vector<32x32xf32>
    %cst_104 = arith.constant 1.250000e-01 : f32
    %210 = vector.broadcast %cst_104 : f32 to vector<32x32xf32>
    %211 = arith.mulf %209, %210 : vector<32x32xf32>
    %212 = arith.addf %211, %0 : vector<32x32xf32>
    %cst_105 = arith.constant dense<0xFF800000> : vector<32xf32>
    %213 = vector.multi_reduction <maximumf>, %212, %cst_105 [1] : vector<32x32xf32> to vector<32xf32>
    %214 = vector.shape_cast %213 : vector<32xf32> to vector<32x1xf32>
    %215 = vector.broadcast %214 : vector<32x1xf32> to vector<32x32xf32>
    %216 = arith.subf %212, %215 : vector<32x32xf32>
    %217 = math.exp %216 : vector<32x32xf32>
    %cst_106 = arith.constant dense<0.000000e+00> : vector<32xf32>
    %218 = vector.multi_reduction <add>, %217, %cst_106 [1] : vector<32x32xf32> to vector<32xf32>
    %219 = vector.shape_cast %218 : vector<32xf32> to vector<32x1xf32>
    %220 = tpu.reciprocal %219 {approx = true} : vector<32x1xf32> -> vector<32x1xf32>
    %221 = vector.broadcast %220 : vector<32x1xf32> to vector<32x32xf32>
    %222 = arith.mulf %217, %221 : vector<32x32xf32>
    %223 = arith.truncf %222 : vector<32x32xf32> to vector<32x32xbf16>
    %cst_107 = arith.constant dense<0.000000e+00> : vector<32x64xf32>
    %224 = tpu.matmul %223, %208, %cst_107 {dimension_numbers = #tpu.dot_dimension_numbers<[1], [0], [0], [1], [0, 0, 1, 1], [], []>} : vector<32x32xbf16>, vector<32x64xbf16>, vector<32x64xf32> -> vector<32x64xf32>
    %225 = tpu.concatenate %202, %224 in 1 : vector<32x64xf32>, vector<32x64xf32> -> vector<32x128xf32>
    %c0_108 = arith.constant 0 : index
    %c1_109 = arith.constant 1 : index
    %c0_110 = arith.constant 0 : index
    %c0_111 = arith.constant 0 : index
    %226 = vector.load %arg7[%c0_108, %c1_109, %c0_110, %c0_111] : memref<1x2x128x128xbf16, #tpu.memory_space<vmem>>, vector<1x1x128x128xbf16>
    %227 = vector.shape_cast %226 : vector<1x1x128x128xbf16> to vector<128x128xbf16>
    %c0_112 = arith.constant 0 : index
    %c1_113 = arith.constant 1 : index
    %c0_114 = arith.constant 0 : index
    %c0_115 = arith.constant 0 : index
    %228 = vector.load %arg8[%c0_112, %c1_113, %c0_114, %c0_115] : memref<1x2x1x128xf32, #tpu.memory_space<vmem>>, vector<1x1x1x128xf32>
    %229 = vector.shape_cast %228 : vector<1x1x1x128xf32> to vector<1x128xf32>
    %230 = arith.truncf %225 : vector<32x128xf32> to vector<32x128xbf16>
    %cst_116 = arith.constant dense<0.000000e+00> : vector<32x128xf32>
    %231 = tpu.matmul %230, %227, %cst_116 {dimension_numbers = #tpu.dot_dimension_numbers<[1], [0], [0], [1], [0, 0, 1, 1], [], []>} : vector<32x128xbf16>, vector<128x128xbf16>, vector<32x128xf32> -> vector<32x128xf32>
    %232 = vector.broadcast %229 : vector<1x128xf32> to vector<32x128xf32>
    %233 = arith.addf %231, %232 : vector<32x128xf32>
    %234 = arith.addf %233, %172 : vector<32x128xf32>
    %c0_117 = arith.constant 0 : index
    %c1_118 = arith.constant 1 : index
    %c0_119 = arith.constant 0 : index
    %c0_120 = arith.constant 0 : index
    %235 = vector.load %arg9[%c0_117, %c1_118, %c0_119, %c0_120] : memref<1x2x1x128xf32, #tpu.memory_space<vmem>>, vector<1x1x1x128xf32>
    %236 = vector.shape_cast %235 : vector<1x1x1x128xf32> to vector<1x128xf32>
    %c0_121 = arith.constant 0 : index
    %c1_122 = arith.constant 1 : index
    %c0_123 = arith.constant 0 : index
    %c0_124 = arith.constant 0 : index
    %237 = vector.load %arg10[%c0_121, %c1_122, %c0_123, %c0_124] : memref<1x2x1x128xf32, #tpu.memory_space<vmem>>, vector<1x1x1x128xf32>
    %238 = vector.shape_cast %237 : vector<1x1x1x128xf32> to vector<1x128xf32>
    %cst_125 = arith.constant dense<0.000000e+00> : vector<32xf32>
    %239 = vector.multi_reduction <add>, %234, %cst_125 [1] : vector<32x128xf32> to vector<32xf32>
    %240 = vector.shape_cast %239 : vector<32xf32> to vector<32x1xf32>
    %cst_126 = arith.constant 1.280000e+02 : f32
    %241 = vector.broadcast %cst_126 : f32 to vector<32x1xf32>
    %242 = arith.divf %240, %241 : vector<32x1xf32>
    %243 = vector.broadcast %242 : vector<32x1xf32> to vector<32x128xf32>
    %244 = arith.subf %234, %243 : vector<32x128xf32>
    %245 = arith.mulf %244, %244 : vector<32x128xf32>
    %cst_127 = arith.constant dense<0.000000e+00> : vector<32xf32>
    %246 = vector.multi_reduction <add>, %245, %cst_127 [1] : vector<32x128xf32> to vector<32xf32>
    %247 = vector.shape_cast %246 : vector<32xf32> to vector<32x1xf32>
    %cst_128 = arith.constant 1.280000e+02 : f32
    %248 = vector.broadcast %cst_128 : f32 to vector<32x1xf32>
    %249 = arith.divf %247, %248 : vector<32x1xf32>
    %250 = vector.broadcast %242 : vector<32x1xf32> to vector<32x128xf32>
    %251 = arith.subf %234, %250 : vector<32x128xf32>
    %cst_129 = arith.constant 9.99999996E-13 : f32
    %252 = vector.broadcast %cst_129 : f32 to vector<32x1xf32>
    %253 = arith.addf %249, %252 : vector<32x1xf32>
    %254 = math.rsqrt %253 : vector<32x1xf32>
    %255 = vector.broadcast %254 : vector<32x1xf32> to vector<32x128xf32>
    %256 = arith.mulf %251, %255 : vector<32x128xf32>
    %257 = vector.broadcast %236 : vector<1x128xf32> to vector<32x128xf32>
    %258 = arith.mulf %256, %257 : vector<32x128xf32>
    %259 = vector.broadcast %238 : vector<1x128xf32> to vector<32x128xf32>
    %260 = arith.addf %258, %259 : vector<32x128xf32>
    %c0_130 = arith.constant 0 : index
    %c1_131 = arith.constant 1 : index
    %c0_132 = arith.constant 0 : index
    %c0_133 = arith.constant 0 : index
    %261 = vector.load %arg11[%c0_130, %c1_131, %c0_132, %c0_133] : memref<1x2x128x256xbf16, #tpu.memory_space<vmem>>, vector<1x1x128x256xbf16>
    %262 = vector.shape_cast %261 : vector<1x1x128x256xbf16> to vector<128x256xbf16>
    %c0_134 = arith.constant 0 : index
    %c1_135 = arith.constant 1 : index
    %c0_136 = arith.constant 0 : index
    %c0_137 = arith.constant 0 : index
    %263 = vector.load %arg12[%c0_134, %c1_135, %c0_136, %c0_137] : memref<1x2x1x256xf32, #tpu.memory_space<vmem>>, vector<1x1x1x256xf32>
    %264 = vector.shape_cast %263 : vector<1x1x1x256xf32> to vector<1x256xf32>
    %265 = arith.truncf %260 : vector<32x128xf32> to vector<32x128xbf16>
    %cst_138 = arith.constant dense<0.000000e+00> : vector<32x256xf32>
    %266 = tpu.matmul %265, %262, %cst_138 {dimension_numbers = #tpu.dot_dimension_numbers<[1], [0], [0], [1], [0, 0, 1, 1], [], []>} : vector<32x128xbf16>, vector<128x256xbf16>, vector<32x256xf32> -> vector<32x256xf32>
    %267 = vector.broadcast %264 : vector<1x256xf32> to vector<32x256xf32>
    %268 = arith.addf %266, %267 : vector<32x256xf32>
    %cst_139 = arith.constant 5.000000e-01 : f32
    %269 = vector.broadcast %cst_139 : f32 to vector<32x256xf32>
    %270 = arith.mulf %269, %268 : vector<32x256xf32>
    %cst_140 = arith.constant 4.471500e-02 : f32
    %271 = vector.broadcast %cst_140 : f32 to vector<32x256xf32>
    %272 = arith.mulf %271, %268 : vector<32x256xf32>
    %273 = arith.mulf %272, %268 : vector<32x256xf32>
    %274 = arith.mulf %273, %268 : vector<32x256xf32>
    %275 = arith.addf %268, %274 : vector<32x256xf32>
    %cst_141 = arith.constant 0.797884583 : f32
    %276 = vector.broadcast %cst_141 : f32 to vector<32x256xf32>
    %277 = arith.mulf %276, %275 : vector<32x256xf32>
    %278 = math.tanh %277 : vector<32x256xf32>
    %cst_142 = arith.constant 1.000000e+00 : f32
    %279 = vector.broadcast %cst_142 : f32 to vector<32x256xf32>
    %280 = arith.addf %279, %278 : vector<32x256xf32>
    %281 = arith.mulf %270, %280 : vector<32x256xf32>
    %c0_143 = arith.constant 0 : index
    %c1_144 = arith.constant 1 : index
    %c0_145 = arith.constant 0 : index
    %c0_146 = arith.constant 0 : index
    %282 = vector.load %arg13[%c0_143, %c1_144, %c0_145, %c0_146] : memref<1x2x256x128xbf16, #tpu.memory_space<vmem>>, vector<1x1x256x128xbf16>
    %283 = vector.shape_cast %282 : vector<1x1x256x128xbf16> to vector<256x128xbf16>
    %c0_147 = arith.constant 0 : index
    %c1_148 = arith.constant 1 : index
    %c0_149 = arith.constant 0 : index
    %c0_150 = arith.constant 0 : index
    %284 = vector.load %arg14[%c0_147, %c1_148, %c0_149, %c0_150] : memref<1x2x1x128xf32, #tpu.memory_space<vmem>>, vector<1x1x1x128xf32>
    %285 = vector.shape_cast %284 : vector<1x1x1x128xf32> to vector<1x128xf32>
    %286 = arith.truncf %281 : vector<32x256xf32> to vector<32x256xbf16>
    %cst_151 = arith.constant dense<0.000000e+00> : vector<32x128xf32>
    %287 = tpu.matmul %286, %283, %cst_151 {dimension_numbers = #tpu.dot_dimension_numbers<[1], [0], [0], [1], [0, 0, 1, 1], [], []>} : vector<32x256xbf16>, vector<256x128xbf16>, vector<32x128xf32> -> vector<32x128xf32>
    %288 = vector.broadcast %285 : vector<1x128xf32> to vector<32x128xf32>
    %289 = arith.addf %287, %288 : vector<32x128xf32>
    %290 = arith.addf %289, %260 : vector<32x128xf32>
    %c0_152 = arith.constant 0 : index
    %c1_153 = arith.constant 1 : index
    %c0_154 = arith.constant 0 : index
    %c0_155 = arith.constant 0 : index
    %291 = vector.load %arg15[%c0_152, %c1_153, %c0_154, %c0_155] : memref<1x2x1x128xf32, #tpu.memory_space<vmem>>, vector<1x1x1x128xf32>
    %292 = vector.shape_cast %291 : vector<1x1x1x128xf32> to vector<1x128xf32>
    %c0_156 = arith.constant 0 : index
    %c1_157 = arith.constant 1 : index
    %c0_158 = arith.constant 0 : index
    %c0_159 = arith.constant 0 : index
    %293 = vector.load %arg16[%c0_156, %c1_157, %c0_158, %c0_159] : memref<1x2x1x128xf32, #tpu.memory_space<vmem>>, vector<1x1x1x128xf32>
    %294 = vector.shape_cast %293 : vector<1x1x1x128xf32> to vector<1x128xf32>
    %cst_160 = arith.constant dense<0.000000e+00> : vector<32xf32>
    %295 = vector.multi_reduction <add>, %290, %cst_160 [1] : vector<32x128xf32> to vector<32xf32>
    %296 = vector.shape_cast %295 : vector<32xf32> to vector<32x1xf32>
    %cst_161 = arith.constant 1.280000e+02 : f32
    %297 = vector.broadcast %cst_161 : f32 to vector<32x1xf32>
    %298 = arith.divf %296, %297 : vector<32x1xf32>
    %299 = vector.broadcast %298 : vector<32x1xf32> to vector<32x128xf32>
    %300 = arith.subf %290, %299 : vector<32x128xf32>
    %301 = arith.mulf %300, %300 : vector<32x128xf32>
    %cst_162 = arith.constant dense<0.000000e+00> : vector<32xf32>
    %302 = vector.multi_reduction <add>, %301, %cst_162 [1] : vector<32x128xf32> to vector<32xf32>
    %303 = vector.shape_cast %302 : vector<32xf32> to vector<32x1xf32>
    %cst_163 = arith.constant 1.280000e+02 : f32
    %304 = vector.broadcast %cst_163 : f32 to vector<32x1xf32>
    %305 = arith.divf %303, %304 : vector<32x1xf32>
    %306 = vector.broadcast %298 : vector<32x1xf32> to vector<32x128xf32>
    %307 = arith.subf %290, %306 : vector<32x128xf32>
    %cst_164 = arith.constant 9.99999996E-13 : f32
    %308 = vector.broadcast %cst_164 : f32 to vector<32x1xf32>
    %309 = arith.addf %305, %308 : vector<32x1xf32>
    %310 = math.rsqrt %309 : vector<32x1xf32>
    %311 = vector.broadcast %310 : vector<32x1xf32> to vector<32x128xf32>
    %312 = arith.mulf %307, %311 : vector<32x128xf32>
    %313 = vector.broadcast %292 : vector<1x128xf32> to vector<32x128xf32>
    %314 = arith.mulf %312, %313 : vector<32x128xf32>
    %315 = vector.broadcast %294 : vector<1x128xf32> to vector<32x128xf32>
    %316 = arith.addf %314, %315 : vector<32x128xf32>
    %c0_165 = arith.constant 0 : index
    %c0_166 = arith.constant 0 : index
    %317 = vector.load %arg23[%c0_165, %c0_166] : memref<32x128xf32, #tpu.memory_space<vmem>>, vector<32x128xf32>
    tpu.vector_store %arg23[%c0_165, %c0_166], %316 {strides = array<i32>} : memref<32x128xf32, #tpu.memory_space<vmem>>, vector<32x128xf32>,
    %c0_167 = arith.constant 0 : index
    %c0_168 = arith.constant 0 : index
    %318 = tpu.strided_load %arg23[%c0_167, %c0_168] {strides = array<i32: 16, 1>} : memref<32x128xf32, #tpu.memory_space<vmem>>, vector<2x128xf32>
    %c0_169 = arith.constant 0 : index
    %c0_170 = arith.constant 0 : index
    %c0_171 = arith.constant 0 : index
    %319 = vector.load %arg17[%c0_169, %c0_170, %c0_171] : memref<1x128x128xbf16, #tpu.memory_space<vmem>>, vector<1x128x128xbf16>
    %320 = vector.shape_cast %319 : vector<1x128x128xbf16> to vector<128x128xbf16>
    %c0_172 = arith.constant 0 : index
    %c0_173 = arith.constant 0 : index
    %c0_174 = arith.constant 0 : index
    %321 = vector.load %arg18[%c0_172, %c0_173, %c0_174] : memref<1x1x128xf32, #tpu.memory_space<vmem>>, vector<1x1x128xf32>
    %322 = vector.shape_cast %321 : vector<1x1x128xf32> to vector<1x128xf32>
    %323 = arith.truncf %318 : vector<2x128xf32> to vector<2x128xbf16>
    %cst_175 = arith.constant dense<0.000000e+00> : vector<2x128xf32>
    %324 = tpu.matmul %323, %320, %cst_175 {dimension_numbers = #tpu.dot_dimension_numbers<[1], [0], [0], [1], [0, 0, 1, 1], [], []>} : vector<2x128xbf16>, vector<128x128xbf16>, vector<2x128xf32> -> vector<2x128xf32>
    %325 = vector.broadcast %322 : vector<1x128xf32> to vector<2x128xf32>
    %326 = arith.addf %324, %325 : vector<2x128xf32>
    %327 = math.tanh %326 : vector<2x128xf32>
    %c0_176 = arith.constant 0 : index
    %c0_177 = arith.constant 0 : index
    %c0_178 = arith.constant 0 : index
    %328 = vector.load %arg21[%c0_176, %c0_177, %c0_178] : memref<1x2x128xf32, #tpu.memory_space<vmem>>, vector<1x2x128xf32>
    %329 = vector.shape_cast %328 : vector<1x2x128xf32> to vector<2x128xf32>
    %330 = vector.shape_cast %327 : vector<2x128xf32> to vector<1x2x128xf32>
    tpu.vector_store %arg21[%c0_176, %c0_177, %c0_178], %330 {strides = array<i32>} : memref<1x2x128xf32, #tpu.memory_space<vmem>>, vector<1x2x128xf32>,
    %c0_179 = arith.constant 0 : index
    %c0_180 = arith.constant 0 : index
    %331 = vector.load %arg19[%c0_179, %c0_180] : memref<128x128xbf16, #tpu.memory_space<vmem>>, vector<128x128xbf16>
    %c0_181 = arith.constant 0 : index
    %c0_182 = arith.constant 0 : index
    %332 = vector.load %arg20[%c0_181, %c0_182] : memref<1x128xf32, #tpu.memory_space<vmem>>, vector<1x128xf32>
    %333 = arith.truncf %327 : vector<2x128xf32> to vector<2x128xbf16>
    %cst_183 = arith.constant dense<0.000000e+00> : vector<2x128xf32>
    %334 = tpu.matmul %333, %331, %cst_183 {dimension_numbers = #tpu.dot_dimension_numbers<[1], [0], [0], [1], [0, 0, 1, 1], [], []>} : vector<2x128xbf16>, vector<128x128xbf16>, vector<2x128xf32> -> vector<2x128xf32>
    %335 = vector.broadcast %332 : vector<1x128xf32> to vector<2x128xf32>
    %336 = arith.addf %334, %335 : vector<2x128xf32>
    %c0_184 = arith.constant 0 : index
    %c0_185 = arith.constant 0 : index
    %c0_186 = arith.constant 0 : index
    %337 = vector.load %arg22[%c0_184, %c0_185, %c0_186] : memref<1x2x128xf32, #tpu.memory_space<vmem>>, vector<1x2x128xf32>
    %338 = vector.shape_cast %337 : vector<1x2x128xf32> to vector<2x128xf32>
    %339 = vector.shape_cast %336 : vector<2x128xf32> to vector<1x2x128xf32>
    tpu.vector_store %arg22[%c0_184, %c0_185, %c0_186], %339 {strides = array<i32>} : memref<1x2x128xf32, #tpu.memory_space<vmem>>, vector<1x2x128xf32>,
    return
  }
  func.func @transform_0(%arg0: i32) -> (i32, i32) {
    %c0_i32 = arith.constant 0 : i32
    %c0_i32_0 = arith.constant 0 : i32
    %c0_i32_1 = arith.constant 0 : i32
    return %c0_i32, %c0_i32_0 : i32, i32
  }
  func.func @transform_1(%arg0: i32) -> (i32, i32, i32) {
    %c0_i32 = arith.constant 0 : i32
    %c0_i32_0 = arith.constant 0 : i32
    %c0_i32_1 = arith.constant 0 : i32
    return %arg0, %c0_i32, %c0_i32_0 : i32, i32, i32
  }
  func.func @transform_2(%arg0: i32) -> (i32, i32, i32) {
    %c0_i32 = arith.constant 0 : i32
    %c0_i32_0 = arith.constant 0 : i32
    %c0_i32_1 = arith.constant 0 : i32
    return %arg0, %c0_i32, %c0_i32_0 : i32, i32, i32
  }
  func.func @transform_3(%arg0: i32) -> (i32, i32, i32) {
    %c0_i32 = arith.constant 0 : i32
    %c0_i32_0 = arith.constant 0 : i32
    %c0_i32_1 = arith.constant 0 : i32
    return %arg0, %c0_i32, %c0_i32_0 : i32, i32, i32
  }
  func.func @transform_4(%arg0: i32) -> (i32, i32, i32, i32) {
    %c0_i32 = arith.constant 0 : i32
    %c0_i32_0 = arith.constant 0 : i32
    %c0_i32_1 = arith.constant 0 : i32
    %c0_i32_2 = arith.constant 0 : i32
    return %arg0, %c0_i32, %c0_i32_0, %c0_i32_1 : i32, i32, i32, i32
  }
  func.func @transform_5(%arg0: i32) -> (i32, i32, i32, i32) {
    %c0_i32 = arith.constant 0 : i32
    %c0_i32_0 = arith.constant 0 : i32
    %c0_i32_1 = arith.constant 0 : i32
    %c0_i32_2 = arith.constant 0 : i32
    return %arg0, %c0_i32, %c0_i32_0, %c0_i32_1 : i32, i32, i32, i32
  }
  func.func @transform_6(%arg0: i32) -> (i32, i32, i32, i32) {
    %c0_i32 = arith.constant 0 : i32
    %c0_i32_0 = arith.constant 0 : i32
    %c0_i32_1 = arith.constant 0 : i32
    %c0_i32_2 = arith.constant 0 : i32
    return %arg0, %c0_i32, %c0_i32_0, %c0_i32_1 : i32, i32, i32, i32
  }
  func.func @transform_7(%arg0: i32) -> (i32, i32, i32, i32) {
    %c0_i32 = arith.constant 0 : i32
    %c0_i32_0 = arith.constant 0 : i32
    %c0_i32_1 = arith.constant 0 : i32
    %c0_i32_2 = arith.constant 0 : i32
    return %arg0, %c0_i32, %c0_i32_0, %c0_i32_1 : i32, i32, i32, i32
  }
  func.func @transform_8(%arg0: i32) -> (i32, i32, i32, i32) {
    %c0_i32 = arith.constant 0 : i32
    %c0_i32_0 = arith.constant 0 : i32
    %c0_i32_1 = arith.constant 0 : i32
    %c0_i32_2 = arith.constant 0 : i32
    return %arg0, %c0_i32, %c0_i32_0, %c0_i32_1 : i32, i32, i32, i32
  }
  func.func @transform_9(%arg0: i32) -> (i32, i32, i32, i32) {
    %c0_i32 = arith.constant 0 : i32
    %c0_i32_0 = arith.constant 0 : i32
    %c0_i32_1 = arith.constant 0 : i32
    %c0_i32_2 = arith.constant 0 : i32
    return %arg0, %c0_i32, %c0_i32_0, %c0_i32_1 : i32, i32, i32, i32
  }
  func.func @transform_10(%arg0: i32) -> (i32, i32, i32, i32) {
    %c0_i32 = arith.constant 0 : i32
    %c0_i32_0 = arith.constant 0 : i32
    %c0_i32_1 = arith.constant 0 : i32
    %c0_i32_2 = arith.constant 0 : i32
    return %arg0, %c0_i32, %c0_i32_0, %c0_i32_1 : i32, i32, i32, i32
  }
  func.func @transform_11(%arg0: i32) -> (i32, i32, i32, i32) {
    %c0_i32 = arith.constant 0 : i32
    %c0_i32_0 = arith.constant 0 : i32
    %c0_i32_1 = arith.constant 0 : i32
    %c0_i32_2 = arith.constant 0 : i32
    return %arg0, %c0_i32, %c0_i32_0, %c0_i32_1 : i32, i32, i32, i32
  }
  func.func @transform_12(%arg0: i32) -> (i32, i32, i32, i32) {
    %c0_i32 = arith.constant 0 : i32
    %c0_i32_0 = arith.constant 0 : i32
    %c0_i32_1 = arith.constant 0 : i32
    %c0_i32_2 = arith.constant 0 : i32
    return %arg0, %c0_i32, %c0_i32_0, %c0_i32_1 : i32, i32, i32, i32
  }
  func.func @transform_13(%arg0: i32) -> (i32, i32, i32, i32) {
    %c0_i32 = arith.constant 0 : i32
    %c0_i32_0 = arith.constant 0 : i32
    %c0_i32_1 = arith.constant 0 : i32
    %c0_i32_2 = arith.constant 0 : i32
    return %arg0, %c0_i32, %c0_i32_0, %c0_i32_1 : i32, i32, i32, i32
  }
  func.func @transform_14(%arg0: i32) -> (i32, i32, i32, i32) {
    %c0_i32 = arith.constant 0 : i32
    %c0_i32_0 = arith.constant 0 : i32
    %c0_i32_1 = arith.constant 0 : i32
    %c0_i32_2 = arith.constant 0 : i32
    return %arg0, %c0_i32, %c0_i32_0, %c0_i32_1 : i32, i32, i32, i32
  }
  func.func @transform_15(%arg0: i32) -> (i32, i32, i32, i32) {
    %c0_i32 = arith.constant 0 : i32
    %c0_i32_0 = arith.constant 0 : i32
    %c0_i32_1 = arith.constant 0 : i32
    %c0_i32_2 = arith.constant 0 : i32
    return %arg0, %c0_i32, %c0_i32_0, %c0_i32_1 : i32, i32, i32, i32
  }
  func.func @transform_16(%arg0: i32) -> (i32, i32, i32) {
    %c0_i32 = arith.constant 0 : i32
    %c0_i32_0 = arith.constant 0 : i32
    %c0_i32_1 = arith.constant 0 : i32
    return %arg0, %c0_i32, %c0_i32_0 : i32, i32, i32
  }
  func.func @transform_17(%arg0: i32) -> (i32, i32, i32) {
    %c0_i32 = arith.constant 0 : i32
    %c0_i32_0 = arith.constant 0 : i32
    %c0_i32_1 = arith.constant 0 : i32
    return %arg0, %c0_i32, %c0_i32_0 : i32, i32, i32
  }
  func.func @transform_18(%arg0: i32) -> (i32, i32) {
    %c0_i32 = arith.constant 0 : i32
    %c0_i32_0 = arith.constant 0 : i32
    %c0_i32_1 = arith.constant 0 : i32
    return %c0_i32, %c0_i32_0 : i32, i32
  }
  func.func @transform_19(%arg0: i32) -> (i32, i32) {
    %c0_i32 = arith.constant 0 : i32
    %c0_i32_0 = arith.constant 0 : i32
    %c0_i32_1 = arith.constant 0 : i32
    return %c0_i32, %c0_i32_0 : i32, i32
  }
  func.func @transform_20(%arg0: i32) -> (i32, i32, i32) {
    %c0_i32 = arith.constant 0 : i32
    %c0_i32_0 = arith.constant 0 : i32
    %c0_i32_1 = arith.constant 0 : i32
    return %arg0, %c0_i32, %c0_i32_0 : i32, i32, i32
  }
  func.func @transform_21(%arg0: i32) -> (i32, i32, i32) {
    %c0_i32 = arith.constant 0 : i32
    %c0_i32_0 = arith.constant 0 : i32
    %c0_i32_1 = arith.constant 0 : i32
    return %arg0, %c0_i32, %c0_i32_0 : i32, i32, i32
  }
}

</mosaic_0001>

<llo_original>
// kernel: unbiased_forward.1
$region0: #{unbiased_forward.1}
  #allocation0 [shape = 'u32[]', space=smem, size = 0x4, offset = 0x4, fixed_abs, tag = 'smem constant byte address 0x4 - core index']
  #allocation1 [shape = 'u32[144,128]{1,0:T(1,128)}', space=vmem, size = 0x12000, scoped, tag = 'internal scratch']
  #allocation2 [shape = 'f32[32,128]{1,0:T(8,128)}', space=vmem, size = 0x4000, scoped, tag = 'scratch operand']
  %s0 = inlined_call_operand.vmem [shape: f32[32,32], index: 0, kind: input, shape index: {}]
  %s1 = inlined_call_operand.vmem [shape: f32[2,32,128], index: 1, kind: input, shape index: {}]
  %s2 = inlined_call_operand.vmem [shape: f32[2,1,128], index: 2, kind: input, shape index: {}]
  %s3 = inlined_call_operand.vmem [shape: f32[2,1,128], index: 3, kind: input, shape index: {}]
  %s4 = inlined_call_operand.vmem [shape: bf16[2,2,128,384], index: 4, kind: input, shape index: {}]
  %s5 = inlined_call_operand.hbm [shape: f32[2,2,1,384], index: 5, kind: input, shape index: {}]
  %s6 = inlined_call_operand.hbm [shape: bf16[2,2,128,128], index: 6, kind: input, shape index: {}]
  %s7 = inlined_call_operand.vmem [shape: f32[2,2,1,128], index: 7, kind: input, shape index: {}]
  %s8 = inlined_call_operand.vmem [shape: f32[2,2,1,128], index: 8, kind: input, shape index: {}]
  %s9 = inlined_call_operand.vmem [shape: f32[2,2,1,128], index: 9, kind: input, shape index: {}]
  %s10 = inlined_call_operand.vmem [shape: bf16[2,2,128,256], index: 10, kind: input, shape index: {}]
  %s11 = inlined_call_operand.vmem [shape: f32[2,2,1,256], index: 11, kind: input, shape index: {}]
  %s12 = inlined_call_operand.hbm [shape: bf16[2,2,256,128], index: 12, kind: input, shape index: {}]
  %s13 = inlined_call_operand.vmem [shape: f32[2,2,1,128], index: 13, kind: input, shape index: {}]
  %s14 = inlined_call_operand.hbm [shape: f32[2,2,1,128], index: 14, kind: input, shape index: {}]
  %s15 = inlined_call_operand.hbm [shape: f32[2,2,1,128], index: 15, kind: input, shape index: {}]
  %s16 = inlined_call_operand.hbm [shape: bf16[2,128,128], index: 16, kind: input, shape index: {}]
  %s17 = inlined_call_operand.hbm [shape: f32[2,1,128], index: 17, kind: input, shape index: {}]
  %s18 = inlined_call_operand.hbm [shape: bf16[128,128], index: 18, kind: input, shape index: {}]
  %s19 = inlined_call_operand.hbm [shape: f32[1,128], index: 19, kind: input, shape index: {}]
  %s20 = inlined_call_operand.vmem [shape: f32[2,2,128], index: 20, kind: output, shape index: {0}]
  %s21 = inlined_call_operand.vmem [shape: f32[2,2,128], index: 21, kind: output, shape index: {1}]
  %22 = xla_tuple %s20, %s21
  %s23 = sld [smem:[#allocation0]]
  $region157: #{unbiased_forward.1} parent=0
    _
  %s25 = ssub.s32 1, %s23
  %s26 = scalar_select 0, %s25, %s23
  $region1: #{unbiased_forward.1} parent=0
    #allocation3 [shape = 'u8[6144]{0}', space=vmem, size = 0x1800, scoped, tag = 'input window, operand 5']
    #allocation4 [shape = 's32[2]{0}', space=sflag, size = 0x8, scoped, tag = 'scoped memory for unbiased_forward.1']
    #allocation5 [shape = 'u8[131072]{0}', space=vmem, size = 0x20000, scoped, tag = 'input window, operand 6']
    #allocation6 [shape = 's32[2]{0}', space=sflag, size = 0x8, scoped, tag = 'scoped memory for unbiased_forward.1']
    #allocation7 [shape = 'u8[262144]{0}', space=vmem, size = 0x40000, scoped, tag = 'input window, operand 12']
    #allocation8 [shape = 'u8[2048]{0}', space=vmem, size = 0x800, scoped, tag = 'input window, operand 14']
    #allocation9 [shape = 's32[2]{0}', space=sflag, size = 0x8, scoped, tag = 'scoped memory for unbiased_forward.1']
    #allocation10 [shape = 'u8[2048]{0}', space=vmem, size = 0x800, scoped, tag = 'input window, operand 15']
    #allocation11 [shape = 'u8[65536]{0}', space=vmem, size = 0x10000, scoped, tag = 'input window, operand 16']
    #allocation12 [shape = 's32[2]{0}', space=sflag, size = 0x8, scoped, tag = 'scoped memory for unbiased_forward.1']
    #allocation13 [shape = 'u8[1024]{0}', space=vmem, size = 0x400, scoped, tag = 'input window, operand 17']
    #allocation14 [shape = 'u8[32768]{0}', space=vmem, size = 0x8000, scoped, tag = 'input window, operand 18, single buffered']
    #allocation15 [shape = 's32[1]{0}', space=sflag, size = 0x4, scoped, tag = 'scoped memory for unbiased_forward.1']
    #allocation16 [shape = 'u8[512]{0}', space=vmem, size = 0x400, scoped, tag = 'input window, operand 19, single buffered']
    %27 = vsyncpa [#allocation4], 0
    %s28 = scalar_lea.sflag [#allocation4], 1
    %29 = vsyncpa %s28, 0
    %30 = vsyncpa [#allocation6], 0
    %s31 = scalar_lea.sflag [#allocation6], 1
    %32 = vsyncpa %s31, 0
    %33 = vsyncpa [#allocation9], 0
    %s34 = scalar_lea.sflag [#allocation9], 1
    %35 = vsyncpa %s34, 0
    %36 = vsyncpa [#allocation12], 0
    %s37 = scalar_lea.sflag [#allocation12], 1
    %38 = vsyncpa %s37, 0
    %39 = vsyncpa [#allocation15], 0
    loop: start=0, step=1, limit=4
    $region2: #{unbiased_forward.1} parent=1 // loop_pre_header
      _
    $region3: #{unbiased_forward.1} parent=1 // loop_header
      %s41 = sphi 0, %s45
      %p42 = scmp.ge.s32.totalorder %s41, 4
      %s49 = sphi 0, %s49
      %s51 = sphi 0, %s49
      %s52 = sphi 0, %s51
      %s66 = sphi 0, %s52
      %s72 = sphi 0, %s74
      %s75 = sphi 0, %s72
      %s76 = sphi 0, %s75
      %s92 = sphi 0, %s76
      %s98 = sphi 0, %s100
      %s101 = sphi 0, %s98
      %s102 = sphi 0, %s101
      %s118 = sphi 0, %s102
      %s124 = sphi 0, %s126
      %s127 = sphi 0, %s124
      %s128 = sphi 0, %s127
      %s144 = sphi 0, %s128
      %s150 = sphi 0, %s152
      %s153 = sphi 0, %s150
      %s154 = sphi 0, %s153
      %s170 = sphi 0, %s154
      %s176 = sphi 0, %s178
      %s179 = sphi 0, %s176
      %s180 = sphi 0, %s179
      %s196 = sphi 0, %s180
      %s202 = sphi 0, %s204
      %s205 = sphi 0, %s202
      %s206 = sphi 0, %s205
      %s222 = sphi 0, %s206
      %s228 = sphi 0, %s230
      %s231 = sphi 0, %s228
      %s232 = sphi 0, %s231
      %s248 = sphi 0, %s232
      %s254 = sphi 0, %s256
      %s257 = sphi 0, %s254
      %s258 = sphi 0, %s257
      %s274 = sphi 0, %s258
      %s280 = sphi 0, %s282
      %s283 = sphi 0, %s280
      %s284 = sphi 0, %s283
      %s300 = sphi 0, %s284
      %s306 = sphi 0, %s308
      %s309 = sphi 0, %s306
      %s310 = sphi 0, %s309
      %s326 = sphi 0, %s310
      %s332 = sphi 0, %s334
      %s335 = sphi 0, %s332
      %s336 = sphi 0, %s335
      %s352 = sphi 0, %s336
      %s358 = sphi 0, %s360
      %s361 = sphi 0, %s358
      %s362 = sphi 0, %s361
      %s378 = sphi 0, %s362
      %s384 = sphi 0, %s386
      %s387 = sphi 0, %s384
      %s388 = sphi 0, %s387
      %s404 = sphi 0, %s388
      %s410 = sphi 0, %s412
      %s413 = sphi 0, %s410
      %s414 = sphi 0, %s413
      %s430 = sphi 0, %s414
      %s436 = sphi 0, %s438
      %s439 = sphi 0, %s436
      %s440 = sphi 0, %s439
      %s456 = sphi 0, %s440
      %s462 = sphi 0, %s464
      %s465 = sphi 0, %s462
      %s466 = sphi 0, %s465
      %s482 = sphi 0, %s466
      %s488 = sphi 0, %s490
      %s491 = sphi 0, %s488
      %s492 = sphi 0, %s491
      %s508 = sphi 0, %s492
      %s512 = sphi 0, %s512
      %s514 = sphi 0, %s512
      %s515 = sphi 0, %s514
      %s529 = sphi 0, %s515
      %s533 = sphi 0, %s533
      %s535 = sphi 0, %s533
      %s536 = sphi 0, %s535
      %s550 = sphi 0, %s536
      %s556 = sphi 0, %s558
      %s559 = sphi 0, %s556
      %s560 = sphi 0, %s559
      %s576 = sphi 0, %s560
      %s582 = sphi 0, %s584
      %s585 = sphi 0, %s582
      %s586 = sphi 0, %s585
      %s602 = sphi 0, %s586
    $region4: #{unbiased_forward.1} parent=1 // loop_header_branch
      %44 = sbr.rel (%p42) target = $region8
    $region5: #{unbiased_forward.1} parent=1 // loop_body
      %s46 = ssub.s32 %s41, 1
      %s47 = ssub.s32 %s41, 2
      %s48 = sadd.s32 %s41, 1
      %s50 = sadd.s32 %s49, 1
      %p53 = scmp.eq.s32.totalorder %s41, 1
      %p54 = scmp.ne.s32.totalorder %s49, %s51
      %p55 = scmp.eq.s32.totalorder %s41, 0
      %p56 = por %p54, %p55
      %p57 = scmp.ne.s32.totalorder %s49, %s51
      %p58 = scmp.eq.s32.totalorder %s46, 1
      %p59 = por %p57, %p58
      %p60 = scmp.ne.s32.totalorder %s51, %s52
      %p61 = scmp.eq.s32.totalorder %s46, 0
      %p62 = por %p60, %p61
      %p63 = scmp.ne.s32.totalorder %s51, %s52
      %p64 = scmp.eq.s32.totalorder %s47, 1
      %p65 = por %p63, %p64
      %p67 = scmp.ne.s32.totalorder %s52, %s66
      %p68 = scmp.eq.s32.totalorder %s47, 0
      %p69 = por %p67, %p68
      %s70 = ssub.s32 %s41, %s48
      %p71 = scmp.eq.s32.totalorder %s70, 0
      %s73 = sadd.s32 %s72, 1
      %s74 = scalar_select %p71, %s72, %s73
      %p77 = pneg %p71
      %p78 = scmp.eq.s32.totalorder %s41, 1
      %p79 = por %p77, %p78
      %p80 = scmp.ne.s32.totalorder %s72, %s75
      %p81 = scmp.eq.s32.totalorder %s41, 0
      %p82 = por %p80, %p81
      %p83 = scmp.ne.s32.totalorder %s72, %s75
      %p84 = scmp.eq.s32.totalorder %s46, 1
      %p85 = por %p83, %p84
      %p86 = scmp.ne.s32.totalorder %s75, %s76
      %p87 = scmp.eq.s32.totalorder %s46, 0
      %p88 = por %p86, %p87
      %p89 = scmp.ne.s32.totalorder %s75, %s76
      %p90 = scmp.eq.s32.totalorder %s47, 1
      %p91 = por %p89, %p90
      %p93 = scmp.ne.s32.totalorder %s76, %s92
      %p94 = scmp.eq.s32.totalorder %s47, 0
      %p95 = por %p93, %p94
      %s96 = ssub.s32 %s41, %s48
      %p97 = scmp.eq.s32.totalorder %s96, 0
      %s99 = sadd.s32 %s98, 1
      %s100 = scalar_select %p97, %s98, %s99
      %p103 = pneg %p97
      %p104 = scmp.eq.s32.totalorder %s41, 1
      %p105 = por %p103, %p104
      %p106 = scmp.ne.s32.totalorder %s98, %s101
      %p107 = scmp.eq.s32.totalorder %s41, 0
      %p108 = por %p106, %p107
      %p109 = scmp.ne.s32.totalorder %s98, %s101
      %p110 = scmp.eq.s32.totalorder %s46, 1
      %p111 = por %p109, %p110
      %p112 = scmp.ne.s32.totalorder %s101, %s102
      %p113 = scmp.eq.s32.totalorder %s46, 0
      %p114 = por %p112, %p113
      %p115 = scmp.ne.s32.totalorder %s101, %s102
      %p116 = scmp.eq.s32.totalorder %s47, 1
      %p117 = por %p115, %p116
      %p119 = scmp.ne.s32.totalorder %s102, %s118
      %p120 = scmp.eq.s32.totalorder %s47, 0
      %p121 = por %p119, %p120
      %s122 = ssub.s32 %s41, %s48
      %p123 = scmp.eq.s32.totalorder %s122, 0
      %s125 = sadd.s32 %s124, 1
      %s126 = scalar_select %p123, %s124, %s125
      %p129 = pneg %p123
      %p130 = scmp.eq.s32.totalorder %s41, 1
      %p131 = por %p129, %p130
      %p132 = scmp.ne.s32.totalorder %s124, %s127
      %p133 = scmp.eq.s32.totalorder %s41, 0
      %p134 = por %p132, %p133
      %p135 = scmp.ne.s32.totalorder %s124, %s127
      %p136 = scmp.eq.s32.totalorder %s46, 1
      %p137 = por %p135, %p136
      %p138 = scmp.ne.s32.totalorder %s127, %s128
      %p139 = scmp.eq.s32.totalorder %s46, 0
      %p140 = por %p138, %p139
      %p141 = scmp.ne.s32.totalorder %s127, %s128
      %p142 = scmp.eq.s32.totalorder %s47, 1
      %p143 = por %p141, %p142
      %p145 = scmp.ne.s32.totalorder %s128, %s144
      %p146 = scmp.eq.s32.totalorder %s47, 0
      %p147 = por %p145, %p146
      %s148 = ssub.s32 %s41, %s48
      %p149 = scmp.eq.s32.totalorder %s148, 0
      %s151 = sadd.s32 %s150, 1
      %s152 = scalar_select %p149, %s150, %s151
      %p155 = pneg %p149
      %p156 = scmp.eq.s32.totalorder %s41, 1
      %p157 = por %p155, %p156
      %p158 = scmp.ne.s32.totalorder %s150, %s153
      %p159 = scmp.eq.s32.totalorder %s41, 0
      %p160 = por %p158, %p159
      %p161 = scmp.ne.s32.totalorder %s150, %s153
      %p162 = scmp.eq.s32.totalorder %s46, 1
      %p163 = por %p161, %p162
      %p164 = scmp.ne.s32.totalorder %s153, %s154
      %p165 = scmp.eq.s32.totalorder %s46, 0
      %p166 = por %p164, %p165
      %p167 = scmp.ne.s32.totalorder %s153, %s154
      %p168 = scmp.eq.s32.totalorder %s47, 1
      %p169 = por %p167, %p168
      %p171 = scmp.ne.s32.totalorder %s154, %s170
      %p172 = scmp.eq.s32.totalorder %s47, 0
      %p173 = por %p171, %p172
      %s174 = ssub.s32 %s41, %s48
      %p175 = scmp.eq.s32.totalorder %s174, 0
      %s177 = sadd.s32 %s176, 1
      %s178 = scalar_select %p175, %s176, %s177
      %p181 = pneg %p175
      %p182 = scmp.eq.s32.totalorder %s41, 1
      %p183 = por %p181, %p182
      %p184 = scmp.ne.s32.totalorder %s176, %s179
      %p185 = scmp.eq.s32.totalorder %s41, 0
      %p186 = por %p184, %p185
      %p187 = scmp.ne.s32.totalorder %s176, %s179
      %p188 = scmp.eq.s32.totalorder %s46, 1
      %p189 = por %p187, %p188
      %p190 = scmp.ne.s32.totalorder %s179, %s180
      %p191 = scmp.eq.s32.totalorder %s46, 0
      %p192 = por %p190, %p191
      %p193 = scmp.ne.s32.totalorder %s179, %s180
      %p194 = scmp.eq.s32.totalorder %s47, 1
      %p195 = por %p193, %p194
      %p197 = scmp.ne.s32.totalorder %s180, %s196
      %p198 = scmp.eq.s32.totalorder %s47, 0
      %p199 = por %p197, %p198
      %s200 = ssub.s32 %s41, %s48
      %p201 = scmp.eq.s32.totalorder %s200, 0
      %s203 = sadd.s32 %s202, 1
      %s204 = scalar_select %p201, %s202, %s203
      %p207 = pneg %p201
      %p208 = scmp.eq.s32.totalorder %s41, 1
      %p209 = por %p207, %p208
      %p210 = scmp.ne.s32.totalorder %s202, %s205
      %p211 = scmp.eq.s32.totalorder %s41, 0
      %p212 = por %p210, %p211
      %p213 = scmp.ne.s32.totalorder %s202, %s205
      %p214 = scmp.eq.s32.totalorder %s46, 1
      %p215 = por %p213, %p214
      %p216 = scmp.ne.s32.totalorder %s205, %s206
      %p217 = scmp.eq.s32.totalorder %s46, 0
      %p218 = por %p216, %p217
      %p219 = scmp.ne.s32.totalorder %s205, %s206
      %p220 = scmp.eq.s32.totalorder %s47, 1
      %p221 = por %p219, %p220
      %p223 = scmp.ne.s32.totalorder %s206, %s222
      %p224 = scmp.eq.s32.totalorder %s47, 0
      %p225 = por %p223, %p224
      %s226 = ssub.s32 %s41, %s48
      %p227 = scmp.eq.s32.totalorder %s226, 0
      %s229 = sadd.s32 %s228, 1
      %s230 = scalar_select %p227, %s228, %s229
      %p233 = pneg %p227
      %p234 = scmp.eq.s32.totalorder %s41, 1
      %p235 = por %p233, %p234
      %p236 = scmp.ne.s32.totalorder %s228, %s231
      %p237 = scmp.eq.s32.totalorder %s41, 0
      %p238 = por %p236, %p237
      %p239 = scmp.ne.s32.totalorder %s228, %s231
      %p240 = scmp.eq.s32.totalorder %s46, 1
      %p241 = por %p239, %p240
      %p242 = scmp.ne.s32.totalorder %s231, %s232
      %p243 = scmp.eq.s32.totalorder %s46, 0
      %p244 = por %p242, %p243
      %p245 = scmp.ne.s32.totalorder %s231, %s232
      %p246 = scmp.eq.s32.totalorder %s47, 1
      %p247 = por %p245, %p246
      %p249 = scmp.ne.s32.totalorder %s232, %s248
      %p250 = scmp.eq.s32.totalorder %s47, 0
      %p251 = por %p249, %p250
      %s252 = ssub.s32 %s41, %s48
      %p253 = scmp.eq.s32.totalorder %s252, 0
      %s255 = sadd.s32 %s254, 1
      %s256 = scalar_select %p253, %s254, %s255
      %p259 = pneg %p253
      %p260 = scmp.eq.s32.totalorder %s41, 1
      %p261 = por %p259, %p260
      %p262 = scmp.ne.s32.totalorder %s254, %s257
      %p263 = scmp.eq.s32.totalorder %s41, 0
      %p264 = por %p262, %p263
      %p265 = scmp.ne.s32.totalorder %s254, %s257
      %p266 = scmp.eq.s32.totalorder %s46, 1
      %p267 = por %p265, %p266
      %p268 = scmp.ne.s32.totalorder %s257, %s258
      %p269 = scmp.eq.s32.totalorder %s46, 0
      %p270 = por %p268, %p269
      %p271 = scmp.ne.s32.totalorder %s257, %s258
      %p272 = scmp.eq.s32.totalorder %s47, 1
      %p273 = por %p271, %p272
      %p275 = scmp.ne.s32.totalorder %s258, %s274
      %p276 = scmp.eq.s32.totalorder %s47, 0
      %p277 = por %p275, %p276
      %s278 = ssub.s32 %s41, %s48
      %p279 = scmp.eq.s32.totalorder %s278, 0
      %s281 = sadd.s32 %s280, 1
      %s282 = scalar_select %p279, %s280, %s281
      %p285 = pneg %p279
      %p286 = scmp.eq.s32.totalorder %s41, 1
      %p287 = por %p285, %p286
      %p288 = scmp.ne.s32.totalorder %s280, %s283
      %p289 = scmp.eq.s32.totalorder %s41, 0
      %p290 = por %p288, %p289
      %p291 = scmp.ne.s32.totalorder %s280, %s283
      %p292 = scmp.eq.s32.totalorder %s46, 1
      %p293 = por %p291, %p292
      %p294 = scmp.ne.s32.totalorder %s283, %s284
      %p295 = scmp.eq.s32.totalorder %s46, 0
      %p296 = por %p294, %p295
      %p297 = scmp.ne.s32.totalorder %s283, %s284
      %p298 = scmp.eq.s32.totalorder %s47, 1
      %p299 = por %p297, %p298
      %p301 = scmp.ne.s32.totalorder %s284, %s300
      %p302 = scmp.eq.s32.totalorder %s47, 0
      %p303 = por %p301, %p302
      %s304 = ssub.s32 %s41, %s48
      %p305 = scmp.eq.s32.totalorder %s304, 0
      %s307 = sadd.s32 %s306, 1
      %s308 = scalar_select %p305, %s306, %s307
      %p311 = pneg %p305
      %p312 = scmp.eq.s32.totalorder %s41, 1
      %p313 = por %p311, %p312
      %p314 = scmp.ne.s32.totalorder %s306, %s309
      %p315 = scmp.eq.s32.totalorder %s41, 0
      %p316 = por %p314, %p315
      %p317 = scmp.ne.s32.totalorder %s306, %s309
      %p318 = scmp.eq.s32.totalorder %s46, 1
      %p319 = por %p317, %p318
      %p320 = scmp.ne.s32.totalorder %s309, %s310
      %p321 = scmp.eq.s32.totalorder %s46, 0
      %p322 = por %p320, %p321
      %p323 = scmp.ne.s32.totalorder %s309, %s310
      %p324 = scmp.eq.s32.totalorder %s47, 1
      %p325 = por %p323, %p324
      %p327 = scmp.ne.s32.totalorder %s310, %s326
      %p328 = scmp.eq.s32.totalorder %s47, 0
      %p329 = por %p327, %p328
      %s330 = ssub.s32 %s41, %s48
      %p331 = scmp.eq.s32.totalorder %s330, 0
      %s333 = sadd.s32 %s332, 1
      %s334 = scalar_select %p331, %s332, %s333
      %p337 = pneg %p331
      %p338 = scmp.eq.s32.totalorder %s41, 1
      %p339 = por %p337, %p338
      %p340 = scmp.ne.s32.totalorder %s332, %s335
      %p341 = scmp.eq.s32.totalorder %s41, 0
      %p342 = por %p340, %p341
      %p343 = scmp.ne.s32.totalorder %s332, %s335
      %p344 = scmp.eq.s32.totalorder %s46, 1
      %p345 = por %p343, %p344
      %p346 = scmp.ne.s32.totalorder %s335, %s336
      %p347 = scmp.eq.s32.totalorder %s46, 0
      %p348 = por %p346, %p347
      %p349 = scmp.ne.s32.totalorder %s335, %s336
      %p350 = scmp.eq.s32.totalorder %s47, 1
      %p351 = por %p349, %p350
      %p353 = scmp.ne.s32.totalorder %s336, %s352
      %p354 = scmp.eq.s32.totalorder %s47, 0
      %p355 = por %p353, %p354
      %s356 = ssub.s32 %s41, %s48
      %p357 = scmp.eq.s32.totalorder %s356, 0
      %s359 = sadd.s32 %s358, 1
      %s360 = scalar_select %p357, %s358, %s359
      %p363 = pneg %p357
      %p364 = scmp.eq.s32.totalorder %s41, 1
      %p365 = por %p363, %p364
      %p366 = scmp.ne.s32.totalorder %s358, %s361
      %p367 = scmp.eq.s32.totalorder %s41, 0
      %p368 = por %p366, %p367
      %p369 = scmp.ne.s32.totalorder %s358, %s361
      %p370 = scmp.eq.s32.totalorder %s46, 1
      %p371 = por %p369, %p370
      %p372 = scmp.ne.s32.totalorder %s361, %s362
      %p373 = scmp.eq.s32.totalorder %s46, 0
      %p374 = por %p372, %p373
      %p375 = scmp.ne.s32.totalorder %s361, %s362
      %p376 = scmp.eq.s32.totalorder %s47, 1
      %p377 = por %p375, %p376
      %p379 = scmp.ne.s32.totalorder %s362, %s378
      %p380 = scmp.eq.s32.totalorder %s47, 0
      %p381 = por %p379, %p380
      %s382 = ssub.s32 %s41, %s48
      %p383 = scmp.eq.s32.totalorder %s382, 0
      %s385 = sadd.s32 %s384, 1
      %s386 = scalar_select %p383, %s384, %s385
      %p389 = pneg %p383
      %p390 = scmp.eq.s32.totalorder %s41, 1
      %p391 = por %p389, %p390
      %p392 = scmp.ne.s32.totalorder %s384, %s387
      %p393 = scmp.eq.s32.totalorder %s41, 0
      %p394 = por %p392, %p393
      %p395 = scmp.ne.s32.totalorder %s384, %s387
      %p396 = scmp.eq.s32.totalorder %s46, 1
      %p397 = por %p395, %p396
      %p398 = scmp.ne.s32.totalorder %s387, %s388
      %p399 = scmp.eq.s32.totalorder %s46, 0
      %p400 = por %p398, %p399
      %p401 = scmp.ne.s32.totalorder %s387, %s388
      %p402 = scmp.eq.s32.totalorder %s47, 1
      %p403 = por %p401, %p402
      %p405 = scmp.ne.s32.totalorder %s388, %s404
      %p406 = scmp.eq.s32.totalorder %s47, 0
      %p407 = por %p405, %p406
      %s408 = ssub.s32 %s41, %s48
      %p409 = scmp.eq.s32.totalorder %s408, 0
      %s411 = sadd.s32 %s410, 1
      %s412 = scalar_select %p409, %s410, %s411
      %p415 = pneg %p409
      %p416 = scmp.eq.s32.totalorder %s41, 1
      %p417 = por %p415, %p416
      %p418 = scmp.ne.s32.totalorder %s410, %s413
      %p419 = scmp.eq.s32.totalorder %s41, 0
      %p420 = por %p418, %p419
      %p421 = scmp.ne.s32.totalorder %s410, %s413
      %p422 = scmp.eq.s32.totalorder %s46, 1
      %p423 = por %p421, %p422
      %p424 = scmp.ne.s32.totalorder %s413, %s414
      %p425 = scmp.eq.s32.totalorder %s46, 0
      %p426 = por %p424, %p425
      %p427 = scmp.ne.s32.totalorder %s413, %s414
      %p428 = scmp.eq.s32.totalorder %s47, 1
      %p429 = por %p427, %p428
      %p431 = scmp.ne.s32.totalorder %s414, %s430
      %p432 = scmp.eq.s32.totalorder %s47, 0
      %p433 = por %p431, %p432
      %s434 = ssub.s32 %s41, %s48
      %p435 = scmp.eq.s32.totalorder %s434, 0
      %s437 = sadd.s32 %s436, 1
      %s438 = scalar_select %p435, %s436, %s437
      %p441 = pneg %p435
      %p442 = scmp.eq.s32.totalorder %s41, 1
      %p443 = por %p441, %p442
      %p444 = scmp.ne.s32.totalorder %s436, %s439
      %p445 = scmp.eq.s32.totalorder %s41, 0
      %p446 = por %p444, %p445
      %p447 = scmp.ne.s32.totalorder %s436, %s439
      %p448 = scmp.eq.s32.totalorder %s46, 1
      %p449 = por %p447, %p448
      %p450 = scmp.ne.s32.totalorder %s439, %s440
      %p451 = scmp.eq.s32.totalorder %s46, 0
      %p452 = por %p450, %p451
      %p453 = scmp.ne.s32.totalorder %s439, %s440
      %p454 = scmp.eq.s32.totalorder %s47, 1
      %p455 = por %p453, %p454
      %p457 = scmp.ne.s32.totalorder %s440, %s456
      %p458 = scmp.eq.s32.totalorder %s47, 0
      %p459 = por %p457, %p458
      %s460 = ssub.s32 %s41, %s48
      %p461 = scmp.eq.s32.totalorder %s460, 0
      %s463 = sadd.s32 %s462, 1
      %s464 = scalar_select %p461, %s462, %s463
      %p467 = pneg %p461
      %p468 = scmp.eq.s32.totalorder %s41, 1
      %p469 = por %p467, %p468
      %p470 = scmp.ne.s32.totalorder %s462, %s465
      %p471 = scmp.eq.s32.totalorder %s41, 0
      %p472 = por %p470, %p471
      %p473 = scmp.ne.s32.totalorder %s462, %s465
      %p474 = scmp.eq.s32.totalorder %s46, 1
      %p475 = por %p473, %p474
      %p476 = scmp.ne.s32.totalorder %s465, %s466
      %p477 = scmp.eq.s32.totalorder %s46, 0
      %p478 = por %p476, %p477
      %p479 = scmp.ne.s32.totalorder %s465, %s466
      %p480 = scmp.eq.s32.totalorder %s47, 1
      %p481 = por %p479, %p480
      %p483 = scmp.ne.s32.totalorder %s466, %s482
      %p484 = scmp.eq.s32.totalorder %s47, 0
      %p485 = por %p483, %p484
      %s486 = ssub.s32 %s41, %s48
      %p487 = scmp.eq.s32.totalorder %s486, 0
      %s489 = sadd.s32 %s488, 1
      %s490 = scalar_select %p487, %s488, %s489
      %p493 = pneg %p487
      %p494 = scmp.eq.s32.totalorder %s41, 1
      %p495 = por %p493, %p494
      %p496 = scmp.ne.s32.totalorder %s488, %s491
      %p497 = scmp.eq.s32.totalorder %s41, 0
      %p498 = por %p496, %p497
      %p499 = scmp.ne.s32.totalorder %s488, %s491
      %p500 = scmp.eq.s32.totalorder %s46, 1
      %p501 = por %p499, %p500
      %p502 = scmp.ne.s32.totalorder %s491, %s492
      %p503 = scmp.eq.s32.totalorder %s46, 0
      %p504 = por %p502, %p503
      %p505 = scmp.ne.s32.totalorder %s491, %s492
      %p506 = scmp.eq.s32.totalorder %s47, 1
      %p507 = por %p505, %p506
      %p509 = scmp.ne.s32.totalorder %s492, %s508
      %p510 = scmp.eq.s32.totalorder %s47, 0
      %p511 = por %p509, %p510
      %s513 = sadd.s32 %s512, 1
      %p516 = scmp.eq.s32.totalorder %s41, 1
      %p517 = scmp.ne.s32.totalorder %s512, %s514
      %p518 = scmp.eq.s32.totalorder %s41, 0
      %p519 = por %p517, %p518
      %p520 = scmp.ne.s32.totalorder %s512, %s514
      %p521 = scmp.eq.s32.totalorder %s46, 1
      %p522 = por %p520, %p521
      %p523 = scmp.ne.s32.totalorder %s514, %s515
      %p524 = scmp.eq.s32.totalorder %s46, 0
      %p525 = por %p523, %p524
      %p526 = scmp.ne.s32.totalorder %s514, %s515
      %p527 = scmp.eq.s32.totalorder %s47, 1
      %p528 = por %p526, %p527
      %p530 = scmp.ne.s32.totalorder %s515, %s529
      %p531 = scmp.eq.s32.totalorder %s47, 0
      %p532 = por %p530, %p531
      %s534 = sadd.s32 %s533, 1
      %p537 = scmp.eq.s32.totalorder %s41, 1
      %p538 = scmp.ne.s32.totalorder %s533, %s535
      %p539 = scmp.eq.s32.totalorder %s41, 0
      %p540 = por %p538, %p539
      %p541 = scmp.ne.s32.totalorder %s533, %s535
      %p542 = scmp.eq.s32.totalorder %s46, 1
      %p543 = por %p541, %p542
      %p544 = scmp.ne.s32.totalorder %s535, %s536
      %p545 = scmp.eq.s32.totalorder %s46, 0
      %p546 = por %p544, %p545
      %p547 = scmp.ne.s32.totalorder %s535, %s536
      %p548 = scmp.eq.s32.totalorder %s47, 1
      %p549 = por %p547, %p548
      %p551 = scmp.ne.s32.totalorder %s536, %s550
      %p552 = scmp.eq.s32.totalorder %s47, 0
      %p553 = por %p551, %p552
      %s554 = ssub.s32 %s41, %s48
      %p555 = scmp.eq.s32.totalorder %s554, 0
      %s557 = sadd.s32 %s556, 1
      %s558 = scalar_select %p555, %s556, %s557
      %p561 = pneg %p555
      %p562 = scmp.eq.s32.totalorder %s41, 1
      %p563 = por %p561, %p562
      %p564 = scmp.ne.s32.totalorder %s556, %s559
      %p565 = scmp.eq.s32.totalorder %s41, 0
      %p566 = por %p564, %p565
      %p567 = scmp.ne.s32.totalorder %s556, %s559
      %p568 = scmp.eq.s32.totalorder %s46, 1
      %p569 = por %p567, %p568
      %p570 = scmp.ne.s32.totalorder %s559, %s560
      %p571 = scmp.eq.s32.totalorder %s46, 0
      %p572 = por %p570, %p571
      %p573 = scmp.ne.s32.totalorder %s559, %s560
      %p574 = scmp.eq.s32.totalorder %s47, 1
      %p575 = por %p573, %p574
      %p577 = scmp.ne.s32.totalorder %s560, %s576
      %p578 = scmp.eq.s32.totalorder %s47, 0
      %p579 = por %p577, %p578
      %s580 = ssub.s32 %s41, %s48
      %p581 = scmp.eq.s32.totalorder %s580, 0
      %s583 = sadd.s32 %s582, 1
      %s584 = scalar_select %p581, %s582, %s583
      %p587 = pneg %p581
      %p588 = scmp.eq.s32.totalorder %s41, 1
      %p589 = por %p587, %p588
      %p590 = scmp.ne.s32.totalorder %s582, %s585
      %p591 = scmp.eq.s32.totalorder %s41, 0
      %p592 = por %p590, %p591
      %p593 = scmp.ne.s32.totalorder %s582, %s585
      %p594 = scmp.eq.s32.totalorder %s46, 1
      %p595 = por %p593, %p594
      %p596 = scmp.ne.s32.totalorder %s585, %s586
      %p597 = scmp.eq.s32.totalorder %s46, 0
      %p598 = por %p596, %p597
      %p599 = scmp.ne.s32.totalorder %s585, %s586
      %p600 = scmp.eq.s32.totalorder %s47, 1
      %p601 = por %p599, %p600
      %p603 = scmp.ne.s32.totalorder %s586, %s602
      %p604 = scmp.eq.s32.totalorder %s47, 0
      %p605 = por %p603, %p604
      %p606 = scmp.le.s32.totalorder 1, %s41
      %p607 = scmp.lt.s32.totalorder %s41, 3
      %p608 = pnand %p606, %p607
      %p609 = pneg %p608
      // Predicated region
      $region9: #{unbiased_forward.1} parent=5 // pred_check
        _
      $region10: #{unbiased_forward.1} parent=5 // pred_check_branch
        %611 = sbr.rel (%p608) target = $region12
      $region11: #{unbiased_forward.1} parent=5 // pred_region
        %s612 = ssub.s32 %s41, 1
        // Predicated region
        $region13: #{unbiased_forward.1} parent=11 // pred_check
          %p613 = pneg %p62
        $region14: #{unbiased_forward.1} parent=11 // pred_check_branch
          %615 = sbr.rel (%p613) target = $region16
        $region15: #{unbiased_forward.1} parent=11 // pred_region
          _
        $region16: #{unbiased_forward.1} parent=11 // pred_fallthru
          _
        // Predicated region
        $region17: #{unbiased_forward.1} parent=11 // pred_check
          %p616 = pneg %p525
        $region18: #{unbiased_forward.1} parent=11 // pred_check_branch
          %618 = sbr.rel (%p616) target = $region20
        $region19: #{unbiased_forward.1} parent=11 // pred_region
          %s620 = ssub.s32 1024, 1024
          %621 = vsyncadd [#allocation15], %s620
          %s622 = sshll.u32 [#allocation14], 4
          %s623 = int_to_ptr.vmem [resolvable:$true] %s622
          %628 = dma.hbm_to_vmem [thread:$0]  %s18, 1024, %s623, [#allocation15], 64, 64, 4
        $region20: #{unbiased_forward.1} parent=11 // pred_fallthru
          _
        // Predicated region
        $region21: #{unbiased_forward.1} parent=11 // pred_check
          %p629 = pneg %p546
        $region22: #{unbiased_forward.1} parent=11 // pred_check_branch
          %631 = sbr.rel (%p629) target = $region24
        $region23: #{unbiased_forward.1} parent=11 // pred_region
          %s633 = ssub.s32 16, 16
          %634 = vsyncadd [#allocation15], %s633
          %s636 = sshll.u32 [#allocation16], 4
          %s637 = int_to_ptr.vmem [resolvable:$true] %s636
          %639 = dma.hbm_to_vmem [thread:$0]  %s19, 16, %s637, [#allocation15]
        $region24: #{unbiased_forward.1} parent=11 // pred_fallthru
          _
      $region12: #{unbiased_forward.1} parent=5 // pred_fallthru
        _
      %p640 = scmp.lt.s32.totalorder %s41, 2
      // Predicated region
      $region25: #{unbiased_forward.1} parent=5 // pred_check
        %p641 = pneg %p640
      $region26: #{unbiased_forward.1} parent=5 // pred_check_branch
        %643 = sbr.rel (%p641) target = $region28
      $region27: #{unbiased_forward.1} parent=5 // pred_region
        // Predicated region
        $region29: #{unbiased_forward.1} parent=27 // pred_check
          %p644 = pneg %p82
        $region30: #{unbiased_forward.1} parent=27 // pred_check_branch
          %646 = sbr.rel (%p644) target = $region32
        $region31: #{unbiased_forward.1} parent=27 // pred_region
          %p647 = scmp.lt.s32.totalorder %s41, 1
          %s648 = scalar_select %p647, %s41, 1
          %s649 = smul.addr %s648, 4
          %s650 = smul.addr %s649, 8
          %s651 = scalar_lea.vmem %s1, %s650
        $region32: #{unbiased_forward.1} parent=27 // pred_fallthru
          _
        // Predicated region
        $region33: #{unbiased_forward.1} parent=27 // pred_check
          %p652 = pneg %p108
        $region34: #{unbiased_forward.1} parent=27 // pred_check_branch
          %654 = sbr.rel (%p652) target = $region36
        $region35: #{unbiased_forward.1} parent=27 // pred_region
          %p655 = scmp.lt.s32.totalorder %s41, 1
          %s656 = scalar_select %p655, %s41, 1
          %s657 = scalar_lea.vmem %s2, %s656
        $region36: #{unbiased_forward.1} parent=27 // pred_fallthru
          _
        // Predicated region
        $region37: #{unbiased_forward.1} parent=27 // pred_check
          %p658 = pneg %p134
        $region38: #{unbiased_forward.1} parent=27 // pred_check_branch
          %660 = sbr.rel (%p658) target = $region40
        $region39: #{unbiased_forward.1} parent=27 // pred_region
          %p661 = scmp.lt.s32.totalorder %s41, 1
          %s662 = scalar_select %p661, %s41, 1
          %s663 = scalar_lea.vmem %s3, %s662
        $region40: #{unbiased_forward.1} parent=27 // pred_fallthru
          _
        // Predicated region
        $region41: #{unbiased_forward.1} parent=27 // pred_check
          %p664 = pneg %p160
        $region42: #{unbiased_forward.1} parent=27 // pred_check_branch
          %666 = sbr.rel (%p664) target = $region44
        $region43: #{unbiased_forward.1} parent=27 // pred_region
          %p667 = scmp.lt.s32.totalorder %s41, 1
          %s668 = scalar_select %p667, %s41, 1
          %s669 = smul.addr %s668, 96
          %s670 = smul.addr %s669, 4
          %s671 = scalar_lea.vmem %s4, %s670
        $region44: #{unbiased_forward.1} parent=27 // pred_fallthru
          _
        // Predicated region
        $region45: #{unbiased_forward.1} parent=27 // pred_check
          %p672 = pneg %p186
        $region46: #{unbiased_forward.1} parent=27 // pred_check_branch
          %674 = sbr.rel (%p672) target = $region48
        $region47: #{unbiased_forward.1} parent=27 // pred_region
          %s675 = sand.u32 %s176, 1
          %s676 = scalar_lea.sflag [#allocation4], %s675
          %s677 = sand.u32 %s176, 1
          %s678 = smul.addr %s677, 6
          %s679 = scalar_lea.vmem [#allocation3], %s678
          %s681 = ssub.s32 96, 96
          %682 = vsyncadd %s676, %s681
          %s683 = smul.addr %s41, 6
          %s684 = smul.addr %s683, 16
          %s685 = scalar_lea.hbm %s5, %s684
          %s686 = sshll.u32 %s679, 4
          %s687 = int_to_ptr.vmem [resolvable:$true] %s686
          %692 = dma.hbm_to_vmem [thread:$0]  %s685, 96, %s687, %s676, 48, 48, 3
        $region48: #{unbiased_forward.1} parent=27 // pred_fallthru
          _
        // Predicated region
        $region49: #{unbiased_forward.1} parent=27 // pred_check
          %p693 = pneg %p212
        $region50: #{unbiased_forward.1} parent=27 // pred_check_branch
          %695 = sbr.rel (%p693) target = $region52
        $region51: #{unbiased_forward.1} parent=27 // pred_region
          %s696 = sand.u32 %s41, 1
          %s697 = scalar_lea.sflag [#allocation6], %s696
          %s698 = sand.u32 %s202, 1
          %s699 = smul.addr %s698, 128
          %s700 = scalar_lea.vmem [#allocation5], %s699
          %s702 = ssub.s32 2048, 2048
          %703 = vsyncadd %s697, %s702
          %s704 = smul.addr %s41, 32
          %s705 = smul.addr %s704, 64
          %s706 = scalar_lea.hbm %s6, %s705
          %s707 = sshll.u32 %s700, 4
          %s708 = int_to_ptr.vmem [resolvable:$true] %s707
          %713 = dma.hbm_to_vmem [thread:$0]  %s706, 2048, %s708, %s697, 64, 64, 4
        $region52: #{unbiased_forward.1} parent=27 // pred_fallthru
          _
        // Predicated region
        $region53: #{unbiased_forward.1} parent=27 // pred_check
          %p714 = pneg %p238
        $region54: #{unbiased_forward.1} parent=27 // pred_check_branch
          %716 = sbr.rel (%p714) target = $region56
        $region55: #{unbiased_forward.1} parent=27 // pred_region
          %p717 = scmp.lt.s32.totalorder %s41, 1
          %s718 = scalar_select %p717, %s41, 1
          %s719 = smul.addr %s718, 2
          %s720 = scalar_lea.vmem %s7, %s719
        $region56: #{unbiased_forward.1} parent=27 // pred_fallthru
          _
        // Predicated region
        $region57: #{unbiased_forward.1} parent=27 // pred_check
          %p721 = pneg %p264
        $region58: #{unbiased_forward.1} parent=27 // pred_check_branch
          %723 = sbr.rel (%p721) target = $region60
        $region59: #{unbiased_forward.1} parent=27 // pred_region
          %p724 = scmp.lt.s32.totalorder %s41, 1
          %s725 = scalar_select %p724, %s41, 1
          %s726 = smul.addr %s725, 2
          %s727 = scalar_lea.vmem %s8, %s726
        $region60: #{unbiased_forward.1} parent=27 // pred_fallthru
          _
        // Predicated region
        $region61: #{unbiased_forward.1} parent=27 // pred_check
          %p728 = pneg %p290
        $region62: #{unbiased_forward.1} parent=27 // pred_check_branch
          %730 = sbr.rel (%p728) target = $region64
        $region63: #{unbiased_forward.1} parent=27 // pred_region
          %p731 = scmp.lt.s32.totalorder %s41, 1
          %s732 = scalar_select %p731, %s41, 1
          %s733 = smul.addr %s732, 2
          %s734 = scalar_lea.vmem %s9, %s733
        $region64: #{unbiased_forward.1} parent=27 // pred_fallthru
          _
        // Predicated region
        $region65: #{unbiased_forward.1} parent=27 // pred_check
          %p735 = pneg %p316
        $region66: #{unbiased_forward.1} parent=27 // pred_check_branch
          %737 = sbr.rel (%p735) target = $region68
        $region67: #{unbiased_forward.1} parent=27 // pred_region
          %p738 = scmp.lt.s32.totalorder %s41, 1
          %s739 = scalar_select %p738, %s41, 1
          %s740 = smul.addr %s739, 64
          %s741 = smul.addr %s740, 4
          %s742 = scalar_lea.vmem %s10, %s741
        $region68: #{unbiased_forward.1} parent=27 // pred_fallthru
          _
        // Predicated region
        $region69: #{unbiased_forward.1} parent=27 // pred_check
          %p743 = pneg %p342
        $region70: #{unbiased_forward.1} parent=27 // pred_check_branch
          %745 = sbr.rel (%p743) target = $region72
        $region71: #{unbiased_forward.1} parent=27 // pred_region
          %p746 = scmp.lt.s32.totalorder %s41, 1
          %s747 = scalar_select %p746, %s41, 1
          %s748 = smul.addr %s747, 4
          %s749 = scalar_lea.vmem %s11, %s748
        $region72: #{unbiased_forward.1} parent=27 // pred_fallthru
          _
        // Predicated region
        $region73: #{unbiased_forward.1} parent=27 // pred_check
          %p750 = pneg %p368
        $region74: #{unbiased_forward.1} parent=27 // pred_check_branch
          %752 = sbr.rel (%p750) target = $region76
        $region75: #{unbiased_forward.1} parent=27 // pred_region
          %s753 = sand.u32 %s41, 1
          %s754 = scalar_lea.sflag [#allocation6], %s753
          %s755 = sand.u32 %s358, 1
          %s756 = smul.addr %s755, 256
          %s757 = scalar_lea.vmem [#allocation7], %s756
          %s759 = ssub.s32 4096, 4096
          %760 = vsyncadd %s754, %s759
          %s761 = smul.addr %s41, 64
          %s762 = smul.addr %s761, 64
          %s763 = scalar_lea.hbm %s12, %s762
          %s764 = sshll.u32 %s757, 4
          %s765 = int_to_ptr.vmem [resolvable:$true] %s764
          %770 = dma.hbm_to_vmem [thread:$0]  %s763, 4096, %s765, %s754, 64, 64, 4
        $region76: #{unbiased_forward.1} parent=27 // pred_fallthru
          _
        // Predicated region
        $region77: #{unbiased_forward.1} parent=27 // pred_check
          %p771 = pneg %p394
        $region78: #{unbiased_forward.1} parent=27 // pred_check_branch
          %773 = sbr.rel (%p771) target = $region80
        $region79: #{unbiased_forward.1} parent=27 // pred_region
          %p774 = scmp.lt.s32.totalorder %s41, 1
          %s775 = scalar_select %p774, %s41, 1
          %s776 = smul.addr %s775, 2
          %s777 = scalar_lea.vmem %s13, %s776
        $region80: #{unbiased_forward.1} parent=27 // pred_fallthru
          _
        // Predicated region
        $region81: #{unbiased_forward.1} parent=27 // pred_check
          %p778 = pneg %p420
        $region82: #{unbiased_forward.1} parent=27 // pred_check_branch
          %780 = sbr.rel (%p778) target = $region84
        $region83: #{unbiased_forward.1} parent=27 // pred_region
          %s781 = sand.u32 %s41, 1
          %s782 = scalar_lea.sflag [#allocation9], %s781
          %s783 = sand.u32 %s410, 1
          %s784 = smul.addr %s783, 2
          %s785 = scalar_lea.vmem [#allocation8], %s784
          %s787 = ssub.s32 32, 32
          %788 = vsyncadd %s782, %s787
          %s789 = smul.addr %s41, 2
          %s790 = smul.addr %s789, 16
          %s791 = scalar_lea.hbm %s14, %s790
          %s792 = sshll.u32 %s785, 4
          %s793 = int_to_ptr.vmem [resolvable:$true] %s792
          %798 = dma.hbm_to_vmem [thread:$0]  %s791, 32, %s793, %s782, 16, 16, 1
        $region84: #{unbiased_forward.1} parent=27 // pred_fallthru
          _
        // Predicated region
        $region85: #{unbiased_forward.1} parent=27 // pred_check
          %p799 = pneg %p446
        $region86: #{unbiased_forward.1} parent=27 // pred_check_branch
          %801 = sbr.rel (%p799) target = $region88
        $region87: #{unbiased_forward.1} parent=27 // pred_region
          %s802 = sand.u32 %s41, 1
          %s803 = scalar_lea.sflag [#allocation9], %s802
          %s804 = sand.u32 %s436, 1
          %s805 = smul.addr %s804, 2
          %s806 = scalar_lea.vmem [#allocation10], %s805
          %s808 = ssub.s32 32, 32
          %809 = vsyncadd %s803, %s808
          %s810 = smul.addr %s41, 2
          %s811 = smul.addr %s810, 16
          %s812 = scalar_lea.hbm %s15, %s811
          %s813 = sshll.u32 %s806, 4
          %s814 = int_to_ptr.vmem [resolvable:$true] %s813
          %819 = dma.hbm_to_vmem [thread:$0]  %s812, 32, %s814, %s803, 16, 16, 1
        $region88: #{unbiased_forward.1} parent=27 // pred_fallthru
          _
        // Predicated region
        $region89: #{unbiased_forward.1} parent=27 // pred_check
          %p820 = pneg %p472
        $region90: #{unbiased_forward.1} parent=27 // pred_check_branch
          %822 = sbr.rel (%p820) target = $region92
        $region91: #{unbiased_forward.1} parent=27 // pred_region
          %s823 = sand.u32 %s41, 1
          %s824 = scalar_lea.sflag [#allocation12], %s823
          %s825 = sand.u32 %s462, 1
          %s826 = smul.addr %s825, 64
          %s827 = scalar_lea.vmem [#allocation11], %s826
          %s829 = ssub.s32 1024, 1024
          %830 = vsyncadd %s824, %s829
          %s831 = smul.addr %s41, 16
          %s832 = smul.addr %s831, 64
          %s833 = scalar_lea.hbm %s16, %s832
          %s834 = sshll.u32 %s827, 4
          %s835 = int_to_ptr.vmem [resolvable:$true] %s834
          %840 = dma.hbm_to_vmem [thread:$0]  %s833, 1024, %s835, %s824, 64, 64, 4
        $region92: #{unbiased_forward.1} parent=27 // pred_fallthru
          _
        // Predicated region
        $region93: #{unbiased_forward.1} parent=27 // pred_check
          %p841 = pneg %p498
        $region94: #{unbiased_forward.1} parent=27 // pred_check_branch
          %843 = sbr.rel (%p841) target = $region96
        $region95: #{unbiased_forward.1} parent=27 // pred_region
          %s844 = sand.u32 %s41, 1
          %s845 = scalar_lea.sflag [#allocation12], %s844
          %s846 = sand.u32 %s488, 1
          %s847 = scalar_lea.vmem [#allocation13], %s846
          %s849 = ssub.s32 16, 16
          %850 = vsyncadd %s845, %s849
          %s851 = smul.addr %s41, 16
          %s852 = scalar_lea.hbm %s17, %s851
          %s854 = sshll.u32 %s847, 4
          %s855 = int_to_ptr.vmem [resolvable:$true] %s854
          %857 = dma.hbm_to_vmem [thread:$0]  %s852, 16, %s855, %s845
        $region96: #{unbiased_forward.1} parent=27 // pred_fallthru
          _
      $region28: #{unbiased_forward.1} parent=5 // pred_fallthru
        _
      %p858 = scmp.le.s32.totalorder 1, %s41
      %p859 = scmp.lt.s32.totalorder %s41, 3
      %p860 = pnand %p858, %p859
      %p861 = pneg %p860
      // Predicated region
      $region97: #{unbiased_forward.1} parent=5 // pred_check
        _
      $region98: #{unbiased_forward.1} parent=5 // pred_check_branch
        %863 = sbr.rel (%p860) target = $region100
      $region99: #{unbiased_forward.1} parent=5 // pred_region
        %s864 = ssub.s32 %s41, 1
        %s865 = sand.u32 %s179, 1
        %s866 = scalar_lea.sflag [#allocation4], %s865
        %s867 = sand.u32 %s179, 1
        %s868 = smul.addr %s867, 6
        %s869 = scalar_lea.vmem [#allocation3], %s868
        // Predicated region
        $region101: #{unbiased_forward.1} parent=99 // pred_check
          %p870 = pneg %p192
        $region102: #{unbiased_forward.1} parent=99 // pred_check_branch
          %872 = sbr.rel (%p870) target = $region104
        $region103: #{unbiased_forward.1} parent=99 // pred_region
          %873 = dma.done %s866, 96
        $region104: #{unbiased_forward.1} parent=99 // pred_fallthru
          _
        %s874 = sand.u32 %s46, 1
        %s875 = scalar_lea.sflag [#allocation6], %s874
        %s876 = sand.u32 %s205, 1
        %s877 = smul.addr %s876, 128
        %s878 = scalar_lea.vmem [#allocation5], %s877
        // Predicated region
        $region105: #{unbiased_forward.1} parent=99 // pred_check
          %p879 = pneg %p218
        $region106: #{unbiased_forward.1} parent=99 // pred_check_branch
          %881 = sbr.rel (%p879) target = $region108
        $region107: #{unbiased_forward.1} parent=99 // pred_region
          %882 = dma.done %s875, 2048
        $region108: #{unbiased_forward.1} parent=99 // pred_fallthru
          _
        %s883 = sand.u32 %s46, 1
        %s884 = scalar_lea.sflag [#allocation6], %s883
        %s885 = sand.u32 %s361, 1
        %s886 = smul.addr %s885, 256
        %s887 = scalar_lea.vmem [#allocation7], %s886
        // Predicated region
        $region109: #{unbiased_forward.1} parent=99 // pred_check
          %p888 = pneg %p374
        $region110: #{unbiased_forward.1} parent=99 // pred_check_branch
          %890 = sbr.rel (%p888) target = $region112
        $region111: #{unbiased_forward.1} parent=99 // pred_region
          %891 = dma.done %s884, 4096
        $region112: #{unbiased_forward.1} parent=99 // pred_fallthru
          _
        %s892 = sand.u32 %s46, 1
        %s893 = scalar_lea.sflag [#allocation9], %s892
        %s894 = sand.u32 %s413, 1
        %s895 = smul.addr %s894, 2
        %s896 = scalar_lea.vmem [#allocation8], %s895
        // Predicated region
        $region113: #{unbiased_forward.1} parent=99 // pred_check
          %p897 = pneg %p426
        $region114: #{unbiased_forward.1} parent=99 // pred_check_branch
          %899 = sbr.rel (%p897) target = $region116
        $region115: #{unbiased_forward.1} parent=99 // pred_region
          %900 = dma.done %s893, 32
        $region116: #{unbiased_forward.1} parent=99 // pred_fallthru
          _
        %s901 = sand.u32 %s46, 1
        %s902 = scalar_lea.sflag [#allocation9], %s901
        %s903 = sand.u32 %s439, 1
        %s904 = smul.addr %s903, 2
        %s905 = scalar_lea.vmem [#allocation10], %s904
        // Predicated region
        $region117: #{unbiased_forward.1} parent=99 // pred_check
          %p906 = pneg %p452
        $region118: #{unbiased_forward.1} parent=99 // pred_check_branch
          %908 = sbr.rel (%p906) target = $region120
        $region119: #{unbiased_forward.1} parent=99 // pred_region
          %909 = dma.done %s902, 32
        $region120: #{unbiased_forward.1} parent=99 // pred_fallthru
          _
        %s910 = sand.u32 %s46, 1
        %s911 = scalar_lea.sflag [#allocation12], %s910
        %s912 = sand.u32 %s465, 1
        %s913 = smul.addr %s912, 64
        %s914 = scalar_lea.vmem [#allocation11], %s913
        // Predicated region
        $region121: #{unbiased_forward.1} parent=99 // pred_check
          %p915 = pneg %p478
        $region122: #{unbiased_forward.1} parent=99 // pred_check_branch
          %917 = sbr.rel (%p915) target = $region124
        $region123: #{unbiased_forward.1} parent=99 // pred_region
          %918 = dma.done %s911, 1024
        $region124: #{unbiased_forward.1} parent=99 // pred_fallthru
          _
        %s919 = sand.u32 %s46, 1
        %s920 = scalar_lea.sflag [#allocation12], %s919
        %s921 = sand.u32 %s491, 1
        %s922 = scalar_lea.vmem [#allocation13], %s921
        // Predicated region
        $region125: #{unbiased_forward.1} parent=99 // pred_check
          %p923 = pneg %p504
        $region126: #{unbiased_forward.1} parent=99 // pred_check_branch
          %925 = sbr.rel (%p923) target = $region128
        $region127: #{unbiased_forward.1} parent=99 // pred_region
          %926 = dma.done %s920, 16
        $region128: #{unbiased_forward.1} parent=99 // pred_fallthru
          _
        // Predicated region
        $region129: #{unbiased_forward.1} parent=99 // pred_check
          %p927 = pneg %p525
        $region130: #{unbiased_forward.1} parent=99 // pred_check_branch
          %929 = sbr.rel (%p927) target = $region132
        $region131: #{unbiased_forward.1} parent=99 // pred_region
          %930 = dma.done [#allocation15], 1024
        $region132: #{unbiased_forward.1} parent=99 // pred_fallthru
          _
        // Predicated region
        $region133: #{unbiased_forward.1} parent=99 // pred_check
          %p931 = pneg %p546
        $region134: #{unbiased_forward.1} parent=99 // pred_check_branch
          %933 = sbr.rel (%p931) target = $region136
        $region135: #{unbiased_forward.1} parent=99 // pred_region
          %934 = dma.done [#allocation15], 16
        $region136: #{unbiased_forward.1} parent=99 // pred_fallthru
          _
        %p935 = pneg %p62
        %p936 = pneg %p59
        %p937 = scmp.lt.s32.totalorder %s46, 1
        %s938 = scalar_select %p937, %s46, 1
        %s939 = smul.addr %s938, 4
        %s940 = smul.addr %s939, 8
        %s941 = scalar_lea.vmem %s1, %s940
        %p942 = pneg %p88
        %p943 = pneg %p85
        %p944 = scmp.lt.s32.totalorder %s46, 1
        %s945 = scalar_select %p944, %s46, 1
        %s946 = scalar_lea.vmem %s2, %s945
        %p947 = pneg %p114
        %p948 = pneg %p111
        %p949 = scmp.lt.s32.totalorder %s46, 1
        %s950 = scalar_select %p949, %s46, 1
        %s951 = scalar_lea.vmem %s3, %s950
        %p952 = pneg %p140
        %p953 = pneg %p137
        %p954 = scmp.lt.s32.totalorder %s46, 1
        %s955 = scalar_select %p954, %s46, 1
        %s956 = smul.addr %s955, 96
        %s957 = smul.addr %s956, 4
        %s958 = scalar_lea.vmem %s4, %s957
        %p959 = pneg %p166
        %p960 = pneg %p163
        %s961 = sand.u32 %s179, 1
        %s962 = scalar_lea.sflag [#allocation4], %s961
        %s963 = sand.u32 %s179, 1
        %s964 = smul.addr %s963, 6
        %s965 = scalar_lea.vmem [#allocation3], %s964
        %p966 = pneg %p192
        %p967 = pneg %p189
        %s968 = sand.u32 %s46, 1
        %s969 = scalar_lea.sflag [#allocation6], %s968
        %s970 = sand.u32 %s205, 1
        %s971 = smul.addr %s970, 128
        %s972 = scalar_lea.vmem [#allocation5], %s971
        %p973 = pneg %p218
        %p974 = pneg %p215
        %p975 = scmp.lt.s32.totalorder %s46, 1
        %s976 = scalar_select %p975, %s46, 1
        %s977 = smul.addr %s976, 2
        %s978 = scalar_lea.vmem %s7, %s977
        %p979 = pneg %p244
        %p980 = pneg %p241
        %p981 = scmp.lt.s32.totalorder %s46, 1
        %s982 = scalar_select %p981, %s46, 1
        %s983 = smul.addr %s982, 2
        %s984 = scalar_lea.vmem %s8, %s983
        %p985 = pneg %p270
        %p986 = pneg %p267
        %p987 = scmp.lt.s32.totalorder %s46, 1
        %s988 = scalar_select %p987, %s46, 1
        %s989 = smul.addr %s988, 2
        %s990 = scalar_lea.vmem %s9, %s989
        %p991 = pneg %p296
        %p992 = pneg %p293
        %p993 = scmp.lt.s32.totalorder %s46, 1
        %s994 = scalar_select %p993, %s46, 1
        %s995 = smul.addr %s994, 64
        %s996 = smul.addr %s995, 4
        %s997 = scalar_lea.vmem %s10, %s996
        %p998 = pneg %p322
        %p999 = pneg %p319
        %p1000 = scmp.lt.s32.totalorder %s46, 1
        %s1001 = scalar_select %p1000, %s46, 1
        %s1002 = smul.addr %s1001, 4
        %s1003 = scalar_lea.vmem %s11, %s1002
        %p1004 = pneg %p348
        %p1005 = pneg %p345
        %s1006 = sand.u32 %s46, 1
        %s1007 = scalar_lea.sflag [#allocation6], %s1006
        %s1008 = sand.u32 %s361, 1
        %s1009 = smul.addr %s1008, 256
        %s1010 = scalar_lea.vmem [#allocation7], %s1009
        %p1011 = pneg %p374
        %p1012 = pneg %p371
        %p1013 = scmp.lt.s32.totalorder %s46, 1
        %s1014 = scalar_select %p1013, %s46, 1
        %s1015 = smul.addr %s1014, 2
        %s1016 = scalar_lea.vmem %s13, %s1015
        %p1017 = pneg %p400
        %p1018 = pneg %p397
        %s1019 = sand.u32 %s46, 1
        %s1020 = scalar_lea.sflag [#allocation9], %s1019
        %s1021 = sand.u32 %s413, 1
        %s1022 = smul.addr %s1021, 2
        %s1023 = scalar_lea.vmem [#allocation8], %s1022
        %p1024 = pneg %p426
        %p1025 = pneg %p423
        %s1026 = sand.u32 %s46, 1
        %s1027 = scalar_lea.sflag [#allocation9], %s1026
        %s1028 = sand.u32 %s439, 1
        %s1029 = smul.addr %s1028, 2
        %s1030 = scalar_lea.vmem [#allocation10], %s1029
        %p1031 = pneg %p452
        %p1032 = pneg %p449
        %s1033 = sand.u32 %s46, 1
        %s1034 = scalar_lea.sflag [#allocation12], %s1033
        %s1035 = sand.u32 %s465, 1
        %s1036 = smul.addr %s1035, 64
        %s1037 = scalar_lea.vmem [#allocation11], %s1036
        %p1038 = pneg %p478
        %p1039 = pneg %p475
        %s1040 = sand.u32 %s46, 1
        %s1041 = scalar_lea.sflag [#allocation12], %s1040
        %s1042 = sand.u32 %s491, 1
        %s1043 = scalar_lea.vmem [#allocation13], %s1042
        %p1044 = pneg %p504
        %p1045 = pneg %p501
        %p1046 = pneg %p525
        %p1047 = pneg %p522
        %p1048 = pneg %p546
        %p1049 = pneg %p543
        %p1050 = pneg %p572
        %p1051 = pneg %p569
        %p1052 = scmp.lt.s32.totalorder %s46, 1
        %s1053 = scalar_select %p1052, %s46, 1
        %s1054 = smul.addr %s1053, 2
        %s1055 = scalar_lea.vmem %s20, %s1054
        %p1056 = pneg %p598
        %p1057 = pneg %p595
        %p1058 = scmp.lt.s32.totalorder %s46, 1
        %s1059 = scalar_select %p1058, %s46, 1
        %s1060 = smul.addr %s1059, 2
        %s1061 = scalar_lea.vmem %s21, %s1060
        %p1062 = scmp.lt.s32.totalorder %s46, 1
        %s1063 = scalar_select %p1062, %s46, 1
        %s1064 = smul.addr %s1063, 4
        %s1065 = smul.addr %s1064, 8
        %s1066 = scalar_lea.vmem %s1, %s1065
        %p1067 = scmp.lt.s32.totalorder %s46, 1
        %s1068 = scalar_select %p1067, %s46, 1
        %s1069 = scalar_lea.vmem %s2, %s1068
        %p1070 = scmp.lt.s32.totalorder %s46, 1
        %s1071 = scalar_select %p1070, %s46, 1
        %s1072 = scalar_lea.vmem %s3, %s1071
        %p1073 = scmp.lt.s32.totalorder %s46, 1
        %s1074 = scalar_select %p1073, %s46, 1
        %s1075 = smul.addr %s1074, 96
        %s1076 = smul.addr %s1075, 4
        %s1077 = scalar_lea.vmem %s4, %s1076
        %p1078 = scmp.lt.s32.totalorder %s46, 1
        %s1079 = scalar_select %p1078, %s46, 1
        %s1080 = smul.addr %s1079, 2
        %s1081 = scalar_lea.vmem %s7, %s1080
        %p1082 = scmp.lt.s32.totalorder %s46, 1
        %s1083 = scalar_select %p1082, %s46, 1
        %s1084 = smul.addr %s1083, 2
        %s1085 = scalar_lea.vmem %s8, %s1084
        %p1086 = scmp.lt.s32.totalorder %s46, 1
        %s1087 = scalar_select %p1086, %s46, 1
        %s1088 = smul.addr %s1087, 2
        %s1089 = scalar_lea.vmem %s9, %s1088
        %p1090 = scmp.lt.s32.totalorder %s46, 1
        %s1091 = scalar_select %p1090, %s46, 1
        %s1092 = smul.addr %s1091, 64
        %s1093 = smul.addr %s1092, 4
        %s1094 = scalar_lea.vmem %s10, %s1093
        %p1095 = scmp.lt.s32.totalorder %s46, 1
        %s1096 = scalar_select %p1095, %s46, 1
        %s1097 = smul.addr %s1096, 4
        %s1098 = scalar_lea.vmem %s11, %s1097
        %p1099 = scmp.lt.s32.totalorder %s46, 1
        %s1100 = scalar_select %p1099, %s46, 1
        %s1101 = smul.addr %s1100, 2
        %s1102 = scalar_lea.vmem %s13, %s1101
        %p1103 = scmp.lt.s32.totalorder %s46, 1
        %s1104 = scalar_select %p1103, %s46, 1
        %s1105 = smul.addr %s1104, 2
        %s1106 = scalar_lea.vmem %s20, %s1105
        %p1107 = scmp.lt.s32.totalorder %s46, 1
        %s1108 = scalar_select %p1107, %s46, 1
        %s1109 = smul.addr %s1108, 2
        %s1110 = scalar_lea.vmem %s21, %s1109
        %v1112 = vld [vmem:[%s0] sm:$0xff]
        %v1113 = vld [vmem:[%s0 + $0x8] sm:$0xff]
        %v1114 = vld [vmem:[%s0 + $0x10] sm:$0xff]
        %v1115 = vld [vmem:[%s0 + $0x18] sm:$0xff]
        %v1116 = vld [vmem:[%s1066] sm:$0xff]
        %v1117 = vld [vmem:[%s1066 + $0x8] sm:$0xff]
        %v1118 = vld [vmem:[%s1066 + $0x10] sm:$0xff]
        %v1119 = vld [vmem:[%s1066 + $0x18] sm:$0xff]
        %v1120 = vld [vmem:[%s1069] sm:$0x1]
        %v1121 = vld [vmem:[%s1072] sm:$0x1]
        %1122 = vadd.xlane.f32.xlu0 %v1116
        %v1123 = vpop.xlane.xlu0 %1122
        %1124 = vadd.xlane.f32.xlu0 %v1117
        %v1125 = vpop.xlane.xlu0 %1124
        %1126 = vadd.xlane.f32.xlu0 %v1118
        %v1127 = vpop.xlane.xlu0 %1126
        %1128 = vadd.xlane.f32.xlu0 %v1119
        %v1129 = vpop.xlane.xlu0 %1128
        %v1130 = vrcp.pop 128.0
        %v1131 = vmul.f32 %v1123, %v1130
        %v1132 = vmul.f32 %v1125, %v1130
        %v1133 = vmul.f32 %v1127, %v1130
        %v1134 = vmul.f32 %v1129, %v1130
        %v1135 = vsub.f32 %v1116, %v1131
        %v1136 = vsub.f32 %v1117, %v1132
        %v1137 = vsub.f32 %v1118, %v1133
        %v1138 = vsub.f32 %v1119, %v1134
        %v1139 = vmul.f32 %v1135, %v1135
        %v1140 = vmul.f32 %v1136, %v1136
        %v1141 = vmul.f32 %v1137, %v1137
        %v1142 = vmul.f32 %v1138, %v1138
        %1143 = vadd.xlane.f32.xlu0 %v1139
        %v1144 = vpop.xlane.xlu0 %1143
        %1145 = vadd.xlane.f32.xlu0 %v1140
        %v1146 = vpop.xlane.xlu0 %1145
        %1147 = vadd.xlane.f32.xlu0 %v1141
        %v1148 = vpop.xlane.xlu0 %1147
        %1149 = vadd.xlane.f32.xlu0 %v1142
        %v1150 = vpop.xlane.xlu0 %1149
        %v1151 = vmul.f32 %v1144, %v1130
        %v1152 = vmul.f32 %v1146, %v1130
        %v1153 = vmul.f32 %v1148, %v1130
        %v1154 = vmul.f32 %v1150, %v1130
        %v1155 = vadd.f32 %v1151, 1e-12
        %v1156 = vadd.f32 %v1152, 1e-12
        %v1157 = vadd.f32 %v1153, 1e-12
        %v1158 = vadd.f32 %v1154, 1e-12
        %v1159 = vrsqrt.pop %v1155
        %v1160 = vrsqrt.pop %v1156
        %v1161 = vrsqrt.pop %v1157
        %v1162 = vrsqrt.pop %v1158
        %v1163 = vmul.f32 %v1135, %v1159
        %v1164 = vmul.f32 %v1136, %v1160
        %v1165 = vmul.f32 %v1137, %v1161
        %v1166 = vmul.f32 %v1138, %v1162
        %v1168 = vlaneseq
        %v1169 = vshrl.u32 %v1168, 7
        %v1170 = vsub.s32 0, %v1169
        %v1171 = vrot.slane %v1120, %v1170
        %v1173 = vmul.f32 %v1163, %v1171
        %v1174 = vmul.f32 %v1164, %v1171
        %v1175 = vmul.f32 %v1165, %v1171
        %v1176 = vmul.f32 %v1166, %v1171
        %v1178 = vlaneseq
        %v1179 = vshrl.u32 %v1178, 7
        %v1180 = vsub.s32 0, %v1179
        %v1181 = vrot.slane %v1121, %v1180
        %v1183 = vadd.f32 %v1173, %v1181
        %v1184 = vadd.f32 %v1174, %v1181
        %v1185 = vadd.f32 %v1175, %v1181
        %v1186 = vadd.f32 %v1176, %v1181
        %v1187 = vld [vmem:[%s1077] sm:$0xff]
        %v1188 = vld [vmem:[%s1077 + $0x8] sm:$0xf]
        %v1189 = vld [vmem:[%s1077 + $0xc] sm:$0xff]
        %v1190 = vld [vmem:[%s1077 + $0x14] sm:$0xf]
        %v1191 = vld [vmem:[%s1077 + $0x18] sm:$0xff]
        %v1192 = vld [vmem:[%s1077 + $0x20] sm:$0xf]
        %v1193 = vld [vmem:[%s1077 + $0x24] sm:$0xff]
        %v1194 = vld [vmem:[%s1077 + $0x2c] sm:$0xf]
        %v1195 = vld [vmem:[%s1077 + $0x30] sm:$0xff]
        %v1196 = vld [vmem:[%s1077 + $0x38] sm:$0xf]
        %v1197 = vld [vmem:[%s1077 + $0x3c] sm:$0xff]
        %v1198 = vld [vmem:[%s1077 + $0x44] sm:$0xf]
        %v1199 = vld [vmem:[%s1077 + $0x48] sm:$0xff]
        %v1200 = vld [vmem:[%s1077 + $0x50] sm:$0xf]
        %v1201 = vld [vmem:[%s1077 + $0x54] sm:$0xff]
        %v1202 = vld [vmem:[%s1077 + $0x5c] sm:$0xf]
        %v1203 = vld [vmem:[%s1077 + $0x60] sm:$0xff]
        %v1204 = vld [vmem:[%s1077 + $0x68] sm:$0xf]
        %v1205 = vld [vmem:[%s1077 + $0x6c] sm:$0xff]
        %v1206 = vld [vmem:[%s1077 + $0x74] sm:$0xf]
        %v1207 = vld [vmem:[%s1077 + $0x78] sm:$0xff]
        %v1208 = vld [vmem:[%s1077 + $0x80] sm:$0xf]
        %v1209 = vld [vmem:[%s1077 + $0x84] sm:$0xff]
        %v1210 = vld [vmem:[%s1077 + $0x8c] sm:$0xf]
        %v1211 = vld [vmem:[%s1077 + $0x90] sm:$0xff]
        %v1212 = vld [vmem:[%s1077 + $0x98] sm:$0xf]
        %v1213 = vld [vmem:[%s1077 + $0x9c] sm:$0xff]
        %v1214 = vld [vmem:[%s1077 + $0xa4] sm:$0xf]
        %v1215 = vld [vmem:[%s1077 + $0xa8] sm:$0xff]
        %v1216 = vld [vmem:[%s1077 + $0xb0] sm:$0xf]
        %v1217 = vld [vmem:[%s1077 + $0xb4] sm:$0xff]
        %v1218 = vld [vmem:[%s1077 + $0xbc] sm:$0xf]
        %v1219 = vld [vmem:[%s869] sm:$0x7]
        %v1220 = vpack.c.bf16 %v1184, %v1183
        %v1221 = vpack.c.bf16 %v1186, %v1185
        %v1223 = vlaneseq
        %v1224 = vshrl.u32 %v1223, 7
        %v1225 = vsub.s32 0, %v1224
        %v1226 = vrot.slane %v1219, %v1225
        %v1227 = vlaneseq
        %v1228 = vshrl.u32 %v1227, 7
        %v1229 = vsub.s32 1, %v1228
        %v1230 = vrot.slane %v1219, %v1229
        %v1231 = vlaneseq
        %v1232 = vshrl.u32 %v1231, 7
        %v1233 = vsub.s32 2, %v1232
        %v1234 = vrot.slane %v1219, %v1233
        %v1270 = vunpack.c.l.b16 %v1187
        %v1271 = vunpack.c.h.b16 %v1187
        %v1272 = vunpack.c.l.b16 %v1188
        %v1273 = vunpack.c.l.b16 %v1189
        %v1274 = vunpack.c.h.b16 %v1189
        %v1275 = vunpack.c.l.b16 %v1190
        %v1276 = vunpack.c.l.b16 %v1191
        %v1277 = vunpack.c.h.b16 %v1191
        %v1278 = vunpack.c.l.b16 %v1192
        %v1279 = vunpack.c.l.b16 %v1193
        %v1280 = vunpack.c.h.b16 %v1193
        %v1281 = vunpack.c.l.b16 %v1194
        %v1282 = vunpack.c.l.b16 %v1195
        %v1283 = vunpack.c.h.b16 %v1195
        %v1284 = vunpack.c.l.b16 %v1196
        %v1285 = vunpack.c.l.b16 %v1197
        %v1286 = vunpack.c.h.b16 %v1197
        %v1287 = vunpack.c.l.b16 %v1198
        %v1288 = vunpack.c.l.b16 %v1199
        %v1289 = vunpack.c.h.b16 %v1199
        %v1290 = vunpack.c.l.b16 %v1200
        %v1291 = vunpack.c.l.b16 %v1201
        %v1292 = vunpack.c.h.b16 %v1201
        %v1293 = vunpack.c.l.b16 %v1202
        %v1294 = vunpack.c.l.b16 %v1203
        %v1295 = vunpack.c.h.b16 %v1203
        %v1296 = vunpack.c.l.b16 %v1204
        %v1297 = vunpack.c.l.b16 %v1205
        %v1298 = vunpack.c.h.b16 %v1205
        %v1299 = vunpack.c.l.b16 %v1206
        %v1300 = vunpack.c.l.b16 %v1207
        %v1301 = vunpack.c.h.b16 %v1207
        %v1302 = vunpack.c.l.b16 %v1208
        %v1303 = vunpack.c.l.b16 %v1209
        %v1304 = vunpack.c.h.b16 %v1209
        %v1305 = vunpack.c.l.b16 %v1210
        %v1306 = vunpack.c.l.b16 %v1211
        %v1307 = vunpack.c.h.b16 %v1211
        %v1308 = vunpack.c.l.b16 %v1212
        %v1309 = vunpack.c.l.b16 %v1213
        %v1310 = vunpack.c.h.b16 %v1213
        %v1311 = vunpack.c.l.b16 %v1214
        %v1312 = vunpack.c.l.b16 %v1215
        %v1313 = vunpack.c.h.b16 %v1215
        %v1314 = vunpack.c.l.b16 %v1216
        %v1315 = vunpack.c.l.b16 %v1217
        %v1316 = vunpack.c.h.b16 %v1217
        %v1317 = vunpack.c.l.b16 %v1218
        %v1318 = vpack.c.b16 %v1273, %v1270
        %v1319 = vpack.c.b16 %v1274, %v1271
        %v1320 = vpack.c.b16 %v1275, %v1272
        %v1321 = vpack.c.b16 %v1279, %v1276
        %v1322 = vpack.c.b16 %v1280, %v1277
        %v1323 = vpack.c.b16 %v1281, %v1278
        %v1324 = vpack.c.b16 %v1285, %v1282
        %v1325 = vpack.c.b16 %v1286, %v1283
        %v1326 = vpack.c.b16 %v1287, %v1284
        %v1327 = vpack.c.b16 %v1291, %v1288
        %v1328 = vpack.c.b16 %v1292, %v1289
        %v1329 = vpack.c.b16 %v1293, %v1290
        %v1330 = vpack.c.b16 %v1297, %v1294
        %v1331 = vpack.c.b16 %v1298, %v1295
        %v1332 = vpack.c.b16 %v1299, %v1296
        %v1333 = vpack.c.b16 %v1303, %v1300
        %v1334 = vpack.c.b16 %v1304, %v1301
        %v1335 = vpack.c.b16 %v1305, %v1302
        %v1336 = vpack.c.b16 %v1309, %v1306
        %v1337 = vpack.c.b16 %v1310, %v1307
        %v1338 = vpack.c.b16 %v1311, %v1308
        %v1339 = vpack.c.b16 %v1315, %v1312
        %v1340 = vpack.c.b16 %v1316, %v1313
        %v1341 = vpack.c.b16 %v1317, %v1314
        %1366 = vmatprep.subr.bf16.mxu0 %v1319
        %1367 = vmatpush1.bf16.msra.mxu0 %v1318
        %1368 = vmatprep.subr.bf16.mxu0 %v1322
        %1369 = vmatpush1.bf16.msra.mxu0 %v1321
        %1370 = vmatprep.subr.bf16.mxu0 %v1325
        %1371 = vmatpush1.bf16.msra.mxu0 %v1324
        %1372 = vmatprep.subr.bf16.mxu0 %v1328
        %1373 = vmatpush1.bf16.msra.mxu0 %v1327
        %1374 = vmatprep.subr.bf16.mxu0 %v1331
        %1375 = vmatpush1.bf16.msra.mxu0 %v1330
        %1376 = vmatprep.subr.bf16.mxu0 %v1334
        %1377 = vmatpush1.bf16.msra.mxu0 %v1333
        %1378 = vmatprep.subr.bf16.mxu0 %v1337
        %1379 = vmatpush1.bf16.msra.mxu0 %v1336
        %1380 = vmatprep.subr.bf16.mxu0 %v1340
        %1381 = vmatpush1.bf16.msra.mxu0 %v1339
        %1382 = vmatprep.subr.bf16.mxu0 0
        %1383 = vmatpush1.bf16.msra.mxu0 0
        %1384 = vmatprep.subr.bf16.mxu0 0
        %1385 = vmatpush1.bf16.msra.mxu0 0
        %1386 = vmatprep.subr.bf16.mxu0 0
        %1387 = vmatpush1.bf16.msra.mxu0 0
        %1388 = vmatprep.subr.bf16.mxu0 0
        %1389 = vmatpush1.bf16.msra.mxu0 0
        %1390 = vmatprep.subr.bf16.mxu0 0
        %1391 = vmatpush1.bf16.msra.mxu0 0
        %1392 = vmatprep.subr.bf16.mxu0 0
        %1393 = vmatpush1.bf16.msra.mxu0 0
        %1394 = vmatprep.subr.bf16.mxu0 0
        %1395 = vmatpush1.bf16.msra.mxu0 0
        %1396 = vmatprep.subr.bf16.mxu0 0
        %1397 = vmatpush1.bf16.msra.mxu0 0
        %1398 = vmatprep.mubr.bf16.mxu0 0
        %1399 = vmatmul.mubr.bf16.gmra.mrb[0].mxu0 %v1220
        %v1400 = vpop.f32.mrb[0].mxu0
        %v1401 = vadd.f32 %v1226, %v1400
        %v1402 = vpop.f32.mrb[0].mxu0
        %v1403 = vadd.f32 %v1230, %v1402
        %v1404 = vpop.f32.mrb[0].mxu0
        %v1405 = vadd.f32 %v1226, %v1404
        %v1406 = vpop.f32.mrb[0].mxu0
        %v1407 = vadd.f32 %v1230, %v1406
        %1408 = vmatprep.mubr.bf16.mxu0 0
        %1409 = vmatmul.mubr.bf16.gmra.mrb[0].mxu0 %v1221
        %v1410 = vpop.f32.mrb[0].mxu0
        %v1411 = vadd.f32 %v1226, %v1410
        %v1412 = vpop.f32.mrb[0].mxu0
        %v1413 = vadd.f32 %v1230, %v1412
        %v1414 = vpop.f32.mrb[0].mxu0
        %v1415 = vadd.f32 %v1226, %v1414
        %v1416 = vpop.f32.mrb[0].mxu0
        %v1417 = vadd.f32 %v1230, %v1416
        %1418 = vdwg.mxu0
        %1419 = vmatprep.subr.bf16.mxu0 0
        %1420 = vmatpush1.bf16.msra.mxu0 %v1320
        %1421 = vmatprep.subr.bf16.mxu0 0
        %1422 = vmatpush1.bf16.msra.mxu0 %v1323
        %1423 = vmatprep.subr.bf16.mxu0 0
        %1424 = vmatpush1.bf16.msra.mxu0 %v1326
        %1425 = vmatprep.subr.bf16.mxu0 0
        %1426 = vmatpush1.bf16.msra.mxu0 %v1329
        %1427 = vmatprep.subr.bf16.mxu0 0
        %1428 = vmatpush1.bf16.msra.mxu0 %v1332
        %1429 = vmatprep.subr.bf16.mxu0 0
        %1430 = vmatpush1.bf16.msra.mxu0 %v1335
        %1431 = vmatprep.subr.bf16.mxu0 0
        %1432 = vmatpush1.bf16.msra.mxu0 %v1338
        %1433 = vmatprep.subr.bf16.mxu0 0
        %1434 = vmatpush1.bf16.msra.mxu0 %v1341
        %1435 = vmatprep.subr.bf16.mxu0 0
        %1436 = vmatpush1.bf16.msra.mxu0 0
        %1437 = vmatprep.subr.bf16.mxu0 0
        %1438 = vmatpush1.bf16.msra.mxu0 0
        %1439 = vmatprep.subr.bf16.mxu0 0
        %1440 = vmatpush1.bf16.msra.mxu0 0
        %1441 = vmatprep.subr.bf16.mxu0 0
        %1442 = vmatpush1.bf16.msra.mxu0 0
        %1443 = vmatprep.subr.bf16.mxu0 0
        %1444 = vmatpush1.bf16.msra.mxu0 0
        %1445 = vmatprep.subr.bf16.mxu0 0
        %1446 = vmatpush1.bf16.msra.mxu0 0
        %1447 = vmatprep.subr.bf16.mxu0 0
        %1448 = vmatpush1.bf16.msra.mxu0 0
        %1449 = vmatprep.subr.bf16.mxu0 0
        %1450 = vmatpush1.bf16.msra.mxu0 0
        %1451 = vmatprep.mubr.bf16.mxu0 0
        %1452 = vmatmul.mubr.bf16.gmra.mrb[0].mxu0 %v1220
        %v1453 = vpop.f32.mrb[0].mxu0
        %v1454 = vadd.f32 %v1234, %v1453
        %v1455 = vpop.f32.mrb[0].mxu0
        %v1456 = vpop.f32.mrb[0].mxu0
        %v1457 = vadd.f32 %v1234, %v1456
        %v1458 = vpop.f32.mrb[0].mxu0
        %1459 = vmatprep.mubr.bf16.mxu0 0
        %1460 = vmatmul.mubr.bf16.gmra.mrb[0].mxu0 %v1221
        %v1461 = vpop.f32.mrb[0].mxu0
        %v1462 = vadd.f32 %v1234, %v1461
        %v1463 = vpop.f32.mrb[0].mxu0
        %v1464 = vpop.f32.mrb[0].mxu0
        %v1465 = vadd.f32 %v1234, %v1464
        %v1466 = vpop.f32.mrb[0].mxu0
        %1467 = vdwg.mxu0
        %v1468 = vpack.c.bf16 %v1405, %v1401
        %v1469 = vpack.c.bf16 %v1415, %v1411
        %v1470 = vpack.c.bf16 %v1407, %v1403
        %v1471 = vpack.c.bf16 %v1417, %v1413
        %v1472 = vpack.c.bf16 %v1457, %v1454
        %v1473 = vpack.c.bf16 %v1465, %v1462
        %vm1474 = vcmask 523264
        %v1476 = vsel %vm1474, %v1468, 0
        %v1479 = vsel %vm1474, %v1469, 0
        %v1482 = vsel %vm1474, %v1470, 0
        %v1485 = vsel %vm1474, %v1471, 0
        %1487 = vmatprep.subr.bf16.mxu0 0
        %1488 = vmatpush1.bf16.xpose.msra.mxu0 %v1482
        %1489 = vmatprep.subr.bf16.mxu0 0
        %1490 = vmatpush1.bf16.xpose.msra.mxu0 %v1485
        %1491 = vmatprep.subr.bf16.mxu0 0
        %1492 = vmatpush1.bf16.xpose.msra.mxu0 0
        %1493 = vmatprep.subr.bf16.mxu0 0
        %1494 = vmatpush1.bf16.xpose.msra.mxu0 0
        %1495 = vmatprep.subr.bf16.mxu0 0
        %1496 = vmatpush1.bf16.xpose.msra.mxu0 0
        %1497 = vmatprep.subr.bf16.mxu0 0
        %1498 = vmatpush1.bf16.xpose.msra.mxu0 0
        %1499 = vmatprep.subr.bf16.mxu0 0
        %1500 = vmatpush1.bf16.xpose.msra.mxu0 0
        %1501 = vmatprep.subr.bf16.mxu0 0
        %1502 = vmatpush1.bf16.xpose.msra.mxu0 0
        %1503 = vmatprep.subr.bf16.mxu0 0
        %1504 = vmatpush1.bf16.xpose.msra.mxu0 0
        %1505 = vmatprep.subr.bf16.mxu0 0
        %1506 = vmatpush1.bf16.xpose.msra.mxu0 0
        %1507 = vmatprep.subr.bf16.mxu0 0
        %1508 = vmatpush1.bf16.xpose.msra.mxu0 0
        %1509 = vmatprep.subr.bf16.mxu0 0
        %1510 = vmatpush1.bf16.xpose.msra.mxu0 0
        %1511 = vmatprep.subr.bf16.mxu0 0
        %1512 = vmatpush1.bf16.xpose.msra.mxu0 0
        %1513 = vmatprep.subr.bf16.mxu0 0
        %1514 = vmatpush1.bf16.xpose.msra.mxu0 0
        %1515 = vmatprep.subr.bf16.mxu0 0
        %1516 = vmatpush1.bf16.xpose.msra.mxu0 0
        %1517 = vmatprep.subr.bf16.mxu0 0
        %1518 = vmatpush1.bf16.xpose.msra.mxu0 0
        %1519 = vmatprep.mubr.bf16.mxu0 0
        %1520 = vmatmul.mubr.bf16.gmra.mrb[0].mxu0 %v1476
        %v1521 = vpop.f32.mrb[0].mxu0
        %v1522 = vadd.f32 0.0, %v1521
        %v1523 = vpop.f32.mrb[0].mxu0
        %v1524 = vpop.f32.mrb[0].mxu0
        %v1525 = vadd.f32 0.0, %v1524
        %v1526 = vpop.f32.mrb[0].mxu0
        %1527 = vmatprep.mubr.bf16.mxu0 0
        %1528 = vmatmul.mubr.bf16.gmra.mrb[0].mxu0 %v1479
        %v1529 = vpop.f32.mrb[0].mxu0
        %v1530 = vadd.f32 0.0, %v1529
        %v1531 = vpop.f32.mrb[0].mxu0
        %v1532 = vpop.f32.mrb[0].mxu0
        %v1533 = vadd.f32 0.0, %v1532
        %v1534 = vpop.f32.mrb[0].mxu0
        %1535 = vdwg.mxu0
        %v1536 = vmul.f32 %v1522, 0.125
        %v1537 = vmul.f32 %v1525, 0.125
        %v1538 = vmul.f32 %v1530, 0.125
        %v1539 = vmul.f32 %v1533, 0.125
        %v1540 = vadd.f32 %v1536, %v1112
        %v1541 = vadd.f32 %v1537, %v1113
        %v1542 = vadd.f32 %v1538, %v1114
        %v1543 = vadd.f32 %v1539, %v1115
        %vm1544 = vcmask 261120
        %v1545 = vsel %vm1544, %v1540, -inf
        %1546 = vmax.xlane.f32.xlu0 %v1545
        %v1547 = vpop.xlane.xlu0 %1546
        %v1548 = vsel %vm1544, %v1541, -inf
        %1549 = vmax.xlane.f32.xlu0 %v1548
        %v1550 = vpop.xlane.xlu0 %1549
        %v1551 = vsel %vm1544, %v1542, -inf
        %1552 = vmax.xlane.f32.xlu0 %v1551
        %v1553 = vpop.xlane.xlu0 %1552
        %v1554 = vsel %vm1544, %v1543, -inf
        %1555 = vmax.xlane.f32.xlu0 %v1554
        %v1556 = vpop.xlane.xlu0 %1555
        %v1557 = vsub.f32 %v1540, %v1547
        %v1558 = vsub.f32 %v1541, %v1550
        %v1559 = vsub.f32 %v1542, %v1553
        %v1560 = vsub.f32 %v1543, %v1556
        %v1561 = vmul.f32 %v1557, 1.442695
        %v1562 = vpow.pop %v1561
        %v1563 = vmul.f32 %v1558, 1.442695
        %v1564 = vpow.pop %v1563
        %v1565 = vmul.f32 %v1559, 1.442695
        %v1566 = vpow.pop %v1565
        %v1567 = vmul.f32 %v1560, 1.442695
        %v1568 = vpow.pop %v1567
        %v1569 = vsel %vm1544, %v1562, 0.0
        %1570 = vadd.xlane.f32.xlu0 %v1569
        %v1571 = vpop.xlane.xlu0 %1570
        %v1572 = vsel %vm1544, %v1564, 0.0
        %1573 = vadd.xlane.f32.xlu0 %v1572
        %v1574 = vpop.xlane.xlu0 %1573
        %v1575 = vsel %vm1544, %v1566, 0.0
        %1576 = vadd.xlane.f32.xlu0 %v1575
        %v1577 = vpop.xlane.xlu0 %1576
        %v1578 = vsel %vm1544, %v1568, 0.0
        %1579 = vadd.xlane.f32.xlu0 %v1578
        %v1580 = vpop.xlane.xlu0 %1579
        %v1581 = vrcp.pop %v1571
        %v1582 = vrcp.pop %v1574
        %v1583 = vrcp.pop %v1577
        %v1584 = vrcp.pop %v1580
        %v1585 = vmul.f32 %v1562, %v1581
        %v1586 = vmul.f32 %v1564, %v1582
        %v1587 = vmul.f32 %v1566, %v1583
        %v1588 = vmul.f32 %v1568, %v1584
        %v1589 = vpack.c.bf16 %v1586, %v1585
        %v1590 = vpack.c.bf16 %v1588, %v1587
        %v1592 = vsel %vm1544, %v1589, 0
        %v1595 = vsel %vm1544, %v1590, 0
        %1597 = vmatprep.subr.bf16.mxu0 0
        %1598 = vmatpush1.bf16.msra.mxu0 %v1472
        %1599 = vmatprep.subr.bf16.mxu0 0
        %1600 = vmatpush1.bf16.msra.mxu0 %v1473
        %1601 = vmatprep.subr.bf16.mxu0 0
        %1602 = vmatpush1.bf16.msra.mxu0 0
        %1603 = vmatprep.subr.bf16.mxu0 0
        %1604 = vmatpush1.bf16.msra.mxu0 0
        %1605 = vmatprep.subr.bf16.mxu0 0
        %1606 = vmatpush1.bf16.msra.mxu0 0
        %1607 = vmatprep.subr.bf16.mxu0 0
        %1608 = vmatpush1.bf16.msra.mxu0 0
        %1609 = vmatprep.subr.bf16.mxu0 0
        %1610 = vmatpush1.bf16.msra.mxu0 0
        %1611 = vmatprep.subr.bf16.mxu0 0
        %1612 = vmatpush1.bf16.msra.mxu0 0
        %1613 = vmatprep.subr.bf16.mxu0 0
        %1614 = vmatpush1.bf16.msra.mxu0 0
        %1615 = vmatprep.subr.bf16.mxu0 0
        %1616 = vmatpush1.bf16.msra.mxu0 0
        %1617 = vmatprep.subr.bf16.mxu0 0
        %1618 = vmatpush1.bf16.msra.mxu0 0
        %1619 = vmatprep.subr.bf16.mxu0 0
        %1620 = vmatpush1.bf16.msra.mxu0 0
        %1621 = vmatprep.subr.bf16.mxu0 0
        %1622 = vmatpush1.bf16.msra.mxu0 0
        %1623 = vmatprep.subr.bf16.mxu0 0
        %1624 = vmatpush1.bf16.msra.mxu0 0
        %1625 = vmatprep.subr.bf16.mxu0 0
        %1626 = vmatpush1.bf16.msra.mxu0 0
        %1627 = vmatprep.subr.bf16.mxu0 0
        %1628 = vmatpush1.bf16.msra.mxu0 0
        %1629 = vmatprep.mubr.bf16.mxu0 0
        %1630 = vmatmul.mubr.bf16.gmra.mrb[0].mxu0 %v1592
        %v1631 = vpop.f32.mrb[0].mxu0
        %v1632 = vadd.f32 0.0, %v1631
        %v1633 = vpop.f32.mrb[0].mxu0
        %v1634 = vpop.f32.mrb[0].mxu0
        %v1635 = vadd.f32 0.0, %v1634
        %v1636 = vpop.f32.mrb[0].mxu0
        %1637 = vmatprep.mubr.bf16.mxu0 0
        %1638 = vmatmul.mubr.bf16.gmra.mrb[0].mxu0 %v1595
        %v1639 = vpop.f32.mrb[0].mxu0
        %v1640 = vadd.f32 0.0, %v1639
        %v1641 = vpop.f32.mrb[0].mxu0
        %v1642 = vpop.f32.mrb[0].mxu0
        %v1643 = vadd.f32 0.0, %v1642
        %v1644 = vpop.f32.mrb[0].mxu0
        %1645 = vdwg.mxu0
        %1648 = vrot.lane.b32.xlu0 %v1468, 64
        %v1649 = vpop.permute.xlu0 %1648
        %1650 = vrot.lane.b32.xlu0 %v1469, 64
        %v1651 = vpop.permute.xlu0 %1650
        %1654 = vrot.lane.b32.xlu0 %v1470, 64
        %v1655 = vpop.permute.xlu0 %1654
        %1656 = vrot.lane.b32.xlu0 %v1471, 64
        %v1657 = vpop.permute.xlu0 %1656
        %v1659 = vsel %vm1474, %v1649, 0
        %v1662 = vsel %vm1474, %v1651, 0
        %v1665 = vsel %vm1474, %v1655, 0
        %v1668 = vsel %vm1474, %v1657, 0
        %1670 = vmatprep.subr.bf16.mxu0 0
        %1671 = vmatpush1.bf16.xpose.msra.mxu0 %v1665
        %1672 = vmatprep.subr.bf16.mxu0 0
        %1673 = vmatpush1.bf16.xpose.msra.mxu0 %v1668
        %1674 = vmatprep.subr.bf16.mxu0 0
        %1675 = vmatpush1.bf16.xpose.msra.mxu0 0
        %1676 = vmatprep.subr.bf16.mxu0 0
        %1677 = vmatpush1.bf16.xpose.msra.mxu0 0
        %1678 = vmatprep.subr.bf16.mxu0 0
        %1679 = vmatpush1.bf16.xpose.msra.mxu0 0
        %1680 = vmatprep.subr.bf16.mxu0 0
        %1681 = vmatpush1.bf16.xpose.msra.mxu0 0
        %1682 = vmatprep.subr.bf16.mxu0 0
        %1683 = vmatpush1.bf16.xpose.msra.mxu0 0
        %1684 = vmatprep.subr.bf16.mxu0 0
        %1685 = vmatpush1.bf16.xpose.msra.mxu0 0
        %1686 = vmatprep.subr.bf16.mxu0 0
        %1687 = vmatpush1.bf16.xpose.msra.mxu0 0
        %1688 = vmatprep.subr.bf16.mxu0 0
        %1689 = vmatpush1.bf16.xpose.msra.mxu0 0
        %1690 = vmatprep.subr.bf16.mxu0 0
        %1691 = vmatpush1.bf16.xpose.msra.mxu0 0
        %1692 = vmatprep.subr.bf16.mxu0 0
        %1693 = vmatpush1.bf16.xpose.msra.mxu0 0
        %1694 = vmatprep.subr.bf16.mxu0 0
        %1695 = vmatpush1.bf16.xpose.msra.mxu0 0
        %1696 = vmatprep.subr.bf16.mxu0 0
        %1697 = vmatpush1.bf16.xpose.msra.mxu0 0
        %1698 = vmatprep.subr.bf16.mxu0 0
        %1699 = vmatpush1.bf16.xpose.msra.mxu0 0
        %1700 = vmatprep.subr.bf16.mxu0 0
        %1701 = vmatpush1.bf16.xpose.msra.mxu0 0
        %1702 = vmatprep.mubr.bf16.mxu0 0
        %1703 = vmatmul.mubr.bf16.gmra.mrb[0].mxu0 %v1659
        %v1704 = vpop.f32.mrb[0].mxu0
        %v1705 = vadd.f32 0.0, %v1704
        %v1706 = vpop.f32.mrb[0].mxu0
        %v1707 = vpop.f32.mrb[0].mxu0
        %v1708 = vadd.f32 0.0, %v1707
        %v1709 = vpop.f32.mrb[0].mxu0
        %1710 = vmatprep.mubr.bf16.mxu0 0
        %1711 = vmatmul.mubr.bf16.gmra.mrb[0].mxu0 %v1662
        %v1712 = vpop.f32.mrb[0].mxu0
        %v1713 = vadd.f32 0.0, %v1712
        %v1714 = vpop.f32.mrb[0].mxu0
        %v1715 = vpop.f32.mrb[0].mxu0
        %v1716 = vadd.f32 0.0, %v1715
        %v1717 = vpop.f32.mrb[0].mxu0
        %1718 = vdwg.mxu0
        %v1719 = vmul.f32 %v1705, 0.125
        %v1720 = vmul.f32 %v1708, 0.125
        %v1721 = vmul.f32 %v1713, 0.125
        %v1722 = vmul.f32 %v1716, 0.125
        %v1723 = vadd.f32 %v1719, %v1112
        %v1724 = vadd.f32 %v1720, %v1113
        %v1725 = vadd.f32 %v1721, %v1114
        %v1726 = vadd.f32 %v1722, %v1115
        %v1727 = vsel %vm1544, %v1723, -inf
        %1728 = vmax.xlane.f32.xlu0 %v1727
        %v1729 = vpop.xlane.xlu0 %1728
        %v1730 = vsel %vm1544, %v1724, -inf
        %1731 = vmax.xlane.f32.xlu0 %v1730
        %v1732 = vpop.xlane.xlu0 %1731
        %v1733 = vsel %vm1544, %v1725, -inf
        %1734 = vmax.xlane.f32.xlu0 %v1733
        %v1735 = vpop.xlane.xlu0 %1734
        %v1736 = vsel %vm1544, %v1726, -inf
        %1737 = vmax.xlane.f32.xlu0 %v1736
        %v1738 = vpop.xlane.xlu0 %1737
        %v1739 = vsub.f32 %v1723, %v1729
        %v1740 = vsub.f32 %v1724, %v1732
        %v1741 = vsub.f32 %v1725, %v1735
        %v1742 = vsub.f32 %v1726, %v1738
        %v1743 = vmul.f32 %v1739, 1.442695
        %v1744 = vpow.pop %v1743
        %v1745 = vmul.f32 %v1740, 1.442695
        %v1746 = vpow.pop %v1745
        %v1747 = vmul.f32 %v1741, 1.442695
        %v1748 = vpow.pop %v1747
        %v1749 = vmul.f32 %v1742, 1.442695
        %v1750 = vpow.pop %v1749
        %v1751 = vsel %vm1544, %v1744, 0.0
        %1752 = vadd.xlane.f32.xlu0 %v1751
        %v1753 = vpop.xlane.xlu0 %1752
        %v1754 = vsel %vm1544, %v1746, 0.0
        %1755 = vadd.xlane.f32.xlu0 %v1754
        %v1756 = vpop.xlane.xlu0 %1755
        %v1757 = vsel %vm1544, %v1748, 0.0
        %1758 = vadd.xlane.f32.xlu0 %v1757
        %v1759 = vpop.xlane.xlu0 %1758
        %v1760 = vsel %vm1544, %v1750, 0.0
        %1761 = vadd.xlane.f32.xlu0 %v1760
        %v1762 = vpop.xlane.xlu0 %1761
        %v1763 = vrcp.pop %v1753
        %v1764 = vrcp.pop %v1756
        %v1765 = vrcp.pop %v1759
        %v1766 = vrcp.pop %v1762
        %v1767 = vmul.f32 %v1744, %v1763
        %v1768 = vmul.f32 %v1746, %v1764
        %v1769 = vmul.f32 %v1748, %v1765
        %v1770 = vmul.f32 %v1750, %v1766
        %v1771 = vpack.c.bf16 %v1768, %v1767
        %v1772 = vpack.c.bf16 %v1770, %v1769
        %1775 = vrot.lane.b32.xlu0 %v1472, 64
        %v1776 = vpop.permute.xlu0 %1775
        %1777 = vrot.lane.b32.xlu0 %v1473, 64
        %v1778 = vpop.permute.xlu0 %1777
        %v1782 = vsel %vm1544, %v1771, 0
        %v1785 = vsel %vm1544, %v1772, 0
        %1787 = vmatprep.subr.bf16.mxu0 0
        %1788 = vmatpush1.bf16.msra.mxu0 %v1776
        %1789 = vmatprep.subr.bf16.mxu0 0
        %1790 = vmatpush1.bf16.msra.mxu0 %v1778
        %1791 = vmatprep.subr.bf16.mxu0 0
        %1792 = vmatpush1.bf16.msra.mxu0 0
        %1793 = vmatprep.subr.bf16.mxu0 0
        %1794 = vmatpush1.bf16.msra.mxu0 0
        %1795 = vmatprep.subr.bf16.mxu0 0
        %1796 = vmatpush1.bf16.msra.mxu0 0
        %1797 = vmatprep.subr.bf16.mxu0 0
        %1798 = vmatpush1.bf16.msra.mxu0 0
        %1799 = vmatprep.subr.bf16.mxu0 0
        %1800 = vmatpush1.bf16.msra.mxu0 0
        %1801 = vmatprep.subr.bf16.mxu0 0
        %1802 = vmatpush1.bf16.msra.mxu0 0
        %1803 = vmatprep.subr.bf16.mxu0 0
        %1804 = vmatpush1.bf16.msra.mxu0 0
        %1805 = vmatprep.subr.bf16.mxu0 0
        %1806 = vmatpush1.bf16.msra.mxu0 0
        %1807 = vmatprep.subr.bf16.mxu0 0
        %1808 = vmatpush1.bf16.msra.mxu0 0
        %1809 = vmatprep.subr.bf16.mxu0 0
        %1810 = vmatpush1.bf16.msra.mxu0 0
        %1811 = vmatprep.subr.bf16.mxu0 0
        %1812 = vmatpush1.bf16.msra.mxu0 0
        %1813 = vmatprep.subr.bf16.mxu0 0
        %1814 = vmatpush1.bf16.msra.mxu0 0
        %1815 = vmatprep.subr.bf16.mxu0 0
        %1816 = vmatpush1.bf16.msra.mxu0 0
        %1817 = vmatprep.subr.bf16.mxu0 0
        %1818 = vmatpush1.bf16.msra.mxu0 0
        %1819 = vmatprep.mubr.bf16.mxu0 0
        %1820 = vmatmul.mubr.bf16.gmra.mrb[0].mxu0 %v1782
        %v1821 = vpop.f32.mrb[0].mxu0
        %v1822 = vadd.f32 0.0, %v1821
        %v1823 = vpop.f32.mrb[0].mxu0
        %v1824 = vpop.f32.mrb[0].mxu0
        %v1825 = vadd.f32 0.0, %v1824
        %v1826 = vpop.f32.mrb[0].mxu0
        %1827 = vmatprep.mubr.bf16.mxu0 0
        %1828 = vmatmul.mubr.bf16.gmra.mrb[0].mxu0 %v1785
        %v1829 = vpop.f32.mrb[0].mxu0
        %v1830 = vadd.f32 0.0, %v1829
        %v1831 = vpop.f32.mrb[0].mxu0
        %v1832 = vpop.f32.mrb[0].mxu0
        %v1833 = vadd.f32 0.0, %v1832
        %v1834 = vpop.f32.mrb[0].mxu0
        %1835 = vdwg.mxu0
        %1840 = vrot.lane.b32.xlu0 %v1822, 64
        %v1841 = vpop.permute.xlu0 %1840
        %1842 = vrot.lane.b32.xlu0 %v1825, 64
        %v1843 = vpop.permute.xlu0 %1842
        %1844 = vrot.lane.b32.xlu0 %v1830, 64
        %v1845 = vpop.permute.xlu0 %1844
        %1846 = vrot.lane.b32.xlu0 %v1833, 64
        %v1847 = vpop.permute.xlu0 %1846
        %v1852 = vsel %vm1474, %v1632, %v1841
        %v1853 = vsel %vm1474, %v1635, %v1843
        %v1854 = vsel %vm1474, %v1640, %v1845
        %v1855 = vsel %vm1474, %v1643, %v1847
        %v1856 = vld [vmem:[%s878] sm:$0xf]
        %v1857 = vld [vmem:[%s878 + $0x4] sm:$0xf]
        %v1858 = vld [vmem:[%s878 + $0x8] sm:$0xf]
        %v1859 = vld [vmem:[%s878 + $0xc] sm:$0xf]
        %v1860 = vld [vmem:[%s878 + $0x10] sm:$0xf]
        %v1861 = vld [vmem:[%s878 + $0x14] sm:$0xf]
        %v1862 = vld [vmem:[%s878 + $0x18] sm:$0xf]
        %v1863 = vld [vmem:[%s878 + $0x1c] sm:$0xf]
        %v1864 = vld [vmem:[%s878 + $0x20] sm:$0xf]
        %v1865 = vld [vmem:[%s878 + $0x24] sm:$0xf]
        %v1866 = vld [vmem:[%s878 + $0x28] sm:$0xf]
        %v1867 = vld [vmem:[%s878 + $0x2c] sm:$0xf]
        %v1868 = vld [vmem:[%s878 + $0x30] sm:$0xf]
        %v1869 = vld [vmem:[%s878 + $0x34] sm:$0xf]
        %v1870 = vld [vmem:[%s878 + $0x38] sm:$0xf]
        %v1871 = vld [vmem:[%s878 + $0x3c] sm:$0xf]
        %v1872 = vld [vmem:[%s1081] sm:$0x1]
        %v1873 = vpack.c.bf16 %v1853, %v1852
        %v1874 = vpack.c.bf16 %v1855, %v1854
        %v1876 = vlaneseq
        %v1877 = vshrl.u32 %v1876, 7
        %v1878 = vsub.s32 0, %v1877
        %v1879 = vrot.slane %v1872, %v1878
        %v1897 = vunpack.c.l.b16 %v1856
        %v1898 = vunpack.c.l.b16 %v1857
        %v1899 = vunpack.c.l.b16 %v1858
        %v1900 = vunpack.c.l.b16 %v1859
        %v1901 = vunpack.c.l.b16 %v1860
        %v1902 = vunpack.c.l.b16 %v1861
        %v1903 = vunpack.c.l.b16 %v1862
        %v1904 = vunpack.c.l.b16 %v1863
        %v1905 = vunpack.c.l.b16 %v1864
        %v1906 = vunpack.c.l.b16 %v1865
        %v1907 = vunpack.c.l.b16 %v1866
        %v1908 = vunpack.c.l.b16 %v1867
        %v1909 = vunpack.c.l.b16 %v1868
        %v1910 = vunpack.c.l.b16 %v1869
        %v1911 = vunpack.c.l.b16 %v1870
        %v1912 = vunpack.c.l.b16 %v1871
        %v1913 = vpack.c.b16 %v1898, %v1897
        %v1914 = vpack.c.b16 %v1900, %v1899
        %v1915 = vpack.c.b16 %v1902, %v1901
        %v1916 = vpack.c.b16 %v1904, %v1903
        %v1917 = vpack.c.b16 %v1906, %v1905
        %v1918 = vpack.c.b16 %v1908, %v1907
        %v1919 = vpack.c.b16 %v1910, %v1909
        %v1920 = vpack.c.b16 %v1912, %v1911
        %1929 = vmatprep.subr.bf16.mxu0 0
        %1930 = vmatpush1.bf16.msra.mxu0 %v1913
        %1931 = vmatprep.subr.bf16.mxu0 0
        %1932 = vmatpush1.bf16.msra.mxu0 %v1914
        %1933 = vmatprep.subr.bf16.mxu0 0
        %1934 = vmatpush1.bf16.msra.mxu0 %v1915
        %1935 = vmatprep.subr.bf16.mxu0 0
        %1936 = vmatpush1.bf16.msra.mxu0 %v1916
        %1937 = vmatprep.subr.bf16.mxu0 0
        %1938 = vmatpush1.bf16.msra.mxu0 %v1917
        %1939 = vmatprep.subr.bf16.mxu0 0
        %1940 = vmatpush1.bf16.msra.mxu0 %v1918
        %1941 = vmatprep.subr.bf16.mxu0 0
        %1942 = vmatpush1.bf16.msra.mxu0 %v1919
        %1943 = vmatprep.subr.bf16.mxu0 0
        %1944 = vmatpush1.bf16.msra.mxu0 %v1920
        %1945 = vmatprep.subr.bf16.mxu0 0
        %1946 = vmatpush1.bf16.msra.mxu0 0
        %1947 = vmatprep.subr.bf16.mxu0 0
        %1948 = vmatpush1.bf16.msra.mxu0 0
        %1949 = vmatprep.subr.bf16.mxu0 0
        %1950 = vmatpush1.bf16.msra.mxu0 0
        %1951 = vmatprep.subr.bf16.mxu0 0
        %1952 = vmatpush1.bf16.msra.mxu0 0
        %1953 = vmatprep.subr.bf16.mxu0 0
        %1954 = vmatpush1.bf16.msra.mxu0 0
        %1955 = vmatprep.subr.bf16.mxu0 0
        %1956 = vmatpush1.bf16.msra.mxu0 0
        %1957 = vmatprep.subr.bf16.mxu0 0
        %1958 = vmatpush1.bf16.msra.mxu0 0
        %1959 = vmatprep.subr.bf16.mxu0 0
        %1960 = vmatpush1.bf16.msra.mxu0 0
        %1961 = vmatprep.mubr.bf16.mxu0 0
        %1962 = vmatmul.mubr.bf16.gmra.mrb[0].mxu0 %v1873
        %v1963 = vpop.f32.mrb[0].mxu0
        %v1964 = vadd.f32 %v1879, %v1963
        %v1965 = vpop.f32.mrb[0].mxu0
        %v1966 = vpop.f32.mrb[0].mxu0
        %v1967 = vadd.f32 %v1879, %v1966
        %v1968 = vpop.f32.mrb[0].mxu0
        %1969 = vmatprep.mubr.bf16.mxu0 0
        %1970 = vmatmul.mubr.bf16.gmra.mrb[0].mxu0 %v1874
        %v1971 = vpop.f32.mrb[0].mxu0
        %v1972 = vadd.f32 %v1879, %v1971
        %v1973 = vpop.f32.mrb[0].mxu0
        %v1974 = vpop.f32.mrb[0].mxu0
        %v1975 = vadd.f32 %v1879, %v1974
        %v1976 = vpop.f32.mrb[0].mxu0
        %1977 = vdwg.mxu0
        %v1978 = vadd.f32 %v1964, %v1183
        %v1979 = vadd.f32 %v1967, %v1184
        %v1980 = vadd.f32 %v1972, %v1185
        %v1981 = vadd.f32 %v1975, %v1186
        %v1982 = vld [vmem:[%s1085] sm:$0x1]
        %v1983 = vld [vmem:[%s1089] sm:$0x1]
        %1984 = vadd.xlane.f32.xlu0 %v1978
        %v1985 = vpop.xlane.xlu0 %1984
        %1986 = vadd.xlane.f32.xlu0 %v1979
        %v1987 = vpop.xlane.xlu0 %1986
        %1988 = vadd.xlane.f32.xlu0 %v1980
        %v1989 = vpop.xlane.xlu0 %1988
        %1990 = vadd.xlane.f32.xlu0 %v1981
        %v1991 = vpop.xlane.xlu0 %1990
        %v1992 = vmul.f32 %v1985, %v1130
        %v1993 = vmul.f32 %v1987, %v1130
        %v1994 = vmul.f32 %v1989, %v1130
        %v1995 = vmul.f32 %v1991, %v1130
        %v1996 = vsub.f32 %v1978, %v1992
        %v1997 = vsub.f32 %v1979, %v1993
        %v1998 = vsub.f32 %v1980, %v1994
        %v1999 = vsub.f32 %v1981, %v1995
        %v2000 = vmul.f32 %v1996, %v1996
        %v2001 = vmul.f32 %v1997, %v1997
        %v2002 = vmul.f32 %v1998, %v1998
        %v2003 = vmul.f32 %v1999, %v1999
        %2004 = vadd.xlane.f32.xlu0 %v2000
        %v2005 = vpop.xlane.xlu0 %2004
        %2006 = vadd.xlane.f32.xlu0 %v2001
        %v2007 = vpop.xlane.xlu0 %2006
        %2008 = vadd.xlane.f32.xlu0 %v2002
        %v2009 = vpop.xlane.xlu0 %2008
        %2010 = vadd.xlane.f32.xlu0 %v2003
        %v2011 = vpop.xlane.xlu0 %2010
        %v2012 = vmul.f32 %v2005, %v1130
        %v2013 = vmul.f32 %v2007, %v1130
        %v2014 = vmul.f32 %v2009, %v1130
        %v2015 = vmul.f32 %v2011, %v1130
        %v2016 = vadd.f32 %v2012, 1e-12
        %v2017 = vadd.f32 %v2013, 1e-12
        %v2018 = vadd.f32 %v2014, 1e-12
        %v2019 = vadd.f32 %v2015, 1e-12
        %v2020 = vrsqrt.pop %v2016
        %v2021 = vrsqrt.pop %v2017
        %v2022 = vrsqrt.pop %v2018
        %v2023 = vrsqrt.pop %v2019
        %v2024 = vmul.f32 %v1996, %v2020
        %v2025 = vmul.f32 %v1997, %v2021
        %v2026 = vmul.f32 %v1998, %v2022
        %v2027 = vmul.f32 %v1999, %v2023
        %v2029 = vlaneseq
        %v2030 = vshrl.u32 %v2029, 7
        %v2031 = vsub.s32 0, %v2030
        %v2032 = vrot.slane %v1982, %v2031
        %v2034 = vmul.f32 %v2024, %v2032
        %v2035 = vmul.f32 %v2025, %v2032
        %v2036 = vmul.f32 %v2026, %v2032
        %v2037 = vmul.f32 %v2027, %v2032
        %v2039 = vlaneseq
        %v2040 = vshrl.u32 %v2039, 7
        %v2041 = vsub.s32 0, %v2040
        %v2042 = vrot.slane %v1983, %v2041
        %v2044 = vadd.f32 %v2034, %v2042
        %v2045 = vadd.f32 %v2035, %v2042
        %v2046 = vadd.f32 %v2036, %v2042
        %v2047 = vadd.f32 %v2037, %v2042
        %v2048 = vld [vmem:[%s1094] sm:$0xff]
        %v2049 = vld [vmem:[%s1094 + $0x8] sm:$0xff]
        %v2050 = vld [vmem:[%s1094 + $0x10] sm:$0xff]
        %v2051 = vld [vmem:[%s1094 + $0x18] sm:$0xff]
        %v2052 = vld [vmem:[%s1094 + $0x20] sm:$0xff]
        %v2053 = vld [vmem:[%s1094 + $0x28] sm:$0xff]
        %v2054 = vld [vmem:[%s1094 + $0x30] sm:$0xff]
        %v2055 = vld [vmem:[%s1094 + $0x38] sm:$0xff]
        %v2056 = vld [vmem:[%s1094 + $0x40] sm:$0xff]
        %v2057 = vld [vmem:[%s1094 + $0x48] sm:$0xff]
        %v2058 = vld [vmem:[%s1094 + $0x50] sm:$0xff]
        %v2059 = vld [vmem:[%s1094 + $0x58] sm:$0xff]
        %v2060 = vld [vmem:[%s1094 + $0x60] sm:$0xff]
        %v2061 = vld [vmem:[%s1094 + $0x68] sm:$0xff]
        %v2062 = vld [vmem:[%s1094 + $0x70] sm:$0xff]
        %v2063 = vld [vmem:[%s1094 + $0x78] sm:$0xff]
        %v2064 = vld [vmem:[%s1098] sm:$0x3]
        %v2065 = vpack.c.bf16 %v2045, %v2044
        %v2066 = vpack.c.bf16 %v2047, %v2046
        %v2068 = vlaneseq
        %v2069 = vshrl.u32 %v2068, 7
        %v2070 = vsub.s32 0, %v2069
        %v2071 = vrot.slane %v2064, %v2070
        %v2072 = vlaneseq
        %v2073 = vshrl.u32 %v2072, 7
        %v2074 = vsub.s32 1, %v2073
        %v2075 = vrot.slane %v2064, %v2074
        %v2094 = vunpack.c.l.b16 %v2048
        %v2095 = vunpack.c.h.b16 %v2048
        %v2096 = vunpack.c.l.b16 %v2049
        %v2097 = vunpack.c.h.b16 %v2049
        %v2098 = vunpack.c.l.b16 %v2050
        %v2099 = vunpack.c.h.b16 %v2050
        %v2100 = vunpack.c.l.b16 %v2051
        %v2101 = vunpack.c.h.b16 %v2051
        %v2102 = vunpack.c.l.b16 %v2052
        %v2103 = vunpack.c.h.b16 %v2052
        %v2104 = vunpack.c.l.b16 %v2053
        %v2105 = vunpack.c.h.b16 %v2053
        %v2106 = vunpack.c.l.b16 %v2054
        %v2107 = vunpack.c.h.b16 %v2054
        %v2108 = vunpack.c.l.b16 %v2055
        %v2109 = vunpack.c.h.b16 %v2055
        %v2110 = vunpack.c.l.b16 %v2056
        %v2111 = vunpack.c.h.b16 %v2056
        %v2112 = vunpack.c.l.b16 %v2057
        %v2113 = vunpack.c.h.b16 %v2057
        %v2114 = vunpack.c.l.b16 %v2058
        %v2115 = vunpack.c.h.b16 %v2058
        %v2116 = vunpack.c.l.b16 %v2059
        %v2117 = vunpack.c.h.b16 %v2059
        %v2118 = vunpack.c.l.b16 %v2060
        %v2119 = vunpack.c.h.b16 %v2060
        %v2120 = vunpack.c.l.b16 %v2061
        %v2121 = vunpack.c.h.b16 %v2061
        %v2122 = vunpack.c.l.b16 %v2062
        %v2123 = vunpack.c.h.b16 %v2062
        %v2124 = vunpack.c.l.b16 %v2063
        %v2125 = vunpack.c.h.b16 %v2063
        %v2126 = vpack.c.b16 %v2096, %v2094
        %v2127 = vpack.c.b16 %v2097, %v2095
        %v2128 = vpack.c.b16 %v2100, %v2098
        %v2129 = vpack.c.b16 %v2101, %v2099
        %v2130 = vpack.c.b16 %v2104, %v2102
        %v2131 = vpack.c.b16 %v2105, %v2103
        %v2132 = vpack.c.b16 %v2108, %v2106
        %v2133 = vpack.c.b16 %v2109, %v2107
        %v2134 = vpack.c.b16 %v2112, %v2110
        %v2135 = vpack.c.b16 %v2113, %v2111
        %v2136 = vpack.c.b16 %v2116, %v2114
        %v2137 = vpack.c.b16 %v2117, %v2115
        %v2138 = vpack.c.b16 %v2120, %v2118
        %v2139 = vpack.c.b16 %v2121, %v2119
        %v2140 = vpack.c.b16 %v2124, %v2122
        %v2141 = vpack.c.b16 %v2125, %v2123
        %2158 = vmatprep.subr.bf16.mxu0 %v2127
        %2159 = vmatpush1.bf16.msra.mxu0 %v2126
        %2160 = vmatprep.subr.bf16.mxu0 %v2129
        %2161 = vmatpush1.bf16.msra.mxu0 %v2128
        %2162 = vmatprep.subr.bf16.mxu0 %v2131
        %2163 = vmatpush1.bf16.msra.mxu0 %v2130
        %2164 = vmatprep.subr.bf16.mxu0 %v2133
        %2165 = vmatpush1.bf16.msra.mxu0 %v2132
        %2166 = vmatprep.subr.bf16.mxu0 %v2135
        %2167 = vmatpush1.bf16.msra.mxu0 %v2134
        %2168 = vmatprep.subr.bf16.mxu0 %v2137
        %2169 = vmatpush1.bf16.msra.mxu0 %v2136
        %2170 = vmatprep.subr.bf16.mxu0 %v2139
        %2171 = vmatpush1.bf16.msra.mxu0 %v2138
        %2172 = vmatprep.subr.bf16.mxu0 %v2141
        %2173 = vmatpush1.bf16.msra.mxu0 %v2140
        %2174 = vmatprep.subr.bf16.mxu0 0
        %2175 = vmatpush1.bf16.msra.mxu0 0
        %2176 = vmatprep.subr.bf16.mxu0 0
        %2177 = vmatpush1.bf16.msra.mxu0 0
        %2178 = vmatprep.subr.bf16.mxu0 0
        %2179 = vmatpush1.bf16.msra.mxu0 0
        %2180 = vmatprep.subr.bf16.mxu0 0
        %2181 = vmatpush1.bf16.msra.mxu0 0
        %2182 = vmatprep.subr.bf16.mxu0 0
        %2183 = vmatpush1.bf16.msra.mxu0 0
        %2184 = vmatprep.subr.bf16.mxu0 0
        %2185 = vmatpush1.bf16.msra.mxu0 0
        %2186 = vmatprep.subr.bf16.mxu0 0
        %2187 = vmatpush1.bf16.msra.mxu0 0
        %2188 = vmatprep.subr.bf16.mxu0 0
        %2189 = vmatpush1.bf16.msra.mxu0 0
        %2190 = vmatprep.mubr.bf16.mxu0 0
        %2191 = vmatmul.mubr.bf16.gmra.mrb[0].mxu0 %v2065
        %v2192 = vpop.f32.mrb[0].mxu0
        %v2193 = vadd.f32 %v2071, %v2192
        %v2194 = vpop.f32.mrb[0].mxu0
        %v2195 = vadd.f32 %v2075, %v2194
        %v2196 = vpop.f32.mrb[0].mxu0
        %v2197 = vadd.f32 %v2071, %v2196
        %v2198 = vpop.f32.mrb[0].mxu0
        %v2199 = vadd.f32 %v2075, %v2198
        %2200 = vmatprep.mubr.bf16.mxu0 0
        %2201 = vmatmul.mubr.bf16.gmra.mrb[0].mxu0 %v2066
        %v2202 = vpop.f32.mrb[0].mxu0
        %v2203 = vadd.f32 %v2071, %v2202
        %v2204 = vpop.f32.mrb[0].mxu0
        %v2205 = vadd.f32 %v2075, %v2204
        %v2206 = vpop.f32.mrb[0].mxu0
        %v2207 = vadd.f32 %v2071, %v2206
        %v2208 = vpop.f32.mrb[0].mxu0
        %v2209 = vadd.f32 %v2075, %v2208
        %2210 = vdwg.mxu0
        %v2211 = vmul.f32 %v2193, 0.5
        %v2212 = vmul.f32 %v2195, 0.5
        %v2213 = vmul.f32 %v2197, 0.5
        %v2214 = vmul.f32 %v2199, 0.5
        %v2215 = vmul.f32 %v2203, 0.5
        %v2216 = vmul.f32 %v2205, 0.5
        %v2217 = vmul.f32 %v2207, 0.5
        %v2218 = vmul.f32 %v2209, 0.5
        %v2219 = vmul.f32 %v2193, 0.044715
        %v2220 = vmul.f32 %v2195, 0.044715
        %v2221 = vmul.f32 %v2197, 0.044715
        %v2222 = vmul.f32 %v2199, 0.044715
        %v2223 = vmul.f32 %v2203, 0.044715
        %v2224 = vmul.f32 %v2205, 0.044715
        %v2225 = vmul.f32 %v2207, 0.044715
        %v2226 = vmul.f32 %v2209, 0.044715
        %v2227 = vmul.f32 %v2219, %v2193
        %v2228 = vmul.f32 %v2220, %v2195
        %v2229 = vmul.f32 %v2221, %v2197
        %v2230 = vmul.f32 %v2222, %v2199
        %v2231 = vmul.f32 %v2223, %v2203
        %v2232 = vmul.f32 %v2224, %v2205
        %v2233 = vmul.f32 %v2225, %v2207
        %v2234 = vmul.f32 %v2226, %v2209
        %v2235 = vmul.f32 %v2227, %v2193
        %v2236 = vmul.f32 %v2228, %v2195
        %v2237 = vmul.f32 %v2229, %v2197
        %v2238 = vmul.f32 %v2230, %v2199
        %v2239 = vmul.f32 %v2231, %v2203
        %v2240 = vmul.f32 %v2232, %v2205
        %v2241 = vmul.f32 %v2233, %v2207
        %v2242 = vmul.f32 %v2234, %v2209
        %v2243 = vadd.f32 %v2193, %v2235
        %v2244 = vadd.f32 %v2195, %v2236
        %v2245 = vadd.f32 %v2197, %v2237
        %v2246 = vadd.f32 %v2199, %v2238
        %v2247 = vadd.f32 %v2203, %v2239
        %v2248 = vadd.f32 %v2205, %v2240
        %v2249 = vadd.f32 %v2207, %v2241
        %v2250 = vadd.f32 %v2209, %v2242
        %v2251 = vmul.f32 %v2243, 0.7978846
        %v2252 = vmul.f32 %v2244, 0.7978846
        %v2253 = vmul.f32 %v2245, 0.7978846
        %v2254 = vmul.f32 %v2246, 0.7978846
        %v2255 = vmul.f32 %v2247, 0.7978846
        %v2256 = vmul.f32 %v2248, 0.7978846
        %v2257 = vmul.f32 %v2249, 0.7978846
        %v2258 = vmul.f32 %v2250, 0.7978846
        %v2259 = vtanh.pop %v2251
        %v2260 = vtanh.pop %v2252
        %v2261 = vtanh.pop %v2253
        %v2262 = vtanh.pop %v2254
        %v2263 = vtanh.pop %v2255
        %v2264 = vtanh.pop %v2256
        %v2265 = vtanh.pop %v2257
        %v2266 = vtanh.pop %v2258
        %v2267 = vadd.f32 %v2259, 1.0
        %v2268 = vadd.f32 %v2260, 1.0
        %v2269 = vadd.f32 %v2261, 1.0
        %v2270 = vadd.f32 %v2262, 1.0
        %v2271 = vadd.f32 %v2263, 1.0
        %v2272 = vadd.f32 %v2264, 1.0
        %v2273 = vadd.f32 %v2265, 1.0
        %v2274 = vadd.f32 %v2266, 1.0
        %v2275 = vmul.f32 %v2211, %v2267
        %v2276 = vmul.f32 %v2212, %v2268
        %v2277 = vmul.f32 %v2213, %v2269
        %v2278 = vmul.f32 %v2214, %v2270
        %v2279 = vmul.f32 %v2215, %v2271
        %v2280 = vmul.f32 %v2216, %v2272
        %v2281 = vmul.f32 %v2217, %v2273
        %v2282 = vmul.f32 %v2218, %v2274
        %v2283 = vld [vmem:[%s887] sm:$0xf]
        %v2284 = vld [vmem:[%s887 + $0x4] sm:$0xf]
        %v2285 = vld [vmem:[%s887 + $0x8] sm:$0xf]
        %v2286 = vld [vmem:[%s887 + $0xc] sm:$0xf]
        %v2287 = vld [vmem:[%s887 + $0x10] sm:$0xf]
        %v2288 = vld [vmem:[%s887 + $0x14] sm:$0xf]
        %v2289 = vld [vmem:[%s887 + $0x18] sm:$0xf]
        %v2290 = vld [vmem:[%s887 + $0x1c] sm:$0xf]
        %v2291 = vld [vmem:[%s887 + $0x20] sm:$0xf]
        %v2292 = vld [vmem:[%s887 + $0x24] sm:$0xf]
        %v2293 = vld [vmem:[%s887 + $0x28] sm:$0xf]
        %v2294 = vld [vmem:[%s887 + $0x2c] sm:$0xf]
        %v2295 = vld [vmem:[%s887 + $0x30] sm:$0xf]
        %v2296 = vld [vmem:[%s887 + $0x34] sm:$0xf]
        %v2297 = vld [vmem:[%s887 + $0x38] sm:$0xf]
        %v2298 = vld [vmem:[%s887 + $0x3c] sm:$0xf]
        %v2299 = vld [vmem:[%s887 + $0x40] sm:$0xf]
        %v2300 = vld [vmem:[%s887 + $0x44] sm:$0xf]
        %v2301 = vld [vmem:[%s887 + $0x48] sm:$0xf]
        %v2302 = vld [vmem:[%s887 + $0x4c] sm:$0xf]
        %v2303 = vld [vmem:[%s887 + $0x50] sm:$0xf]
        %v2304 = vld [vmem:[%s887 + $0x54] sm:$0xf]
        %v2305 = vld [vmem:[%s887 + $0x58] sm:$0xf]
        %v2306 = vld [vmem:[%s887 + $0x5c] sm:$0xf]
        %v2307 = vld [vmem:[%s887 + $0x60] sm:$0xf]
        %v2308 = vld [vmem:[%s887 + $0x64] sm:$0xf]
        %v2309 = vld [vmem:[%s887 + $0x68] sm:$0xf]
        %v2310 = vld [vmem:[%s887 + $0x6c] sm:$0xf]
        %v2311 = vld [vmem:[%s887 + $0x70] sm:$0xf]
        %v2312 = vld [vmem:[%s887 + $0x74] sm:$0xf]
        %v2313 = vld [vmem:[%s887 + $0x78] sm:$0xf]
        %v2314 = vld [vmem:[%s887 + $0x7c] sm:$0xf]
        %v2315 = vld [vmem:[%s1102] sm:$0x1]
        %v2316 = vpack.c.bf16 %v2277, %v2275
        %v2317 = vpack.c.bf16 %v2278, %v2276
        %v2318 = vpack.c.bf16 %v2281, %v2279
        %v2319 = vpack.c.bf16 %v2282, %v2280
        %v2321 = vlaneseq
        %v2322 = vshrl.u32 %v2321, 7
        %v2323 = vsub.s32 0, %v2322
        %v2324 = vrot.slane %v2315, %v2323
        %v2358 = vunpack.c.l.b16 %v2283
        %v2359 = vunpack.c.l.b16 %v2284
        %v2360 = vunpack.c.l.b16 %v2285
        %v2361 = vunpack.c.l.b16 %v2286
        %v2362 = vunpack.c.l.b16 %v2287
        %v2363 = vunpack.c.l.b16 %v2288
        %v2364 = vunpack.c.l.b16 %v2289
        %v2365 = vunpack.c.l.b16 %v2290
        %v2366 = vunpack.c.l.b16 %v2291
        %v2367 = vunpack.c.l.b16 %v2292
        %v2368 = vunpack.c.l.b16 %v2293
        %v2369 = vunpack.c.l.b16 %v2294
        %v2370 = vunpack.c.l.b16 %v2295
        %v2371 = vunpack.c.l.b16 %v2296
        %v2372 = vunpack.c.l.b16 %v2297
        %v2373 = vunpack.c.l.b16 %v2298
        %v2374 = vunpack.c.l.b16 %v2299
        %v2375 = vunpack.c.l.b16 %v2300
        %v2376 = vunpack.c.l.b16 %v2301
        %v2377 = vunpack.c.l.b16 %v2302
        %v2378 = vunpack.c.l.b16 %v2303
        %v2379 = vunpack.c.l.b16 %v2304
        %v2380 = vunpack.c.l.b16 %v2305
        %v2381 = vunpack.c.l.b16 %v2306
        %v2382 = vunpack.c.l.b16 %v2307
        %v2383 = vunpack.c.l.b16 %v2308
        %v2384 = vunpack.c.l.b16 %v2309
        %v2385 = vunpack.c.l.b16 %v2310
        %v2386 = vunpack.c.l.b16 %v2311
        %v2387 = vunpack.c.l.b16 %v2312
        %v2388 = vunpack.c.l.b16 %v2313
        %v2389 = vunpack.c.l.b16 %v2314
        %v2390 = vpack.c.b16 %v2359, %v2358
        %v2391 = vpack.c.b16 %v2361, %v2360
        %v2392 = vpack.c.b16 %v2363, %v2362
        %v2393 = vpack.c.b16 %v2365, %v2364
        %v2394 = vpack.c.b16 %v2367, %v2366
        %v2395 = vpack.c.b16 %v2369, %v2368
        %v2396 = vpack.c.b16 %v2371, %v2370
        %v2397 = vpack.c.b16 %v2373, %v2372
        %v2398 = vpack.c.b16 %v2375, %v2374
        %v2399 = vpack.c.b16 %v2377, %v2376
        %v2400 = vpack.c.b16 %v2379, %v2378
        %v2401 = vpack.c.b16 %v2381, %v2380
        %v2402 = vpack.c.b16 %v2383, %v2382
        %v2403 = vpack.c.b16 %v2385, %v2384
        %v2404 = vpack.c.b16 %v2387, %v2386
        %v2405 = vpack.c.b16 %v2389, %v2388
        %2422 = vmatprep.subr.bf16.mxu0 0
        %2423 = vmatpush1.bf16.msra.mxu0 %v2390
        %2424 = vmatprep.subr.bf16.mxu0 0
        %2425 = vmatpush1.bf16.msra.mxu0 %v2391
        %2426 = vmatprep.subr.bf16.mxu0 0
        %2427 = vmatpush1.bf16.msra.mxu0 %v2392
        %2428 = vmatprep.subr.bf16.mxu0 0
        %2429 = vmatpush1.bf16.msra.mxu0 %v2393
        %2430 = vmatprep.subr.bf16.mxu0 0
        %2431 = vmatpush1.bf16.msra.mxu0 %v2394
        %2432 = vmatprep.subr.bf16.mxu0 0
        %2433 = vmatpush1.bf16.msra.mxu0 %v2395
        %2434 = vmatprep.subr.bf16.mxu0 0
        %2435 = vmatpush1.bf16.msra.mxu0 %v2396
        %2436 = vmatprep.subr.bf16.mxu0 0
        %2437 = vmatpush1.bf16.msra.mxu0 %v2397
        %2438 = vmatprep.subr.bf16.mxu0 0
        %2439 = vmatpush1.bf16.msra.mxu0 %v2398
        %2440 = vmatprep.subr.bf16.mxu0 0
        %2441 = vmatpush1.bf16.msra.mxu0 %v2399
        %2442 = vmatprep.subr.bf16.mxu0 0
        %2443 = vmatpush1.bf16.msra.mxu0 %v2400
        %2444 = vmatprep.subr.bf16.mxu0 0
        %2445 = vmatpush1.bf16.msra.mxu0 %v2401
        %2446 = vmatprep.subr.bf16.mxu0 0
        %2447 = vmatpush1.bf16.msra.mxu0 %v2402
        %2448 = vmatprep.subr.bf16.mxu0 0
        %2449 = vmatpush1.bf16.msra.mxu0 %v2403
        %2450 = vmatprep.subr.bf16.mxu0 0
        %2451 = vmatpush1.bf16.msra.mxu0 %v2404
        %2452 = vmatprep.subr.bf16.mxu0 0
        %2453 = vmatpush1.bf16.msra.mxu0 %v2405
        %2454 = vmatprep.mubr.bf16.mxu0 %v2317
        %2455 = vmatmul.mubr.bf16.gmra.mrb[0].mxu0 %v2316
        %v2456 = vpop.f32.mrb[0].mxu0
        %v2457 = vadd.f32 %v2324, %v2456
        %v2458 = vpop.f32.mrb[0].mxu0
        %v2459 = vpop.f32.mrb[0].mxu0
        %v2460 = vadd.f32 %v2324, %v2459
        %v2461 = vpop.f32.mrb[0].mxu0
        %2462 = vmatprep.mubr.bf16.mxu0 %v2319
        %2463 = vmatmul.mubr.bf16.gmra.mrb[0].mxu0 %v2318
        %v2464 = vpop.f32.mrb[0].mxu0
        %v2465 = vadd.f32 %v2324, %v2464
        %v2466 = vpop.f32.mrb[0].mxu0
        %v2467 = vpop.f32.mrb[0].mxu0
        %v2468 = vadd.f32 %v2324, %v2467
        %v2469 = vpop.f32.mrb[0].mxu0
        %2470 = vdwg.mxu0
        %v2471 = vadd.f32 %v2457, %v2044
        %v2472 = vadd.f32 %v2460, %v2045
        %v2473 = vadd.f32 %v2465, %v2046
        %v2474 = vadd.f32 %v2468, %v2047
        %v2475 = vld [vmem:[%s896] sm:$0x1]
        %v2476 = vld [vmem:[%s905] sm:$0x1]
        %2477 = vadd.xlane.f32.xlu0 %v2471
        %v2478 = vpop.xlane.xlu0 %2477
        %2479 = vadd.xlane.f32.xlu0 %v2472
        %v2480 = vpop.xlane.xlu0 %2479
        %2481 = vadd.xlane.f32.xlu0 %v2473
        %v2482 = vpop.xlane.xlu0 %2481
        %2483 = vadd.xlane.f32.xlu0 %v2474
        %v2484 = vpop.xlane.xlu0 %2483
        %v2485 = vmul.f32 %v2478, %v1130
        %v2486 = vmul.f32 %v2480, %v1130
        %v2487 = vmul.f32 %v2482, %v1130
        %v2488 = vmul.f32 %v2484, %v1130
        %v2489 = vsub.f32 %v2471, %v2485
        %v2490 = vsub.f32 %v2472, %v2486
        %v2491 = vsub.f32 %v2473, %v2487
        %v2492 = vsub.f32 %v2474, %v2488
        %v2493 = vmul.f32 %v2489, %v2489
        %v2494 = vmul.f32 %v2490, %v2490
        %v2495 = vmul.f32 %v2491, %v2491
        %v2496 = vmul.f32 %v2492, %v2492
        %2497 = vadd.xlane.f32.xlu0 %v2493
        %v2498 = vpop.xlane.xlu0 %2497
        %2499 = vadd.xlane.f32.xlu0 %v2494
        %v2500 = vpop.xlane.xlu0 %2499
        %2501 = vadd.xlane.f32.xlu0 %v2495
        %v2502 = vpop.xlane.xlu0 %2501
        %2503 = vadd.xlane.f32.xlu0 %v2496
        %v2504 = vpop.xlane.xlu0 %2503
        %v2505 = vmul.f32 %v2498, %v1130
        %v2506 = vmul.f32 %v2500, %v1130
        %v2507 = vmul.f32 %v2502, %v1130
        %v2508 = vmul.f32 %v2504, %v1130
        %v2509 = vadd.f32 %v2505, 1e-12
        %v2510 = vadd.f32 %v2506, 1e-12
        %v2511 = vadd.f32 %v2507, 1e-12
        %v2512 = vadd.f32 %v2508, 1e-12
        %v2513 = vrsqrt.pop %v2509
        %v2514 = vrsqrt.pop %v2510
        %v2515 = vrsqrt.pop %v2511
        %v2516 = vrsqrt.pop %v2512
        %v2517 = vmul.f32 %v2489, %v2513
        %v2518 = vmul.f32 %v2490, %v2514
        %v2519 = vmul.f32 %v2491, %v2515
        %v2520 = vmul.f32 %v2492, %v2516
        %v2522 = vlaneseq
        %v2523 = vshrl.u32 %v2522, 7
        %v2524 = vsub.s32 0, %v2523
        %v2525 = vrot.slane %v2475, %v2524
        %v2527 = vmul.f32 %v2517, %v2525
        %v2528 = vmul.f32 %v2518, %v2525
        %v2529 = vmul.f32 %v2519, %v2525
        %v2530 = vmul.f32 %v2520, %v2525
        %v2532 = vlaneseq
        %v2533 = vshrl.u32 %v2532, 7
        %v2534 = vsub.s32 0, %v2533
        %v2535 = vrot.slane %v2476, %v2534
        %v2537 = vadd.f32 %v2527, %v2535
        %v2538 = vadd.f32 %v2528, %v2535
        %v2539 = vadd.f32 %v2529, %v2535
        %v2540 = vadd.f32 %v2530, %v2535
        %s2541 = scalar_lea.vmem %s1077, 192
        %v2542 = vld [vmem:[%s2541] sm:$0xff]
        %v2543 = vld [vmem:[%s2541 + $0x8] sm:$0xf]
        %v2544 = vld [vmem:[%s2541 + $0xc] sm:$0xff]
        %v2545 = vld [vmem:[%s2541 + $0x14] sm:$0xf]
        %v2546 = vld [vmem:[%s2541 + $0x18] sm:$0xff]
        %v2547 = vld [vmem:[%s2541 + $0x20] sm:$0xf]
        %v2548 = vld [vmem:[%s2541 + $0x24] sm:$0xff]
        %v2549 = vld [vmem:[%s2541 + $0x2c] sm:$0xf]
        %v2550 = vld [vmem:[%s2541 + $0x30] sm:$0xff]
        %v2551 = vld [vmem:[%s2541 + $0x38] sm:$0xf]
        %v2552 = vld [vmem:[%s2541 + $0x3c] sm:$0xff]
        %v2553 = vld [vmem:[%s2541 + $0x44] sm:$0xf]
        %v2554 = vld [vmem:[%s2541 + $0x48] sm:$0xff]
        %v2555 = vld [vmem:[%s2541 + $0x50] sm:$0xf]
        %v2556 = vld [vmem:[%s2541 + $0x54] sm:$0xff]
        %v2557 = vld [vmem:[%s2541 + $0x5c] sm:$0xf]
        %v2558 = vld [vmem:[%s2541 + $0x60] sm:$0xff]
        %v2559 = vld [vmem:[%s2541 + $0x68] sm:$0xf]
        %v2560 = vld [vmem:[%s2541 + $0x6c] sm:$0xff]
        %v2561 = vld [vmem:[%s2541 + $0x74] sm:$0xf]
        %v2562 = vld [vmem:[%s2541 + $0x78] sm:$0xff]
        %v2563 = vld [vmem:[%s2541 + $0x80] sm:$0xf]
        %v2564 = vld [vmem:[%s2541 + $0x84] sm:$0xff]
        %v2565 = vld [vmem:[%s2541 + $0x8c] sm:$0xf]
        %v2566 = vld [vmem:[%s2541 + $0x90] sm:$0xff]
        %v2567 = vld [vmem:[%s2541 + $0x98] sm:$0xf]
        %v2568 = vld [vmem:[%s2541 + $0x9c] sm:$0xff]
        %v2569 = vld [vmem:[%s2541 + $0xa4] sm:$0xf]
        %v2570 = vld [vmem:[%s2541 + $0xa8] sm:$0xff]
        %v2571 = vld [vmem:[%s2541 + $0xb0] sm:$0xf]
        %v2572 = vld [vmem:[%s2541 + $0xb4] sm:$0xff]
        %v2573 = vld [vmem:[%s2541 + $0xbc] sm:$0xf]
        %s2574 = scalar_lea.vmem %s869, 3 [#allocation3]
        %v2575 = vld [vmem:[%s2574] sm:$0x7]
        %v2576 = vpack.c.bf16 %v2538, %v2537
        %v2577 = vpack.c.bf16 %v2540, %v2539
        %v2579 = vlaneseq
        %v2580 = vshrl.u32 %v2579, 7
        %v2581 = vsub.s32 0, %v2580
        %v2582 = vrot.slane %v2575, %v2581
        %v2583 = vlaneseq
        %v2584 = vshrl.u32 %v2583, 7
        %v2585 = vsub.s32 1, %v2584
        %v2586 = vrot.slane %v2575, %v2585
        %v2587 = vlaneseq
        %v2588 = vshrl.u32 %v2587, 7
        %v2589 = vsub.s32 2, %v2588
        %v2590 = vrot.slane %v2575, %v2589
        %v2626 = vunpack.c.l.b16 %v2542
        %v2627 = vunpack.c.h.b16 %v2542
        %v2628 = vunpack.c.l.b16 %v2543
        %v2629 = vunpack.c.l.b16 %v2544
        %v2630 = vunpack.c.h.b16 %v2544
        %v2631 = vunpack.c.l.b16 %v2545
        %v2632 = vunpack.c.l.b16 %v2546
        %v2633 = vunpack.c.h.b16 %v2546
        %v2634 = vunpack.c.l.b16 %v2547
        %v2635 = vunpack.c.l.b16 %v2548
        %v2636 = vunpack.c.h.b16 %v2548
        %v2637 = vunpack.c.l.b16 %v2549
        %v2638 = vunpack.c.l.b16 %v2550
        %v2639 = vunpack.c.h.b16 %v2550
        %v2640 = vunpack.c.l.b16 %v2551
        %v2641 = vunpack.c.l.b16 %v2552
        %v2642 = vunpack.c.h.b16 %v2552
        %v2643 = vunpack.c.l.b16 %v2553
        %v2644 = vunpack.c.l.b16 %v2554
        %v2645 = vunpack.c.h.b16 %v2554
        %v2646 = vunpack.c.l.b16 %v2555
        %v2647 = vunpack.c.l.b16 %v2556
        %v2648 = vunpack.c.h.b16 %v2556
        %v2649 = vunpack.c.l.b16 %v2557
        %v2650 = vunpack.c.l.b16 %v2558
        %v2651 = vunpack.c.h.b16 %v2558
        %v2652 = vunpack.c.l.b16 %v2559
        %v2653 = vunpack.c.l.b16 %v2560
        %v2654 = vunpack.c.h.b16 %v2560
        %v2655 = vunpack.c.l.b16 %v2561
        %v2656 = vunpack.c.l.b16 %v2562
        %v2657 = vunpack.c.h.b16 %v2562
        %v2658 = vunpack.c.l.b16 %v2563
        %v2659 = vunpack.c.l.b16 %v2564
        %v2660 = vunpack.c.h.b16 %v2564
        %v2661 = vunpack.c.l.b16 %v2565
        %v2662 = vunpack.c.l.b16 %v2566
        %v2663 = vunpack.c.h.b16 %v2566
        %v2664 = vunpack.c.l.b16 %v2567
        %v2665 = vunpack.c.l.b16 %v2568
        %v2666 = vunpack.c.h.b16 %v2568
        %v2667 = vunpack.c.l.b16 %v2569
        %v2668 = vunpack.c.l.b16 %v2570
        %v2669 = vunpack.c.h.b16 %v2570
        %v2670 = vunpack.c.l.b16 %v2571
        %v2671 = vunpack.c.l.b16 %v2572
        %v2672 = vunpack.c.h.b16 %v2572
        %v2673 = vunpack.c.l.b16 %v2573
        %v2674 = vpack.c.b16 %v2629, %v2626
        %v2675 = vpack.c.b16 %v2630, %v2627
        %v2676 = vpack.c.b16 %v2631, %v2628
        %v2677 = vpack.c.b16 %v2635, %v2632
        %v2678 = vpack.c.b16 %v2636, %v2633
        %v2679 = vpack.c.b16 %v2637, %v2634
        %v2680 = vpack.c.b16 %v2641, %v2638
        %v2681 = vpack.c.b16 %v2642, %v2639
        %v2682 = vpack.c.b16 %v2643, %v2640
        %v2683 = vpack.c.b16 %v2647, %v2644
        %v2684 = vpack.c.b16 %v2648, %v2645
        %v2685 = vpack.c.b16 %v2649, %v2646
        %v2686 = vpack.c.b16 %v2653, %v2650
        %v2687 = vpack.c.b16 %v2654, %v2651
        %v2688 = vpack.c.b16 %v2655, %v2652
        %v2689 = vpack.c.b16 %v2659, %v2656
        %v2690 = vpack.c.b16 %v2660, %v2657
        %v2691 = vpack.c.b16 %v2661, %v2658
        %v2692 = vpack.c.b16 %v2665, %v2662
        %v2693 = vpack.c.b16 %v2666, %v2663
        %v2694 = vpack.c.b16 %v2667, %v2664
        %v2695 = vpack.c.b16 %v2671, %v2668
        %v2696 = vpack.c.b16 %v2672, %v2669
        %v2697 = vpack.c.b16 %v2673, %v2670
        %2722 = vmatprep.subr.bf16.mxu0 %v2675
        %2723 = vmatpush1.bf16.msra.mxu0 %v2674
        %2724 = vmatprep.subr.bf16.mxu0 %v2678
        %2725 = vmatpush1.bf16.msra.mxu0 %v2677
        %2726 = vmatprep.subr.bf16.mxu0 %v2681
        %2727 = vmatpush1.bf16.msra.mxu0 %v2680
        %2728 = vmatprep.subr.bf16.mxu0 %v2684
        %2729 = vmatpush1.bf16.msra.mxu0 %v2683
        %2730 = vmatprep.subr.bf16.mxu0 %v2687
        %2731 = vmatpush1.bf16.msra.mxu0 %v2686
        %2732 = vmatprep.subr.bf16.mxu0 %v2690
        %2733 = vmatpush1.bf16.msra.mxu0 %v2689
        %2734 = vmatprep.subr.bf16.mxu0 %v2693
        %2735 = vmatpush1.bf16.msra.mxu0 %v2692
        %2736 = vmatprep.subr.bf16.mxu0 %v2696
        %2737 = vmatpush1.bf16.msra.mxu0 %v2695
        %2738 = vmatprep.subr.bf16.mxu0 0
        %2739 = vmatpush1.bf16.msra.mxu0 0
        %2740 = vmatprep.subr.bf16.mxu0 0
        %2741 = vmatpush1.bf16.msra.mxu0 0
        %2742 = vmatprep.subr.bf16.mxu0 0
        %2743 = vmatpush1.bf16.msra.mxu0 0
        %2744 = vmatprep.subr.bf16.mxu0 0
        %2745 = vmatpush1.bf16.msra.mxu0 0
        %2746 = vmatprep.subr.bf16.mxu0 0
        %2747 = vmatpush1.bf16.msra.mxu0 0
        %2748 = vmatprep.subr.bf16.mxu0 0
        %2749 = vmatpush1.bf16.msra.mxu0 0
        %2750 = vmatprep.subr.bf16.mxu0 0
        %2751 = vmatpush1.bf16.msra.mxu0 0
        %2752 = vmatprep.subr.bf16.mxu0 0
        %2753 = vmatpush1.bf16.msra.mxu0 0
        %2754 = vmatprep.mubr.bf16.mxu0 0
        %2755 = vmatmul.mubr.bf16.gmra.mrb[0].mxu0 %v2576
        %v2756 = vpop.f32.mrb[0].mxu0
        %v2757 = vadd.f32 %v2582, %v2756
        %v2758 = vpop.f32.mrb[0].mxu0
        %v2759 = vadd.f32 %v2586, %v2758
        %v2760 = vpop.f32.mrb[0].mxu0
        %v2761 = vadd.f32 %v2582, %v2760
        %v2762 = vpop.f32.mrb[0].mxu0
        %v2763 = vadd.f32 %v2586, %v2762
        %2764 = vmatprep.mubr.bf16.mxu0 0
        %2765 = vmatmul.mubr.bf16.gmra.mrb[0].mxu0 %v2577
        %v2766 = vpop.f32.mrb[0].mxu0
        %v2767 = vadd.f32 %v2582, %v2766
        %v2768 = vpop.f32.mrb[0].mxu0
        %v2769 = vadd.f32 %v2586, %v2768
        %v2770 = vpop.f32.mrb[0].mxu0
        %v2771 = vadd.f32 %v2582, %v2770
        %v2772 = vpop.f32.mrb[0].mxu0
        %v2773 = vadd.f32 %v2586, %v2772
        %2774 = vdwg.mxu0
        %2775 = vmatprep.subr.bf16.mxu0 0
        %2776 = vmatpush1.bf16.msra.mxu0 %v2676
        %2777 = vmatprep.subr.bf16.mxu0 0
        %2778 = vmatpush1.bf16.msra.mxu0 %v2679
        %2779 = vmatprep.subr.bf16.mxu0 0
        %2780 = vmatpush1.bf16.msra.mxu0 %v2682
        %2781 = vmatprep.subr.bf16.mxu0 0
        %2782 = vmatpush1.bf16.msra.mxu0 %v2685
        %2783 = vmatprep.subr.bf16.mxu0 0
        %2784 = vmatpush1.bf16.msra.mxu0 %v2688
        %2785 = vmatprep.subr.bf16.mxu0 0
        %2786 = vmatpush1.bf16.msra.mxu0 %v2691
        %2787 = vmatprep.subr.bf16.mxu0 0
        %2788 = vmatpush1.bf16.msra.mxu0 %v2694
        %2789 = vmatprep.subr.bf16.mxu0 0
        %2790 = vmatpush1.bf16.msra.mxu0 %v2697
        %2791 = vmatprep.subr.bf16.mxu0 0
        %2792 = vmatpush1.bf16.msra.mxu0 0
        %2793 = vmatprep.subr.bf16.mxu0 0
        %2794 = vmatpush1.bf16.msra.mxu0 0
        %2795 = vmatprep.subr.bf16.mxu0 0
        %2796 = vmatpush1.bf16.msra.mxu0 0
        %2797 = vmatprep.subr.bf16.mxu0 0
        %2798 = vmatpush1.bf16.msra.mxu0 0
        %2799 = vmatprep.subr.bf16.mxu0 0
        %2800 = vmatpush1.bf16.msra.mxu0 0
        %2801 = vmatprep.subr.bf16.mxu0 0
        %2802 = vmatpush1.bf16.msra.mxu0 0
        %2803 = vmatprep.subr.bf16.mxu0 0
        %2804 = vmatpush1.bf16.msra.mxu0 0
        %2805 = vmatprep.subr.bf16.mxu0 0
        %2806 = vmatpush1.bf16.msra.mxu0 0
        %2807 = vmatprep.mubr.bf16.mxu0 0
        %2808 = vmatmul.mubr.bf16.gmra.mrb[0].mxu0 %v2576
        %v2809 = vpop.f32.mrb[0].mxu0
        %v2810 = vadd.f32 %v2590, %v2809
        %v2811 = vpop.f32.mrb[0].mxu0
        %v2812 = vpop.f32.mrb[0].mxu0
        %v2813 = vadd.f32 %v2590, %v2812
        %v2814 = vpop.f32.mrb[0].mxu0
        %2815 = vmatprep.mubr.bf16.mxu0 0
        %2816 = vmatmul.mubr.bf16.gmra.mrb[0].mxu0 %v2577
        %v2817 = vpop.f32.mrb[0].mxu0
        %v2818 = vadd.f32 %v2590, %v2817
        %v2819 = vpop.f32.mrb[0].mxu0
        %v2820 = vpop.f32.mrb[0].mxu0
        %v2821 = vadd.f32 %v2590, %v2820
        %v2822 = vpop.f32.mrb[0].mxu0
        %2823 = vdwg.mxu0
        %v2824 = vpack.c.bf16 %v2761, %v2757
        %v2825 = vpack.c.bf16 %v2771, %v2767
        %v2826 = vpack.c.bf16 %v2763, %v2759
        %v2827 = vpack.c.bf16 %v2773, %v2769
        %v2828 = vpack.c.bf16 %v2813, %v2810
        %v2829 = vpack.c.bf16 %v2821, %v2818
        %v2831 = vsel %vm1474, %v2824, 0
        %v2834 = vsel %vm1474, %v2825, 0
        %v2837 = vsel %vm1474, %v2826, 0
        %v2840 = vsel %vm1474, %v2827, 0
        %2842 = vmatprep.subr.bf16.mxu0 0
        %2843 = vmatpush1.bf16.xpose.msra.mxu0 %v2837
        %2844 = vmatprep.subr.bf16.mxu0 0
        %2845 = vmatpush1.bf16.xpose.msra.mxu0 %v2840
        %2846 = vmatprep.subr.bf16.mxu0 0
        %2847 = vmatpush1.bf16.xpose.msra.mxu0 0
        %2848 = vmatprep.subr.bf16.mxu0 0
        %2849 = vmatpush1.bf16.xpose.msra.mxu0 0
        %2850 = vmatprep.subr.bf16.mxu0 0
        %2851 = vmatpush1.bf16.xpose.msra.mxu0 0
        %2852 = vmatprep.subr.bf16.mxu0 0
        %2853 = vmatpush1.bf16.xpose.msra.mxu0 0
        %2854 = vmatprep.subr.bf16.mxu0 0
        %2855 = vmatpush1.bf16.xpose.msra.mxu0 0
        %2856 = vmatprep.subr.bf16.mxu0 0
        %2857 = vmatpush1.bf16.xpose.msra.mxu0 0
        %2858 = vmatprep.subr.bf16.mxu0 0
        %2859 = vmatpush1.bf16.xpose.msra.mxu0 0
        %2860 = vmatprep.subr.bf16.mxu0 0
        %2861 = vmatpush1.bf16.xpose.msra.mxu0 0
        %2862 = vmatprep.subr.bf16.mxu0 0
        %2863 = vmatpush1.bf16.xpose.msra.mxu0 0
        %2864 = vmatprep.subr.bf16.mxu0 0
        %2865 = vmatpush1.bf16.xpose.msra.mxu0 0
        %2866 = vmatprep.subr.bf16.mxu0 0
        %2867 = vmatpush1.bf16.xpose.msra.mxu0 0
        %2868 = vmatprep.subr.bf16.mxu0 0
        %2869 = vmatpush1.bf16.xpose.msra.mxu0 0
        %2870 = vmatprep.subr.bf16.mxu0 0
        %2871 = vmatpush1.bf16.xpose.msra.mxu0 0
        %2872 = vmatprep.subr.bf16.mxu0 0
        %2873 = vmatpush1.bf16.xpose.msra.mxu0 0
        %2874 = vmatprep.mubr.bf16.mxu0 0
        %2875 = vmatmul.mubr.bf16.gmra.mrb[0].mxu0 %v2831
        %v2876 = vpop.f32.mrb[0].mxu0
        %v2877 = vadd.f32 0.0, %v2876
        %v2878 = vpop.f32.mrb[0].mxu0
        %v2879 = vpop.f32.mrb[0].mxu0
        %v2880 = vadd.f32 0.0, %v2879
        %v2881 = vpop.f32.mrb[0].mxu0
        %2882 = vmatprep.mubr.bf16.mxu0 0
        %2883 = vmatmul.mubr.bf16.gmra.mrb[0].mxu0 %v2834
        %v2884 = vpop.f32.mrb[0].mxu0
        %v2885 = vadd.f32 0.0, %v2884
        %v2886 = vpop.f32.mrb[0].mxu0
        %v2887 = vpop.f32.mrb[0].mxu0
        %v2888 = vadd.f32 0.0, %v2887
        %v2889 = vpop.f32.mrb[0].mxu0
        %2890 = vdwg.mxu0
        %v2891 = vmul.f32 %v2877, 0.125
        %v2892 = vmul.f32 %v2880, 0.125
        %v2893 = vmul.f32 %v2885, 0.125
        %v2894 = vmul.f32 %v2888, 0.125
        %v2895 = vadd.f32 %v2891, %v1112
        %v2896 = vadd.f32 %v2892, %v1113
        %v2897 = vadd.f32 %v2893, %v1114
        %v2898 = vadd.f32 %v2894, %v1115
        %v2899 = vsel %vm1544, %v2895, -inf
        %2900 = vmax.xlane.f32.xlu0 %v2899
        %v2901 = vpop.xlane.xlu0 %2900
        %v2902 = vsel %vm1544, %v2896, -inf
        %2903 = vmax.xlane.f32.xlu0 %v2902
        %v2904 = vpop.xlane.xlu0 %2903
        %v2905 = vsel %vm1544, %v2897, -inf
        %2906 = vmax.xlane.f32.xlu0 %v2905
        %v2907 = vpop.xlane.xlu0 %2906
        %v2908 = vsel %vm1544, %v2898, -inf
        %2909 = vmax.xlane.f32.xlu0 %v2908
        %v2910 = vpop.xlane.xlu0 %2909
        %v2911 = vsub.f32 %v2895, %v2901
        %v2912 = vsub.f32 %v2896, %v2904
        %v2913 = vsub.f32 %v2897, %v2907
        %v2914 = vsub.f32 %v2898, %v2910
        %v2915 = vmul.f32 %v2911, 1.442695
        %v2916 = vpow.pop %v2915
        %v2917 = vmul.f32 %v2912, 1.442695
        %v2918 = vpow.pop %v2917
        %v2919 = vmul.f32 %v2913, 1.442695
        %v2920 = vpow.pop %v2919
        %v2921 = vmul.f32 %v2914, 1.442695
        %v2922 = vpow.pop %v2921
        %v2923 = vsel %vm1544, %v2916, 0.0
        %2924 = vadd.xlane.f32.xlu0 %v2923
        %v2925 = vpop.xlane.xlu0 %2924
        %v2926 = vsel %vm1544, %v2918, 0.0
        %2927 = vadd.xlane.f32.xlu0 %v2926
        %v2928 = vpop.xlane.xlu0 %2927
        %v2929 = vsel %vm1544, %v2920, 0.0
        %2930 = vadd.xlane.f32.xlu0 %v2929
        %v2931 = vpop.xlane.xlu0 %2930
        %v2932 = vsel %vm1544, %v2922, 0.0
        %2933 = vadd.xlane.f32.xlu0 %v2932
        %v2934 = vpop.xlane.xlu0 %2933
        %v2935 = vrcp.pop %v2925
        %v2936 = vrcp.pop %v2928
        %v2937 = vrcp.pop %v2931
        %v2938 = vrcp.pop %v2934
        %v2939 = vmul.f32 %v2916, %v2935
        %v2940 = vmul.f32 %v2918, %v2936
        %v2941 = vmul.f32 %v2920, %v2937
        %v2942 = vmul.f32 %v2922, %v2938
        %v2943 = vpack.c.bf16 %v2940, %v2939
        %v2944 = vpack.c.bf16 %v2942, %v2941
        %v2946 = vsel %vm1544, %v2943, 0
        %v2949 = vsel %vm1544, %v2944, 0
        %2951 = vmatprep.subr.bf16.mxu0 0
        %2952 = vmatpush1.bf16.msra.mxu0 %v2828
        %2953 = vmatprep.subr.bf16.mxu0 0
        %2954 = vmatpush1.bf16.msra.mxu0 %v2829
        %2955 = vmatprep.subr.bf16.mxu0 0
        %2956 = vmatpush1.bf16.msra.mxu0 0
        %2957 = vmatprep.subr.bf16.mxu0 0
        %2958 = vmatpush1.bf16.msra.mxu0 0
        %2959 = vmatprep.subr.bf16.mxu0 0
        %2960 = vmatpush1.bf16.msra.mxu0 0
        %2961 = vmatprep.subr.bf16.mxu0 0
        %2962 = vmatpush1.bf16.msra.mxu0 0
        %2963 = vmatprep.subr.bf16.mxu0 0
        %2964 = vmatpush1.bf16.msra.mxu0 0
        %2965 = vmatprep.subr.bf16.mxu0 0
        %2966 = vmatpush1.bf16.msra.mxu0 0
        %2967 = vmatprep.subr.bf16.mxu0 0
        %2968 = vmatpush1.bf16.msra.mxu0 0
        %2969 = vmatprep.subr.bf16.mxu0 0
        %2970 = vmatpush1.bf16.msra.mxu0 0
        %2971 = vmatprep.subr.bf16.mxu0 0
        %2972 = vmatpush1.bf16.msra.mxu0 0
        %2973 = vmatprep.subr.bf16.mxu0 0
        %2974 = vmatpush1.bf16.msra.mxu0 0
        %2975 = vmatprep.subr.bf16.mxu0 0
        %2976 = vmatpush1.bf16.msra.mxu0 0
        %2977 = vmatprep.subr.bf16.mxu0 0
        %2978 = vmatpush1.bf16.msra.mxu0 0
        %2979 = vmatprep.subr.bf16.mxu0 0
        %2980 = vmatpush1.bf16.msra.mxu0 0
        %2981 = vmatprep.subr.bf16.mxu0 0
        %2982 = vmatpush1.bf16.msra.mxu0 0
        %2983 = vmatprep.mubr.bf16.mxu0 0
        %2984 = vmatmul.mubr.bf16.gmra.mrb[0].mxu0 %v2946
        %v2985 = vpop.f32.mrb[0].mxu0
        %v2986 = vadd.f32 0.0, %v2985
        %v2987 = vpop.f32.mrb[0].mxu0
        %v2988 = vpop.f32.mrb[0].mxu0
        %v2989 = vadd.f32 0.0, %v2988
        %v2990 = vpop.f32.mrb[0].mxu0
        %2991 = vmatprep.mubr.bf16.mxu0 0
        %2992 = vmatmul.mubr.bf16.gmra.mrb[0].mxu0 %v2949
        %v2993 = vpop.f32.mrb[0].mxu0
        %v2994 = vadd.f32 0.0, %v2993
        %v2995 = vpop.f32.mrb[0].mxu0
        %v2996 = vpop.f32.mrb[0].mxu0
        %v2997 = vadd.f32 0.0, %v2996
        %v2998 = vpop.f32.mrb[0].mxu0
        %2999 = vdwg.mxu0
        %3002 = vrot.lane.b32.xlu0 %v2824, 64
        %v3003 = vpop.permute.xlu0 %3002
        %3004 = vrot.lane.b32.xlu0 %v2825, 64
        %v3005 = vpop.permute.xlu0 %3004
        %3008 = vrot.lane.b32.xlu0 %v2826, 64
        %v3009 = vpop.permute.xlu0 %3008
        %3010 = vrot.lane.b32.xlu0 %v2827, 64
        %v3011 = vpop.permute.xlu0 %3010
        %v3013 = vsel %vm1474, %v3003, 0
        %v3016 = vsel %vm1474, %v3005, 0
        %v3019 = vsel %vm1474, %v3009, 0
        %v3022 = vsel %vm1474, %v3011, 0
        %3024 = vmatprep.subr.bf16.mxu0 0
        %3025 = vmatpush1.bf16.xpose.msra.mxu0 %v3019
        %3026 = vmatprep.subr.bf16.mxu0 0
        %3027 = vmatpush1.bf16.xpose.msra.mxu0 %v3022
        %3028 = vmatprep.subr.bf16.mxu0 0
        %3029 = vmatpush1.bf16.xpose.msra.mxu0 0
        %3030 = vmatprep.subr.bf16.mxu0 0
        %3031 = vmatpush1.bf16.xpose.msra.mxu0 0
        %3032 = vmatprep.subr.bf16.mxu0 0
        %3033 = vmatpush1.bf16.xpose.msra.mxu0 0
        %3034 = vmatprep.subr.bf16.mxu0 0
        %3035 = vmatpush1.bf16.xpose.msra.mxu0 0
        %3036 = vmatprep.subr.bf16.mxu0 0
        %3037 = vmatpush1.bf16.xpose.msra.mxu0 0
        %3038 = vmatprep.subr.bf16.mxu0 0
        %3039 = vmatpush1.bf16.xpose.msra.mxu0 0
        %3040 = vmatprep.subr.bf16.mxu0 0
        %3041 = vmatpush1.bf16.xpose.msra.mxu0 0
        %3042 = vmatprep.subr.bf16.mxu0 0
        %3043 = vmatpush1.bf16.xpose.msra.mxu0 0
        %3044 = vmatprep.subr.bf16.mxu0 0
        %3045 = vmatpush1.bf16.xpose.msra.mxu0 0
        %3046 = vmatprep.subr.bf16.mxu0 0
        %3047 = vmatpush1.bf16.xpose.msra.mxu0 0
        %3048 = vmatprep.subr.bf16.mxu0 0
        %3049 = vmatpush1.bf16.xpose.msra.mxu0 0
        %3050 = vmatprep.subr.bf16.mxu0 0
        %3051 = vmatpush1.bf16.xpose.msra.mxu0 0
        %3052 = vmatprep.subr.bf16.mxu0 0
        %3053 = vmatpush1.bf16.xpose.msra.mxu0 0
        %3054 = vmatprep.subr.bf16.mxu0 0
        %3055 = vmatpush1.bf16.xpose.msra.mxu0 0
        %3056 = vmatprep.mubr.bf16.mxu0 0
        %3057 = vmatmul.mubr.bf16.gmra.mrb[0].mxu0 %v3013
        %v3058 = vpop.f32.mrb[0].mxu0
        %v3059 = vadd.f32 0.0, %v3058
        %v3060 = vpop.f32.mrb[0].mxu0
        %v3061 = vpop.f32.mrb[0].mxu0
        %v3062 = vadd.f32 0.0, %v3061
        %v3063 = vpop.f32.mrb[0].mxu0
        %3064 = vmatprep.mubr.bf16.mxu0 0
        %3065 = vmatmul.mubr.bf16.gmra.mrb[0].mxu0 %v3016
        %v3066 = vpop.f32.mrb[0].mxu0
        %v3067 = vadd.f32 0.0, %v3066
        %v3068 = vpop.f32.mrb[0].mxu0
        %v3069 = vpop.f32.mrb[0].mxu0
        %v3070 = vadd.f32 0.0, %v3069
        %v3071 = vpop.f32.mrb[0].mxu0
        %3072 = vdwg.mxu0
        %v3073 = vmul.f32 %v3059, 0.125
        %v3074 = vmul.f32 %v3062, 0.125
        %v3075 = vmul.f32 %v3067, 0.125
        %v3076 = vmul.f32 %v3070, 0.125
        %v3077 = vadd.f32 %v3073, %v1112
        %v3078 = vadd.f32 %v3074, %v1113
        %v3079 = vadd.f32 %v3075, %v1114
        %v3080 = vadd.f32 %v3076, %v1115
        %v3081 = vsel %vm1544, %v3077, -inf
        %3082 = vmax.xlane.f32.xlu0 %v3081
        %v3083 = vpop.xlane.xlu0 %3082
        %v3084 = vsel %vm1544, %v3078, -inf
        %3085 = vmax.xlane.f32.xlu0 %v3084
        %v3086 = vpop.xlane.xlu0 %3085
        %v3087 = vsel %vm1544, %v3079, -inf
        %3088 = vmax.xlane.f32.xlu0 %v3087
        %v3089 = vpop.xlane.xlu0 %3088
        %v3090 = vsel %vm1544, %v3080, -inf
        %3091 = vmax.xlane.f32.xlu0 %v3090
        %v3092 = vpop.xlane.xlu0 %3091
        %v3093 = vsub.f32 %v3077, %v3083
        %v3094 = vsub.f32 %v3078, %v3086
        %v3095 = vsub.f32 %v3079, %v3089
        %v3096 = vsub.f32 %v3080, %v3092
        %v3097 = vmul.f32 %v3093, 1.442695
        %v3098 = vpow.pop %v3097
        %v3099 = vmul.f32 %v3094, 1.442695
        %v3100 = vpow.pop %v3099
        %v3101 = vmul.f32 %v3095, 1.442695
        %v3102 = vpow.pop %v3101
        %v3103 = vmul.f32 %v3096, 1.442695
        %v3104 = vpow.pop %v3103
        %v3105 = vsel %vm1544, %v3098, 0.0
        %3106 = vadd.xlane.f32.xlu0 %v3105
        %v3107 = vpop.xlane.xlu0 %3106
        %v3108 = vsel %vm1544, %v3100, 0.0
        %3109 = vadd.xlane.f32.xlu0 %v3108
        %v3110 = vpop.xlane.xlu0 %3109
        %v3111 = vsel %vm1544, %v3102, 0.0
        %3112 = vadd.xlane.f32.xlu0 %v3111
        %v3113 = vpop.xlane.xlu0 %3112
        %v3114 = vsel %vm1544, %v3104, 0.0
        %3115 = vadd.xlane.f32.xlu0 %v3114
        %v3116 = vpop.xlane.xlu0 %3115
        %v3117 = vrcp.pop %v3107
        %v3118 = vrcp.pop %v3110
        %v3119 = vrcp.pop %v3113
        %v3120 = vrcp.pop %v3116
        %v3121 = vmul.f32 %v3098, %v3117
        %v3122 = vmul.f32 %v3100, %v3118
        %v3123 = vmul.f32 %v3102, %v3119
        %v3124 = vmul.f32 %v3104, %v3120
        %v3125 = vpack.c.bf16 %v3122, %v3121
        %v3126 = vpack.c.bf16 %v3124, %v3123
        %3129 = vrot.lane.b32.xlu0 %v2828, 64
        %v3130 = vpop.permute.xlu0 %3129
        %3131 = vrot.lane.b32.xlu0 %v2829, 64
        %v3132 = vpop.permute.xlu0 %3131
        %v3136 = vsel %vm1544, %v3125, 0
        %v3139 = vsel %vm1544, %v3126, 0
        %3141 = vmatprep.subr.bf16.mxu0 0
        %3142 = vmatpush1.bf16.msra.mxu0 %v3130
        %3143 = vmatprep.subr.bf16.mxu0 0
        %3144 = vmatpush1.bf16.msra.mxu0 %v3132
        %3145 = vmatprep.subr.bf16.mxu0 0
        %3146 = vmatpush1.bf16.msra.mxu0 0
        %3147 = vmatprep.subr.bf16.mxu0 0
        %3148 = vmatpush1.bf16.msra.mxu0 0
        %3149 = vmatprep.subr.bf16.mxu0 0
        %3150 = vmatpush1.bf16.msra.mxu0 0
        %3151 = vmatprep.subr.bf16.mxu0 0
        %3152 = vmatpush1.bf16.msra.mxu0 0
        %3153 = vmatprep.subr.bf16.mxu0 0
        %3154 = vmatpush1.bf16.msra.mxu0 0
        %3155 = vmatprep.subr.bf16.mxu0 0
        %3156 = vmatpush1.bf16.msra.mxu0 0
        %3157 = vmatprep.subr.bf16.mxu0 0
        %3158 = vmatpush1.bf16.msra.mxu0 0
        %3159 = vmatprep.subr.bf16.mxu0 0
        %3160 = vmatpush1.bf16.msra.mxu0 0
        %3161 = vmatprep.subr.bf16.mxu0 0
        %3162 = vmatpush1.bf16.msra.mxu0 0
        %3163 = vmatprep.subr.bf16.mxu0 0
        %3164 = vmatpush1.bf16.msra.mxu0 0
        %3165 = vmatprep.subr.bf16.mxu0 0
        %3166 = vmatpush1.bf16.msra.mxu0 0
        %3167 = vmatprep.subr.bf16.mxu0 0
        %3168 = vmatpush1.bf16.msra.mxu0 0
        %3169 = vmatprep.subr.bf16.mxu0 0
        %3170 = vmatpush1.bf16.msra.mxu0 0
        %3171 = vmatprep.subr.bf16.mxu0 0
        %3172 = vmatpush1.bf16.msra.mxu0 0
        %3173 = vmatprep.mubr.bf16.mxu0 0
        %3174 = vmatmul.mubr.bf16.gmra.mrb[0].mxu0 %v3136
        %v3175 = vpop.f32.mrb[0].mxu0
        %v3176 = vadd.f32 0.0, %v3175
        %v3177 = vpop.f32.mrb[0].mxu0
        %v3178 = vpop.f32.mrb[0].mxu0
        %v3179 = vadd.f32 0.0, %v3178
        %v3180 = vpop.f32.mrb[0].mxu0
        %3181 = vmatprep.mubr.bf16.mxu0 0
        %3182 = vmatmul.mubr.bf16.gmra.mrb[0].mxu0 %v3139
        %v3183 = vpop.f32.mrb[0].mxu0
        %v3184 = vadd.f32 0.0, %v3183
        %v3185 = vpop.f32.mrb[0].mxu0
        %v3186 = vpop.f32.mrb[0].mxu0
        %v3187 = vadd.f32 0.0, %v3186
        %v3188 = vpop.f32.mrb[0].mxu0
        %3189 = vdwg.mxu0
        %3194 = vrot.lane.b32.xlu0 %v3176, 64
        %v3195 = vpop.permute.xlu0 %3194
        %3196 = vrot.lane.b32.xlu0 %v3179, 64
        %v3197 = vpop.permute.xlu0 %3196
        %3198 = vrot.lane.b32.xlu0 %v3184, 64
        %v3199 = vpop.permute.xlu0 %3198
        %3200 = vrot.lane.b32.xlu0 %v3187, 64
        %v3201 = vpop.permute.xlu0 %3200
        %v3206 = vsel %vm1474, %v2986, %v3195
        %v3207 = vsel %vm1474, %v2989, %v3197
        %v3208 = vsel %vm1474, %v2994, %v3199
        %v3209 = vsel %vm1474, %v2997, %v3201
        %s3210 = scalar_lea.vmem %s878, 64 [#allocation5]
        %v3211 = vld [vmem:[%s3210] sm:$0xf]
        %v3212 = vld [vmem:[%s3210 + $0x4] sm:$0xf]
        %v3213 = vld [vmem:[%s3210 + $0x8] sm:$0xf]
        %v3214 = vld [vmem:[%s3210 + $0xc] sm:$0xf]
        %v3215 = vld [vmem:[%s3210 + $0x10] sm:$0xf]
        %v3216 = vld [vmem:[%s3210 + $0x14] sm:$0xf]
        %v3217 = vld [vmem:[%s3210 + $0x18] sm:$0xf]
        %v3218 = vld [vmem:[%s3210 + $0x1c] sm:$0xf]
        %v3219 = vld [vmem:[%s3210 + $0x20] sm:$0xf]
        %v3220 = vld [vmem:[%s3210 + $0x24] sm:$0xf]
        %v3221 = vld [vmem:[%s3210 + $0x28] sm:$0xf]
        %v3222 = vld [vmem:[%s3210 + $0x2c] sm:$0xf]
        %v3223 = vld [vmem:[%s3210 + $0x30] sm:$0xf]
        %v3224 = vld [vmem:[%s3210 + $0x34] sm:$0xf]
        %v3225 = vld [vmem:[%s3210 + $0x38] sm:$0xf]
        %v3226 = vld [vmem:[%s3210 + $0x3c] sm:$0xf]
        %s3227 = scalar_lea.vmem %s1081, 1
        %v3228 = vld [vmem:[%s3227] sm:$0x1]
        %v3229 = vpack.c.bf16 %v3207, %v3206
        %v3230 = vpack.c.bf16 %v3209, %v3208
        %v3232 = vlaneseq
        %v3233 = vshrl.u32 %v3232, 7
        %v3234 = vsub.s32 0, %v3233
        %v3235 = vrot.slane %v3228, %v3234
        %v3253 = vunpack.c.l.b16 %v3211
        %v3254 = vunpack.c.l.b16 %v3212
        %v3255 = vunpack.c.l.b16 %v3213
        %v3256 = vunpack.c.l.b16 %v3214
        %v3257 = vunpack.c.l.b16 %v3215
        %v3258 = vunpack.c.l.b16 %v3216
        %v3259 = vunpack.c.l.b16 %v3217
        %v3260 = vunpack.c.l.b16 %v3218
        %v3261 = vunpack.c.l.b16 %v3219
        %v3262 = vunpack.c.l.b16 %v3220
        %v3263 = vunpack.c.l.b16 %v3221
        %v3264 = vunpack.c.l.b16 %v3222
        %v3265 = vunpack.c.l.b16 %v3223
        %v3266 = vunpack.c.l.b16 %v3224
        %v3267 = vunpack.c.l.b16 %v3225
        %v3268 = vunpack.c.l.b16 %v3226
        %v3269 = vpack.c.b16 %v3254, %v3253
        %v3270 = vpack.c.b16 %v3256, %v3255
        %v3271 = vpack.c.b16 %v3258, %v3257
        %v3272 = vpack.c.b16 %v3260, %v3259
        %v3273 = vpack.c.b16 %v3262, %v3261
        %v3274 = vpack.c.b16 %v3264, %v3263
        %v3275 = vpack.c.b16 %v3266, %v3265
        %v3276 = vpack.c.b16 %v3268, %v3267
        %3285 = vmatprep.subr.bf16.mxu0 0
        %3286 = vmatpush1.bf16.msra.mxu0 %v3269
        %3287 = vmatprep.subr.bf16.mxu0 0
        %3288 = vmatpush1.bf16.msra.mxu0 %v3270
        %3289 = vmatprep.subr.bf16.mxu0 0
        %3290 = vmatpush1.bf16.msra.mxu0 %v3271
        %3291 = vmatprep.subr.bf16.mxu0 0
        %3292 = vmatpush1.bf16.msra.mxu0 %v3272
        %3293 = vmatprep.subr.bf16.mxu0 0
        %3294 = vmatpush1.bf16.msra.mxu0 %v3273
        %3295 = vmatprep.subr.bf16.mxu0 0
        %3296 = vmatpush1.bf16.msra.mxu0 %v3274
        %3297 = vmatprep.subr.bf16.mxu0 0
        %3298 = vmatpush1.bf16.msra.mxu0 %v3275
        %3299 = vmatprep.subr.bf16.mxu0 0
        %3300 = vmatpush1.bf16.msra.mxu0 %v3276
        %3301 = vmatprep.subr.bf16.mxu0 0
        %3302 = vmatpush1.bf16.msra.mxu0 0
        %3303 = vmatprep.subr.bf16.mxu0 0
        %3304 = vmatpush1.bf16.msra.mxu0 0
        %3305 = vmatprep.subr.bf16.mxu0 0
        %3306 = vmatpush1.bf16.msra.mxu0 0
        %3307 = vmatprep.subr.bf16.mxu0 0
        %3308 = vmatpush1.bf16.msra.mxu0 0
        %3309 = vmatprep.subr.bf16.mxu0 0
        %3310 = vmatpush1.bf16.msra.mxu0 0
        %3311 = vmatprep.subr.bf16.mxu0 0
        %3312 = vmatpush1.bf16.msra.mxu0 0
        %3313 = vmatprep.subr.bf16.mxu0 0
        %3314 = vmatpush1.bf16.msra.mxu0 0
        %3315 = vmatprep.subr.bf16.mxu0 0
        %3316 = vmatpush1.bf16.msra.mxu0 0
        %3317 = vmatprep.mubr.bf16.mxu0 0
        %3318 = vmatmul.mubr.bf16.gmra.mrb[0].mxu0 %v3229
        %v3319 = vpop.f32.mrb[0].mxu0
        %v3320 = vadd.f32 %v3235, %v3319
        %v3321 = vpop.f32.mrb[0].mxu0
        %v3322 = vpop.f32.mrb[0].mxu0
        %v3323 = vadd.f32 %v3235, %v3322
        %v3324 = vpop.f32.mrb[0].mxu0
        %3325 = vmatprep.mubr.bf16.mxu0 0
        %3326 = vmatmul.mubr.bf16.gmra.mrb[0].mxu0 %v3230
        %v3327 = vpop.f32.mrb[0].mxu0
        %v3328 = vadd.f32 %v3235, %v3327
        %v3329 = vpop.f32.mrb[0].mxu0
        %v3330 = vpop.f32.mrb[0].mxu0
        %v3331 = vadd.f32 %v3235, %v3330
        %v3332 = vpop.f32.mrb[0].mxu0
        %3333 = vdwg.mxu0
        %v3334 = vadd.f32 %v3320, %v2537
        %v3335 = vadd.f32 %v3323, %v2538
        %v3336 = vadd.f32 %v3328, %v2539
        %v3337 = vadd.f32 %v3331, %v2540
        %s3338 = scalar_lea.vmem %s1085, 1
        %v3339 = vld [vmem:[%s3338] sm:$0x1]
        %s3340 = scalar_lea.vmem %s1089, 1
        %v3341 = vld [vmem:[%s3340] sm:$0x1]
        %3342 = vadd.xlane.f32.xlu0 %v3334
        %v3343 = vpop.xlane.xlu0 %3342
        %3344 = vadd.xlane.f32.xlu0 %v3335
        %v3345 = vpop.xlane.xlu0 %3344
        %3346 = vadd.xlane.f32.xlu0 %v3336
        %v3347 = vpop.xlane.xlu0 %3346
        %3348 = vadd.xlane.f32.xlu0 %v3337
        %v3349 = vpop.xlane.xlu0 %3348
        %v3350 = vmul.f32 %v3343, %v1130
        %v3351 = vmul.f32 %v3345, %v1130
        %v3352 = vmul.f32 %v3347, %v1130
        %v3353 = vmul.f32 %v3349, %v1130
        %v3354 = vsub.f32 %v3334, %v3350
        %v3355 = vsub.f32 %v3335, %v3351
        %v3356 = vsub.f32 %v3336, %v3352
        %v3357 = vsub.f32 %v3337, %v3353
        %v3358 = vmul.f32 %v3354, %v3354
        %v3359 = vmul.f32 %v3355, %v3355
        %v3360 = vmul.f32 %v3356, %v3356
        %v3361 = vmul.f32 %v3357, %v3357
        %3362 = vadd.xlane.f32.xlu0 %v3358
        %v3363 = vpop.xlane.xlu0 %3362
        %3364 = vadd.xlane.f32.xlu0 %v3359
        %v3365 = vpop.xlane.xlu0 %3364
        %3366 = vadd.xlane.f32.xlu0 %v3360
        %v3367 = vpop.xlane.xlu0 %3366
        %3368 = vadd.xlane.f32.xlu0 %v3361
        %v3369 = vpop.xlane.xlu0 %3368
        %v3370 = vmul.f32 %v3363, %v1130
        %v3371 = vmul.f32 %v3365, %v1130
        %v3372 = vmul.f32 %v3367, %v1130
        %v3373 = vmul.f32 %v3369, %v1130
        %v3374 = vadd.f32 %v3370, 1e-12
        %v3375 = vadd.f32 %v3371, 1e-12
        %v3376 = vadd.f32 %v3372, 1e-12
        %v3377 = vadd.f32 %v3373, 1e-12
        %v3378 = vrsqrt.pop %v3374
        %v3379 = vrsqrt.pop %v3375
        %v3380 = vrsqrt.pop %v3376
        %v3381 = vrsqrt.pop %v3377
        %v3382 = vmul.f32 %v3354, %v3378
        %v3383 = vmul.f32 %v3355, %v3379
        %v3384 = vmul.f32 %v3356, %v3380
        %v3385 = vmul.f32 %v3357, %v3381
        %v3387 = vlaneseq
        %v3388 = vshrl.u32 %v3387, 7
        %v3389 = vsub.s32 0, %v3388
        %v3390 = vrot.slane %v3339, %v3389
        %v3392 = vmul.f32 %v3382, %v3390
        %v3393 = vmul.f32 %v3383, %v3390
        %v3394 = vmul.f32 %v3384, %v3390
        %v3395 = vmul.f32 %v3385, %v3390
        %v3397 = vlaneseq
        %v3398 = vshrl.u32 %v3397, 7
        %v3399 = vsub.s32 0, %v3398
        %v3400 = vrot.slane %v3341, %v3399
        %v3402 = vadd.f32 %v3392, %v3400
        %v3403 = vadd.f32 %v3393, %v3400
        %v3404 = vadd.f32 %v3394, %v3400
        %v3405 = vadd.f32 %v3395, %v3400
        %s3406 = scalar_lea.vmem %s1094, 128
        %v3407 = vld [vmem:[%s3406] sm:$0xff]
        %v3408 = vld [vmem:[%s3406 + $0x8] sm:$0xff]
        %v3409 = vld [vmem:[%s3406 + $0x10] sm:$0xff]
        %v3410 = vld [vmem:[%s3406 + $0x18] sm:$0xff]
        %v3411 = vld [vmem:[%s3406 + $0x20] sm:$0xff]
        %v3412 = vld [vmem:[%s3406 + $0x28] sm:$0xff]
        %v3413 = vld [vmem:[%s3406 + $0x30] sm:$0xff]
        %v3414 = vld [vmem:[%s3406 + $0x38] sm:$0xff]
        %v3415 = vld [vmem:[%s3406 + $0x40] sm:$0xff]
        %v3416 = vld [vmem:[%s3406 + $0x48] sm:$0xff]
        %v3417 = vld [vmem:[%s3406 + $0x50] sm:$0xff]
        %v3418 = vld [vmem:[%s3406 + $0x58] sm:$0xff]
        %v3419 = vld [vmem:[%s3406 + $0x60] sm:$0xff]
        %v3420 = vld [vmem:[%s3406 + $0x68] sm:$0xff]
        %v3421 = vld [vmem:[%s3406 + $0x70] sm:$0xff]
        %v3422 = vld [vmem:[%s3406 + $0x78] sm:$0xff]
        %s3423 = scalar_lea.vmem %s1098, 2
        %v3424 = vld [vmem:[%s3423] sm:$0x3]
        %v3425 = vpack.c.bf16 %v3403, %v3402
        %v3426 = vpack.c.bf16 %v3405, %v3404
        %v3428 = vlaneseq
        %v3429 = vshrl.u32 %v3428, 7
        %v3430 = vsub.s32 0, %v3429
        %v3431 = vrot.slane %v3424, %v3430
        %v3432 = vlaneseq
        %v3433 = vshrl.u32 %v3432, 7
        %v3434 = vsub.s32 1, %v3433
        %v3435 = vrot.slane %v3424, %v3434
        %v3454 = vunpack.c.l.b16 %v3407
        %v3455 = vunpack.c.h.b16 %v3407
        %v3456 = vunpack.c.l.b16 %v3408
        %v3457 = vunpack.c.h.b16 %v3408
        %v3458 = vunpack.c.l.b16 %v3409
        %v3459 = vunpack.c.h.b16 %v3409
        %v3460 = vunpack.c.l.b16 %v3410
        %v3461 = vunpack.c.h.b16 %v3410
        %v3462 = vunpack.c.l.b16 %v3411
        %v3463 = vunpack.c.h.b16 %v3411
        %v3464 = vunpack.c.l.b16 %v3412
        %v3465 = vunpack.c.h.b16 %v3412
        %v3466 = vunpack.c.l.b16 %v3413
        %v3467 = vunpack.c.h.b16 %v3413
        %v3468 = vunpack.c.l.b16 %v3414
        %v3469 = vunpack.c.h.b16 %v3414
        %v3470 = vunpack.c.l.b16 %v3415
        %v3471 = vunpack.c.h.b16 %v3415
        %v3472 = vunpack.c.l.b16 %v3416
        %v3473 = vunpack.c.h.b16 %v3416
        %v3474 = vunpack.c.l.b16 %v3417
        %v3475 = vunpack.c.h.b16 %v3417
        %v3476 = vunpack.c.l.b16 %v3418
        %v3477 = vunpack.c.h.b16 %v3418
        %v3478 = vunpack.c.l.b16 %v3419
        %v3479 = vunpack.c.h.b16 %v3419
        %v3480 = vunpack.c.l.b16 %v3420
        %v3481 = vunpack.c.h.b16 %v3420
        %v3482 = vunpack.c.l.b16 %v3421
        %v3483 = vunpack.c.h.b16 %v3421
        %v3484 = vunpack.c.l.b16 %v3422
        %v3485 = vunpack.c.h.b16 %v3422
        %v3486 = vpack.c.b16 %v3456, %v3454
        %v3487 = vpack.c.b16 %v3457, %v3455
        %v3488 = vpack.c.b16 %v3460, %v3458
        %v3489 = vpack.c.b16 %v3461, %v3459
        %v3490 = vpack.c.b16 %v3464, %v3462
        %v3491 = vpack.c.b16 %v3465, %v3463
        %v3492 = vpack.c.b16 %v3468, %v3466
        %v3493 = vpack.c.b16 %v3469, %v3467
        %v3494 = vpack.c.b16 %v3472, %v3470
        %v3495 = vpack.c.b16 %v3473, %v3471
        %v3496 = vpack.c.b16 %v3476, %v3474
        %v3497 = vpack.c.b16 %v3477, %v3475
        %v3498 = vpack.c.b16 %v3480, %v3478
        %v3499 = vpack.c.b16 %v3481, %v3479
        %v3500 = vpack.c.b16 %v3484, %v3482
        %v3501 = vpack.c.b16 %v3485, %v3483
        %3518 = vmatprep.subr.bf16.mxu0 %v3487
        %3519 = vmatpush1.bf16.msra.mxu0 %v3486
        %3520 = vmatprep.subr.bf16.mxu0 %v3489
        %3521 = vmatpush1.bf16.msra.mxu0 %v3488
        %3522 = vmatprep.subr.bf16.mxu0 %v3491
        %3523 = vmatpush1.bf16.msra.mxu0 %v3490
        %3524 = vmatprep.subr.bf16.mxu0 %v3493
        %3525 = vmatpush1.bf16.msra.mxu0 %v3492
        %3526 = vmatprep.subr.bf16.mxu0 %v3495
        %3527 = vmatpush1.bf16.msra.mxu0 %v3494
        %3528 = vmatprep.subr.bf16.mxu0 %v3497
        %3529 = vmatpush1.bf16.msra.mxu0 %v3496
        %3530 = vmatprep.subr.bf16.mxu0 %v3499
        %3531 = vmatpush1.bf16.msra.mxu0 %v3498
        %3532 = vmatprep.subr.bf16.mxu0 %v3501
        %3533 = vmatpush1.bf16.msra.mxu0 %v3500
        %3534 = vmatprep.subr.bf16.mxu0 0
        %3535 = vmatpush1.bf16.msra.mxu0 0
        %3536 = vmatprep.subr.bf16.mxu0 0
        %3537 = vmatpush1.bf16.msra.mxu0 0
        %3538 = vmatprep.subr.bf16.mxu0 0
        %3539 = vmatpush1.bf16.msra.mxu0 0
        %3540 = vmatprep.subr.bf16.mxu0 0
        %3541 = vmatpush1.bf16.msra.mxu0 0
        %3542 = vmatprep.subr.bf16.mxu0 0
        %3543 = vmatpush1.bf16.msra.mxu0 0
        %3544 = vmatprep.subr.bf16.mxu0 0
        %3545 = vmatpush1.bf16.msra.mxu0 0
        %3546 = vmatprep.subr.bf16.mxu0 0
        %3547 = vmatpush1.bf16.msra.mxu0 0
        %3548 = vmatprep.subr.bf16.mxu0 0
        %3549 = vmatpush1.bf16.msra.mxu0 0
        %3550 = vmatprep.mubr.bf16.mxu0 0
        %3551 = vmatmul.mubr.bf16.gmra.mrb[0].mxu0 %v3425
        %v3552 = vpop.f32.mrb[0].mxu0
        %v3553 = vadd.f32 %v3431, %v3552
        %v3554 = vpop.f32.mrb[0].mxu0
        %v3555 = vadd.f32 %v3435, %v3554
        %v3556 = vpop.f32.mrb[0].mxu0
        %v3557 = vadd.f32 %v3431, %v3556
        %v3558 = vpop.f32.mrb[0].mxu0
        %v3559 = vadd.f32 %v3435, %v3558
        %3560 = vmatprep.mubr.bf16.mxu0 0
        %3561 = vmatmul.mubr.bf16.gmra.mrb[0].mxu0 %v3426
        %v3562 = vpop.f32.mrb[0].mxu0
        %v3563 = vadd.f32 %v3431, %v3562
        %v3564 = vpop.f32.mrb[0].mxu0
        %v3565 = vadd.f32 %v3435, %v3564
        %v3566 = vpop.f32.mrb[0].mxu0
        %v3567 = vadd.f32 %v3431, %v3566
        %v3568 = vpop.f32.mrb[0].mxu0
        %v3569 = vadd.f32 %v3435, %v3568
        %3570 = vdwg.mxu0
        %v3571 = vmul.f32 %v3553, 0.5
        %v3572 = vmul.f32 %v3555, 0.5
        %v3573 = vmul.f32 %v3557, 0.5
        %v3574 = vmul.f32 %v3559, 0.5
        %v3575 = vmul.f32 %v3563, 0.5
        %v3576 = vmul.f32 %v3565, 0.5
        %v3577 = vmul.f32 %v3567, 0.5
        %v3578 = vmul.f32 %v3569, 0.5
        %v3579 = vmul.f32 %v3553, 0.044715
        %v3580 = vmul.f32 %v3555, 0.044715
        %v3581 = vmul.f32 %v3557, 0.044715
        %v3582 = vmul.f32 %v3559, 0.044715
        %v3583 = vmul.f32 %v3563, 0.044715
        %v3584 = vmul.f32 %v3565, 0.044715
        %v3585 = vmul.f32 %v3567, 0.044715
        %v3586 = vmul.f32 %v3569, 0.044715
        %v3587 = vmul.f32 %v3579, %v3553
        %v3588 = vmul.f32 %v3580, %v3555
        %v3589 = vmul.f32 %v3581, %v3557
        %v3590 = vmul.f32 %v3582, %v3559
        %v3591 = vmul.f32 %v3583, %v3563
        %v3592 = vmul.f32 %v3584, %v3565
        %v3593 = vmul.f32 %v3585, %v3567
        %v3594 = vmul.f32 %v3586, %v3569
        %v3595 = vmul.f32 %v3587, %v3553
        %v3596 = vmul.f32 %v3588, %v3555
        %v3597 = vmul.f32 %v3589, %v3557
        %v3598 = vmul.f32 %v3590, %v3559
        %v3599 = vmul.f32 %v3591, %v3563
        %v3600 = vmul.f32 %v3592, %v3565
        %v3601 = vmul.f32 %v3593, %v3567
        %v3602 = vmul.f32 %v3594, %v3569
        %v3603 = vadd.f32 %v3553, %v3595
        %v3604 = vadd.f32 %v3555, %v3596
        %v3605 = vadd.f32 %v3557, %v3597
        %v3606 = vadd.f32 %v3559, %v3598
        %v3607 = vadd.f32 %v3563, %v3599
        %v3608 = vadd.f32 %v3565, %v3600
        %v3609 = vadd.f32 %v3567, %v3601
        %v3610 = vadd.f32 %v3569, %v3602
        %v3611 = vmul.f32 %v3603, 0.7978846
        %v3612 = vmul.f32 %v3604, 0.7978846
        %v3613 = vmul.f32 %v3605, 0.7978846
        %v3614 = vmul.f32 %v3606, 0.7978846
        %v3615 = vmul.f32 %v3607, 0.7978846
        %v3616 = vmul.f32 %v3608, 0.7978846
        %v3617 = vmul.f32 %v3609, 0.7978846
        %v3618 = vmul.f32 %v3610, 0.7978846
        %v3619 = vtanh.pop %v3611
        %v3620 = vtanh.pop %v3612
        %v3621 = vtanh.pop %v3613
        %v3622 = vtanh.pop %v3614
        %v3623 = vtanh.pop %v3615
        %v3624 = vtanh.pop %v3616
        %v3625 = vtanh.pop %v3617
        %v3626 = vtanh.pop %v3618
        %v3627 = vadd.f32 %v3619, 1.0
        %v3628 = vadd.f32 %v3620, 1.0
        %v3629 = vadd.f32 %v3621, 1.0
        %v3630 = vadd.f32 %v3622, 1.0
        %v3631 = vadd.f32 %v3623, 1.0
        %v3632 = vadd.f32 %v3624, 1.0
        %v3633 = vadd.f32 %v3625, 1.0
        %v3634 = vadd.f32 %v3626, 1.0
        %v3635 = vmul.f32 %v3571, %v3627
        %v3636 = vmul.f32 %v3572, %v3628
        %v3637 = vmul.f32 %v3573, %v3629
        %v3638 = vmul.f32 %v3574, %v3630
        %v3639 = vmul.f32 %v3575, %v3631
        %v3640 = vmul.f32 %v3576, %v3632
        %v3641 = vmul.f32 %v3577, %v3633
        %v3642 = vmul.f32 %v3578, %v3634
        %s3643 = scalar_lea.vmem %s887, 128 [#allocation7]
        %v3644 = vld [vmem:[%s3643] sm:$0xf]
        %v3645 = vld [vmem:[%s3643 + $0x4] sm:$0xf]
        %v3646 = vld [vmem:[%s3643 + $0x8] sm:$0xf]
        %v3647 = vld [vmem:[%s3643 + $0xc] sm:$0xf]
        %v3648 = vld [vmem:[%s3643 + $0x10] sm:$0xf]
        %v3649 = vld [vmem:[%s3643 + $0x14] sm:$0xf]
        %v3650 = vld [vmem:[%s3643 + $0x18] sm:$0xf]
        %v3651 = vld [vmem:[%s3643 + $0x1c] sm:$0xf]
        %v3652 = vld [vmem:[%s3643 + $0x20] sm:$0xf]
        %v3653 = vld [vmem:[%s3643 + $0x24] sm:$0xf]
        %v3654 = vld [vmem:[%s3643 + $0x28] sm:$0xf]
        %v3655 = vld [vmem:[%s3643 + $0x2c] sm:$0xf]
        %v3656 = vld [vmem:[%s3643 + $0x30] sm:$0xf]
        %v3657 = vld [vmem:[%s3643 + $0x34] sm:$0xf]
        %v3658 = vld [vmem:[%s3643 + $0x38] sm:$0xf]
        %v3659 = vld [vmem:[%s3643 + $0x3c] sm:$0xf]
        %v3660 = vld [vmem:[%s3643 + $0x40] sm:$0xf]
        %v3661 = vld [vmem:[%s3643 + $0x44] sm:$0xf]
        %v3662 = vld [vmem:[%s3643 + $0x48] sm:$0xf]
        %v3663 = vld [vmem:[%s3643 + $0x4c] sm:$0xf]
        %v3664 = vld [vmem:[%s3643 + $0x50] sm:$0xf]
        %v3665 = vld [vmem:[%s3643 + $0x54] sm:$0xf]
        %v3666 = vld [vmem:[%s3643 + $0x58] sm:$0xf]
        %v3667 = vld [vmem:[%s3643 + $0x5c] sm:$0xf]
        %v3668 = vld [vmem:[%s3643 + $0x60] sm:$0xf]
        %v3669 = vld [vmem:[%s3643 + $0x64] sm:$0xf]
        %v3670 = vld [vmem:[%s3643 + $0x68] sm:$0xf]
        %v3671 = vld [vmem:[%s3643 + $0x6c] sm:$0xf]
        %v3672 = vld [vmem:[%s3643 + $0x70] sm:$0xf]
        %v3673 = vld [vmem:[%s3643 + $0x74] sm:$0xf]
        %v3674 = vld [vmem:[%s3643 + $0x78] sm:$0xf]
        %v3675 = vld [vmem:[%s3643 + $0x7c] sm:$0xf]
        %s3676 = scalar_lea.vmem %s1102, 1
        %v3677 = vld [vmem:[%s3676] sm:$0x1]
        %v3678 = vpack.c.bf16 %v3637, %v3635
        %v3679 = vpack.c.bf16 %v3638, %v3636
        %v3680 = vpack.c.bf16 %v3641, %v3639
        %v3681 = vpack.c.bf16 %v3642, %v3640
        %v3683 = vlaneseq
        %v3684 = vshrl.u32 %v3683, 7
        %v3685 = vsub.s32 0, %v3684
        %v3686 = vrot.slane %v3677, %v3685
        %v3720 = vunpack.c.l.b16 %v3644
        %v3721 = vunpack.c.l.b16 %v3645
        %v3722 = vunpack.c.l.b16 %v3646
        %v3723 = vunpack.c.l.b16 %v3647
        %v3724 = vunpack.c.l.b16 %v3648
        %v3725 = vunpack.c.l.b16 %v3649
        %v3726 = vunpack.c.l.b16 %v3650
        %v3727 = vunpack.c.l.b16 %v3651
        %v3728 = vunpack.c.l.b16 %v3652
        %v3729 = vunpack.c.l.b16 %v3653
        %v3730 = vunpack.c.l.b16 %v3654
        %v3731 = vunpack.c.l.b16 %v3655
        %v3732 = vunpack.c.l.b16 %v3656
        %v3733 = vunpack.c.l.b16 %v3657
        %v3734 = vunpack.c.l.b16 %v3658
        %v3735 = vunpack.c.l.b16 %v3659
        %v3736 = vunpack.c.l.b16 %v3660
        %v3737 = vunpack.c.l.b16 %v3661
        %v3738 = vunpack.c.l.b16 %v3662
        %v3739 = vunpack.c.l.b16 %v3663
        %v3740 = vunpack.c.l.b16 %v3664
        %v3741 = vunpack.c.l.b16 %v3665
        %v3742 = vunpack.c.l.b16 %v3666
        %v3743 = vunpack.c.l.b16 %v3667
        %v3744 = vunpack.c.l.b16 %v3668
        %v3745 = vunpack.c.l.b16 %v3669
        %v3746 = vunpack.c.l.b16 %v3670
        %v3747 = vunpack.c.l.b16 %v3671
        %v3748 = vunpack.c.l.b16 %v3672
        %v3749 = vunpack.c.l.b16 %v3673
        %v3750 = vunpack.c.l.b16 %v3674
        %v3751 = vunpack.c.l.b16 %v3675
        %v3752 = vpack.c.b16 %v3721, %v3720
        %v3753 = vpack.c.b16 %v3723, %v3722
        %v3754 = vpack.c.b16 %v3725, %v3724
        %v3755 = vpack.c.b16 %v3727, %v3726
        %v3756 = vpack.c.b16 %v3729, %v3728
        %v3757 = vpack.c.b16 %v3731, %v3730
        %v3758 = vpack.c.b16 %v3733, %v3732
        %v3759 = vpack.c.b16 %v3735, %v3734
        %v3760 = vpack.c.b16 %v3737, %v3736
        %v3761 = vpack.c.b16 %v3739, %v3738
        %v3762 = vpack.c.b16 %v3741, %v3740
        %v3763 = vpack.c.b16 %v3743, %v3742
        %v3764 = vpack.c.b16 %v3745, %v3744
        %v3765 = vpack.c.b16 %v3747, %v3746
        %v3766 = vpack.c.b16 %v3749, %v3748
        %v3767 = vpack.c.b16 %v3751, %v3750
        %3784 = vmatprep.subr.bf16.mxu0 0
        %3785 = vmatpush1.bf16.msra.mxu0 %v3752
        %3786 = vmatprep.subr.bf16.mxu0 0
        %3787 = vmatpush1.bf16.msra.mxu0 %v3753
        %3788 = vmatprep.subr.bf16.mxu0 0
        %3789 = vmatpush1.bf16.msra.mxu0 %v3754
        %3790 = vmatprep.subr.bf16.mxu0 0
        %3791 = vmatpush1.bf16.msra.mxu0 %v3755
        %3792 = vmatprep.subr.bf16.mxu0 0
        %3793 = vmatpush1.bf16.msra.mxu0 %v3756
        %3794 = vmatprep.subr.bf16.mxu0 0
        %3795 = vmatpush1.bf16.msra.mxu0 %v3757
        %3796 = vmatprep.subr.bf16.mxu0 0
        %3797 = vmatpush1.bf16.msra.mxu0 %v3758
        %3798 = vmatprep.subr.bf16.mxu0 0
        %3799 = vmatpush1.bf16.msra.mxu0 %v3759
        %3800 = vmatprep.subr.bf16.mxu0 0
        %3801 = vmatpush1.bf16.msra.mxu0 %v3760
        %3802 = vmatprep.subr.bf16.mxu0 0
        %3803 = vmatpush1.bf16.msra.mxu0 %v3761
        %3804 = vmatprep.subr.bf16.mxu0 0
        %3805 = vmatpush1.bf16.msra.mxu0 %v3762
        %3806 = vmatprep.subr.bf16.mxu0 0
        %3807 = vmatpush1.bf16.msra.mxu0 %v3763
        %3808 = vmatprep.subr.bf16.mxu0 0
        %3809 = vmatpush1.bf16.msra.mxu0 %v3764
        %3810 = vmatprep.subr.bf16.mxu0 0
        %3811 = vmatpush1.bf16.msra.mxu0 %v3765
        %3812 = vmatprep.subr.bf16.mxu0 0
        %3813 = vmatpush1.bf16.msra.mxu0 %v3766
        %3814 = vmatprep.subr.bf16.mxu0 0
        %3815 = vmatpush1.bf16.msra.mxu0 %v3767
        %3816 = vmatprep.mubr.bf16.mxu0 %v3679
        %3817 = vmatmul.mubr.bf16.gmra.mrb[0].mxu0 %v3678
        %v3818 = vpop.f32.mrb[0].mxu0
        %v3819 = vadd.f32 %v3686, %v3818
        %v3820 = vpop.f32.mrb[0].mxu0
        %v3821 = vpop.f32.mrb[0].mxu0
        %v3822 = vadd.f32 %v3686, %v3821
        %v3823 = vpop.f32.mrb[0].mxu0
        %3824 = vmatprep.mubr.bf16.mxu0 %v3681
        %3825 = vmatmul.mubr.bf16.gmra.mrb[0].mxu0 %v3680
        %v3826 = vpop.f32.mrb[0].mxu0
        %v3827 = vadd.f32 %v3686, %v3826
        %v3828 = vpop.f32.mrb[0].mxu0
        %v3829 = vpop.f32.mrb[0].mxu0
        %v3830 = vadd.f32 %v3686, %v3829
        %v3831 = vpop.f32.mrb[0].mxu0
        %3832 = vdwg.mxu0
        %v3833 = vadd.f32 %v3819, %v3402
        %v3834 = vadd.f32 %v3822, %v3403
        %v3835 = vadd.f32 %v3827, %v3404
        %v3836 = vadd.f32 %v3830, %v3405
        %s3837 = scalar_lea.vmem %s896, 1 [#allocation8]
        %v3838 = vld [vmem:[%s3837] sm:$0x1]
        %s3839 = scalar_lea.vmem %s905, 1 [#allocation10]
        %v3840 = vld [vmem:[%s3839] sm:$0x1]
        %3841 = vadd.xlane.f32.xlu0 %v3833
        %v3842 = vpop.xlane.xlu0 %3841
        %3843 = vadd.xlane.f32.xlu0 %v3834
        %v3844 = vpop.xlane.xlu0 %3843
        %3845 = vadd.xlane.f32.xlu0 %v3835
        %v3846 = vpop.xlane.xlu0 %3845
        %3847 = vadd.xlane.f32.xlu0 %v3836
        %v3848 = vpop.xlane.xlu0 %3847
        %v3849 = vmul.f32 %v3842, %v1130
        %v3850 = vmul.f32 %v3844, %v1130
        %v3851 = vmul.f32 %v3846, %v1130
        %v3852 = vmul.f32 %v3848, %v1130
        %v3853 = vsub.f32 %v3833, %v3849
        %v3854 = vsub.f32 %v3834, %v3850
        %v3855 = vsub.f32 %v3835, %v3851
        %v3856 = vsub.f32 %v3836, %v3852
        %v3857 = vmul.f32 %v3853, %v3853
        %v3858 = vmul.f32 %v3854, %v3854
        %v3859 = vmul.f32 %v3855, %v3855
        %v3860 = vmul.f32 %v3856, %v3856
        %3861 = vadd.xlane.f32.xlu0 %v3857
        %v3862 = vpop.xlane.xlu0 %3861
        %3863 = vadd.xlane.f32.xlu0 %v3858
        %v3864 = vpop.xlane.xlu0 %3863
        %3865 = vadd.xlane.f32.xlu0 %v3859
        %v3866 = vpop.xlane.xlu0 %3865
        %3867 = vadd.xlane.f32.xlu0 %v3860
        %v3868 = vpop.xlane.xlu0 %3867
        %v3869 = vmul.f32 %v3862, %v1130
        %v3870 = vmul.f32 %v3864, %v1130
        %v3871 = vmul.f32 %v3866, %v1130
        %v3872 = vmul.f32 %v3868, %v1130
        %v3873 = vadd.f32 %v3869, 1e-12
        %v3874 = vadd.f32 %v3870, 1e-12
        %v3875 = vadd.f32 %v3871, 1e-12
        %v3876 = vadd.f32 %v3872, 1e-12
        %v3877 = vrsqrt.pop %v3873
        %v3878 = vrsqrt.pop %v3874
        %v3879 = vrsqrt.pop %v3875
        %v3880 = vrsqrt.pop %v3876
        %v3881 = vmul.f32 %v3853, %v3877
        %v3882 = vmul.f32 %v3854, %v3878
        %v3883 = vmul.f32 %v3855, %v3879
        %v3884 = vmul.f32 %v3856, %v3880
        %v3886 = vlaneseq
        %v3887 = vshrl.u32 %v3886, 7
        %v3888 = vsub.s32 0, %v3887
        %v3889 = vrot.slane %v3838, %v3888
        %v3891 = vmul.f32 %v3881, %v3889
        %v3892 = vmul.f32 %v3882, %v3889
        %v3893 = vmul.f32 %v3883, %v3889
        %v3894 = vmul.f32 %v3884, %v3889
        %v3896 = vlaneseq
        %v3897 = vshrl.u32 %v3896, 7
        %v3898 = vsub.s32 0, %v3897
        %v3899 = vrot.slane %v3840, %v3898
        %v3901 = vadd.f32 %v3891, %v3899
        %v3902 = vadd.f32 %v3892, %v3899
        %v3903 = vadd.f32 %v3893, %v3899
        %v3904 = vadd.f32 %v3894, %v3899
        %3905 = vst [vmem:[#allocation2] sm:$0xff] %v3901
        %3906 = vst [vmem:[#allocation2 + $0x8] sm:$0xff] %v3902
        %3907 = vst [vmem:[#allocation2 + $0x10] sm:$0xff] %v3903
        %3908 = vst [vmem:[#allocation2 + $0x18] sm:$0xff] %v3904
        %v3909 = vld [vmem:[#allocation2] ss:$16 sm:$0x3]
        %v3910 = vld [vmem:[%s914] sm:$0xf]
        %v3911 = vld [vmem:[%s914 + $0x4] sm:$0xf]
        %v3912 = vld [vmem:[%s914 + $0x8] sm:$0xf]
        %v3913 = vld [vmem:[%s914 + $0xc] sm:$0xf]
        %v3914 = vld [vmem:[%s914 + $0x10] sm:$0xf]
        %v3915 = vld [vmem:[%s914 + $0x14] sm:$0xf]
        %v3916 = vld [vmem:[%s914 + $0x18] sm:$0xf]
        %v3917 = vld [vmem:[%s914 + $0x1c] sm:$0xf]
        %v3918 = vld [vmem:[%s914 + $0x20] sm:$0xf]
        %v3919 = vld [vmem:[%s914 + $0x24] sm:$0xf]
        %v3920 = vld [vmem:[%s914 + $0x28] sm:$0xf]
        %v3921 = vld [vmem:[%s914 + $0x2c] sm:$0xf]
        %v3922 = vld [vmem:[%s914 + $0x30] sm:$0xf]
        %v3923 = vld [vmem:[%s914 + $0x34] sm:$0xf]
        %v3924 = vld [vmem:[%s914 + $0x38] sm:$0xf]
        %v3925 = vld [vmem:[%s914 + $0x3c] sm:$0xf]
        %v3926 = vld [vmem:[%s922] sm:$0x1]
        %v3927 = vpack.c.bf16 %v3909, %v3909
        %v3929 = vlaneseq
        %v3930 = vshrl.u32 %v3929, 7
        %v3931 = vsub.s32 0, %v3930
        %v3932 = vrot.slane %v3926, %v3931
        %v3950 = vunpack.c.l.b16 %v3910
        %v3951 = vunpack.c.l.b16 %v3911
        %v3952 = vunpack.c.l.b16 %v3912
        %v3953 = vunpack.c.l.b16 %v3913
        %v3954 = vunpack.c.l.b16 %v3914
        %v3955 = vunpack.c.l.b16 %v3915
        %v3956 = vunpack.c.l.b16 %v3916
        %v3957 = vunpack.c.l.b16 %v3917
        %v3958 = vunpack.c.l.b16 %v3918
        %v3959 = vunpack.c.l.b16 %v3919
        %v3960 = vunpack.c.l.b16 %v3920
        %v3961 = vunpack.c.l.b16 %v3921
        %v3962 = vunpack.c.l.b16 %v3922
        %v3963 = vunpack.c.l.b16 %v3923
        %v3964 = vunpack.c.l.b16 %v3924
        %v3965 = vunpack.c.l.b16 %v3925
        %v3966 = vpack.c.b16 %v3951, %v3950
        %v3967 = vpack.c.b16 %v3953, %v3952
        %v3968 = vpack.c.b16 %v3955, %v3954
        %v3969 = vpack.c.b16 %v3957, %v3956
        %v3970 = vpack.c.b16 %v3959, %v3958
        %v3971 = vpack.c.b16 %v3961, %v3960
        %v3972 = vpack.c.b16 %v3963, %v3962
        %v3973 = vpack.c.b16 %v3965, %v3964
        %3982 = vmatprep.subr.bf16.mxu0 0
        %3983 = vmatpush1.bf16.msra.mxu0 %v3966
        %3984 = vmatprep.subr.bf16.mxu0 0
        %3985 = vmatpush1.bf16.msra.mxu0 %v3967
        %3986 = vmatprep.subr.bf16.mxu0 0
        %3987 = vmatpush1.bf16.msra.mxu0 %v3968
        %3988 = vmatprep.subr.bf16.mxu0 0
        %3989 = vmatpush1.bf16.msra.mxu0 %v3969
        %3990 = vmatprep.subr.bf16.mxu0 0
        %3991 = vmatpush1.bf16.msra.mxu0 %v3970
        %3992 = vmatprep.subr.bf16.mxu0 0
        %3993 = vmatpush1.bf16.msra.mxu0 %v3971
        %3994 = vmatprep.subr.bf16.mxu0 0
        %3995 = vmatpush1.bf16.msra.mxu0 %v3972
        %3996 = vmatprep.subr.bf16.mxu0 0
        %3997 = vmatpush1.bf16.msra.mxu0 %v3973
        %3998 = vmatprep.subr.bf16.mxu0 0
        %3999 = vmatpush1.bf16.msra.mxu0 0
        %4000 = vmatprep.subr.bf16.mxu0 0
        %4001 = vmatpush1.bf16.msra.mxu0 0
        %4002 = vmatprep.subr.bf16.mxu0 0
        %4003 = vmatpush1.bf16.msra.mxu0 0
        %4004 = vmatprep.subr.bf16.mxu0 0
        %4005 = vmatpush1.bf16.msra.mxu0 0
        %4006 = vmatprep.subr.bf16.mxu0 0
        %4007 = vmatpush1.bf16.msra.mxu0 0
        %4008 = vmatprep.subr.bf16.mxu0 0
        %4009 = vmatpush1.bf16.msra.mxu0 0
        %4010 = vmatprep.subr.bf16.mxu0 0
        %4011 = vmatpush1.bf16.msra.mxu0 0
        %4012 = vmatprep.subr.bf16.mxu0 0
        %4013 = vmatpush1.bf16.msra.mxu0 0
        %4014 = vmatprep.mubr.bf16.mxu0 0
        %4015 = vmatmul.mubr.bf16.gmra.mrb[0].mxu0 %v3927
        %v4016 = vpop.f32.mrb[0].mxu0
        %v4017 = vadd.f32 %v3932, %v4016
        %v4018 = vpop.f32.mrb[0].mxu0
        %v4019 = vpop.f32.mrb[0].mxu0
        %v4020 = vpop.f32.mrb[0].mxu0
        %4021 = vdwg.mxu0
        %v4022 = vtanh.pop %v4017
        %4023 = vst [vmem:[%s1106] sm:$0x3] %v4022
        %v4024 = vld [vmem:[#allocation14] sm:$0xf]
        %v4025 = vld [vmem:[#allocation14 + $0x4] sm:$0xf]
        %v4026 = vld [vmem:[#allocation14 + $0x8] sm:$0xf]
        %v4027 = vld [vmem:[#allocation14 + $0xc] sm:$0xf]
        %v4028 = vld [vmem:[#allocation14 + $0x10] sm:$0xf]
        %v4029 = vld [vmem:[#allocation14 + $0x14] sm:$0xf]
        %v4030 = vld [vmem:[#allocation14 + $0x18] sm:$0xf]
        %v4031 = vld [vmem:[#allocation14 + $0x1c] sm:$0xf]
        %v4032 = vld [vmem:[#allocation14 + $0x20] sm:$0xf]
        %v4033 = vld [vmem:[#allocation14 + $0x24] sm:$0xf]
        %v4034 = vld [vmem:[#allocation14 + $0x28] sm:$0xf]
        %v4035 = vld [vmem:[#allocation14 + $0x2c] sm:$0xf]
        %v4036 = vld [vmem:[#allocation14 + $0x30] sm:$0xf]
        %v4037 = vld [vmem:[#allocation14 + $0x34] sm:$0xf]
        %v4038 = vld [vmem:[#allocation14 + $0x38] sm:$0xf]
        %v4039 = vld [vmem:[#allocation14 + $0x3c] sm:$0xf]
        %v4040 = vld [vmem:[#allocation16] sm:$0x1]
        %v4041 = vpack.c.bf16 %v4022, %v4022
        %v4043 = vlaneseq
        %v4044 = vshrl.u32 %v4043, 7
        %v4045 = vsub.s32 0, %v4044
        %v4046 = vrot.slane %v4040, %v4045
        %v4064 = vunpack.c.l.b16 %v4024
        %v4065 = vunpack.c.l.b16 %v4025
        %v4066 = vunpack.c.l.b16 %v4026
        %v4067 = vunpack.c.l.b16 %v4027
        %v4068 = vunpack.c.l.b16 %v4028
        %v4069 = vunpack.c.l.b16 %v4029
        %v4070 = vunpack.c.l.b16 %v4030
        %v4071 = vunpack.c.l.b16 %v4031
        %v4072 = vunpack.c.l.b16 %v4032
        %v4073 = vunpack.c.l.b16 %v4033
        %v4074 = vunpack.c.l.b16 %v4034
        %v4075 = vunpack.c.l.b16 %v4035
        %v4076 = vunpack.c.l.b16 %v4036
        %v4077 = vunpack.c.l.b16 %v4037
        %v4078 = vunpack.c.l.b16 %v4038
        %v4079 = vunpack.c.l.b16 %v4039
        %v4080 = vpack.c.b16 %v4065, %v4064
        %v4081 = vpack.c.b16 %v4067, %v4066
        %v4082 = vpack.c.b16 %v4069, %v4068
        %v4083 = vpack.c.b16 %v4071, %v4070
        %v4084 = vpack.c.b16 %v4073, %v4072
        %v4085 = vpack.c.b16 %v4075, %v4074
        %v4086 = vpack.c.b16 %v4077, %v4076
        %v4087 = vpack.c.b16 %v4079, %v4078
        %4096 = vmatprep.subr.bf16.mxu0 0
        %4097 = vmatpush1.bf16.msra.mxu0 %v4080
        %4098 = vmatprep.subr.bf16.mxu0 0
        %4099 = vmatpush1.bf16.msra.mxu0 %v4081
        %4100 = vmatprep.subr.bf16.mxu0 0
        %4101 = vmatpush1.bf16.msra.mxu0 %v4082
        %4102 = vmatprep.subr.bf16.mxu0 0
        %4103 = vmatpush1.bf16.msra.mxu0 %v4083
        %4104 = vmatprep.subr.bf16.mxu0 0
        %4105 = vmatpush1.bf16.msra.mxu0 %v4084
        %4106 = vmatprep.subr.bf16.mxu0 0
        %4107 = vmatpush1.bf16.msra.mxu0 %v4085
        %4108 = vmatprep.subr.bf16.mxu0 0
        %4109 = vmatpush1.bf16.msra.mxu0 %v4086
        %4110 = vmatprep.subr.bf16.mxu0 0
        %4111 = vmatpush1.bf16.msra.mxu0 %v4087
        %4112 = vmatprep.subr.bf16.mxu0 0
        %4113 = vmatpush1.bf16.msra.mxu0 0
        %4114 = vmatprep.subr.bf16.mxu0 0
        %4115 = vmatpush1.bf16.msra.mxu0 0
        %4116 = vmatprep.subr.bf16.mxu0 0
        %4117 = vmatpush1.bf16.msra.mxu0 0
        %4118 = vmatprep.subr.bf16.mxu0 0
        %4119 = vmatpush1.bf16.msra.mxu0 0
        %4120 = vmatprep.subr.bf16.mxu0 0
        %4121 = vmatpush1.bf16.msra.mxu0 0
        %4122 = vmatprep.subr.bf16.mxu0 0
        %4123 = vmatpush1.bf16.msra.mxu0 0
        %4124 = vmatprep.subr.bf16.mxu0 0
        %4125 = vmatpush1.bf16.msra.mxu0 0
        %4126 = vmatprep.subr.bf16.mxu0 0
        %4127 = vmatpush1.bf16.msra.mxu0 0
        %4128 = vmatprep.mubr.bf16.mxu0 0
        %4129 = vmatmul.mubr.bf16.gmra.mrb[0].mxu0 %v4041
        %v4130 = vpop.f32.mrb[0].mxu0
        %v4131 = vadd.f32 %v4046, %v4130
        %v4132 = vpop.f32.mrb[0].mxu0
        %v4133 = vpop.f32.mrb[0].mxu0
        %v4134 = vpop.f32.mrb[0].mxu0
        %4135 = vdwg.mxu0
        %4136 = vst [vmem:[%s1110] sm:$0x3] %v4131
        %p4137 = scmp.lt.s32.totalorder %s46, 1
        %s4138 = scalar_select %p4137, %s46, 1
        %s4139 = smul.addr %s4138, 2
        %s4140 = scalar_lea.vmem %s20, %s4139
        %p4141 = scmp.lt.s32.totalorder %s46, 1
        %s4142 = scalar_select %p4141, %s46, 1
        %s4143 = smul.addr %s4142, 2
        %s4144 = scalar_lea.vmem %s21, %s4143
        // Predicated region
        $region137: #{unbiased_forward.1} parent=99 // pred_check
          %p4145 = pneg %p569
        $region138: #{unbiased_forward.1} parent=99 // pred_check_branch
          %4147 = sbr.rel (%p4145) target = $region140
        $region139: #{unbiased_forward.1} parent=99 // pred_region
          _
        $region140: #{unbiased_forward.1} parent=99 // pred_fallthru
          _
        // Predicated region
        $region141: #{unbiased_forward.1} parent=99 // pred_check
          %p4148 = pneg %p595
        $region142: #{unbiased_forward.1} parent=99 // pred_check_branch
          %4150 = sbr.rel (%p4148) target = $region144
        $region143: #{unbiased_forward.1} parent=99 // pred_region
          _
        $region144: #{unbiased_forward.1} parent=99 // pred_fallthru
          _
      $region100: #{unbiased_forward.1} parent=5 // pred_fallthru
        _
      %p4151 = scmp.le.s32.totalorder 2, %s41
      // Predicated region
      $region145: #{unbiased_forward.1} parent=5 // pred_check
        %p4152 = pneg %p4151
      $region146: #{unbiased_forward.1} parent=5 // pred_check_branch
        %4154 = sbr.rel (%p4152) target = $region148
      $region147: #{unbiased_forward.1} parent=5 // pred_region
        %s4155 = ssub.s32 %s41, 2
        // Predicated region
        $region149: #{unbiased_forward.1} parent=147 // pred_check
          %p4156 = pneg %p575
        $region150: #{unbiased_forward.1} parent=147 // pred_check_branch
          %4158 = sbr.rel (%p4156) target = $region152
        $region151: #{unbiased_forward.1} parent=147 // pred_region
          %p4159 = scmp.lt.s32.totalorder %s47, 1
          %s4160 = scalar_select %p4159, %s47, 1
          %s4161 = smul.addr %s4160, 2
          %s4162 = scalar_lea.vmem %s20, %s4161
        $region152: #{unbiased_forward.1} parent=147 // pred_fallthru
          _
        // Predicated region
        $region153: #{unbiased_forward.1} parent=147 // pred_check
          %p4163 = pneg %p601
        $region154: #{unbiased_forward.1} parent=147 // pred_check_branch
          %4165 = sbr.rel (%p4163) target = $region156
        $region155: #{unbiased_forward.1} parent=147 // pred_region
          %p4166 = scmp.lt.s32.totalorder %s47, 1
          %s4167 = scalar_select %p4166, %s47, 1
          %s4168 = smul.addr %s4167, 2
          %s4169 = scalar_lea.vmem %s21, %s4168
        $region156: #{unbiased_forward.1} parent=147 // pred_fallthru
          _
      $region148: #{unbiased_forward.1} parent=5 // pred_fallthru
        _
    $region6: #{unbiased_forward.1} parent=1 // loop_footer
      %s45 = sadd.s32 1, %s41
    $region7: #{unbiased_forward.1} parent=1 // loop_footer_branch
      %40 = sbr.rel target = $region3
    $region8: #{unbiased_forward.1} parent=1 // loop_exit
      _
    %4170 = vsyncpa [#allocation4], 1
    %s4171 = scalar_lea.sflag [#allocation4], 1
    %4172 = vsyncpa %s4171, 1
    %4173 = vsyncpa [#allocation6], 1
    %s4174 = scalar_lea.sflag [#allocation6], 1
    %4175 = vsyncpa %s4174, 1
    %4176 = vsyncpa [#allocation9], 1
    %s4177 = scalar_lea.sflag [#allocation9], 1
    %4178 = vsyncpa %s4177, 1
    %4179 = vsyncpa [#allocation12], 1
    %s4180 = scalar_lea.sflag [#allocation12], 1
    %4181 = vsyncpa %s4180, 1
    %4182 = vsyncpa [#allocation15], 1

</llo_original>
